<compile_context>
chip_gen: v5e
topology: v5e:2x2
jax: 0.10.0
libtpu: 0.0.40
codegen_flags: <defaults>
</compile_context>

<pallas_src>
import functools

import jax
import jax.numpy as jnp
from jax.experimental import pallas as pl
from jax.experimental.pallas import tpu as pltpu

EPS = 1e-5
LANE = 128


def _round_up(x, m):
    return (x + m - 1) // m * m


def _pick_row_tile(m, cap):
    """Largest divisor of m <= cap that is a multiple of 8 (fallback: any
    divisor).  Even division keeps padded rows out of the BN statistics."""
    t = min(cap, m)
    t -= t % 8
    while t >= 8:
        if m % t == 0:
            return t
        t -= 8
    for t in range(min(cap, m), 0, -1):
        if m % t == 0:
            return t
    return m


def _pick_row_block(h, w, b, cap_rows=2048):
    """Rows-per-block for the 3x3 stage: largest divisor of H whose tile fits
    the row budget.  At B == 1 force >= 2 blocks so both v7x cores get work."""
    best = 1
    for th in range(1, h + 1):
        if h % th == 0 and th * w <= cap_rows:
            best = th
    if b == 1 and best == h and h > 1:
        for th in range(h - 1, 0, -1):
            if h % th == 0:
                return th
    return best


@functools.lru_cache(maxsize=None)
def _vmem_limit_bytes():
    # Per-generation budget: ~3/4 of physical VMEM, capped at 96 MiB
    # (v5e/v6e 128 MiB -> 96 MiB; v7x 64 MiB -> 48 MiB).
    try:
        cap = int(pltpu.get_tpu_info().vmem_capacity_bytes)
        limit = min(96 * 1024 * 1024, cap * 3 // 4)
    except Exception:  # pragma: no cover - conservative fallback
        limit = 48 * 1024 * 1024
    return int(max(limit, 32 * 1024 * 1024))


def _cp(num_axes):
    return pltpu.CompilerParams(
        dimension_semantics=("parallel",) * num_axes,
        vmem_limit_bytes=_vmem_limit_bytes(),
    )


# ---------------------------------------------------------------------------
# Kernels
# ---------------------------------------------------------------------------
def _write_stats(st_ref, y_f32):
    # Per-tile BN partials from the f32 accumulator (not the rounded output):
    # row 0 = sum, row 1 = sum of squares.
    st_ref[0, 0:1, :] = jnp.sum(y_f32, axis=0, keepdims=True)
    st_ref[0, 1:2, :] = jnp.sum(y_f32 * y_f32, axis=0, keepdims=True)


def _conv1x1_stats_kernel(x_ref, w_ref, y_ref, st_ref):
    y = jnp.dot(x_ref[...], w_ref[...], preferred_element_type=jnp.float32)
    y_ref[...] = y.astype(y_ref.dtype)
    _write_stats(st_ref, y)


def _bn_relu_conv1x1_stats_kernel(y_ref, s_ref, b_ref, w_ref, o_ref, st_ref):
    cdt = w_ref.dtype
    z = jnp.maximum(y_ref[...].astype(jnp.float32) * s_ref[...] + b_ref[...],
                    0.0)
    y = jnp.dot(z.astype(cdt), w_ref[...], preferred_element_type=jnp.float32)
    o_ref[...] = y.astype(o_ref.dtype)
    _write_stats(st_ref, y)


def _bn_add_relu_kernel(y3_ref, x_ref, s_ref, b_ref, o_ref):
    z = y3_ref[...].astype(jnp.float32) * s_ref[...] + b_ref[...]
    o_ref[...] = jnp.maximum(z + x_ref[...].astype(jnp.float32),
                             0.0).astype(o_ref.dtype)


def _bn_relu_conv3x3_stats_kernel(nrb, y1_ref, hal_ref, s_ref, b_ref, w_ref,
                                  y2_ref, st_ref, zpad_ref):
    # One grid step == one (image, row-block).  Block shapes:
    #   y1_ref  (1, TH, W, C)   post-conv1 activations (compute dtype)
    #   hal_ref (1, 2, W, C)    image row above / below this block
    #   s/b_ref (1, C)          folded BN1 scale / bias (f32)
    #   w_ref   (3, 3*C, C)     3x3 weights, one (3*C, C) slab per kernel row
    #   y2_ref  (TH*W, C)       conv2 output
    #   st_ref  (1, 2, C)       per-block BN2 partials
    #   zpad_ref (TH+2, W+2, C) halo-padded scratch in the compute dtype
    rb = pl.program_id(1)
    THp2, Wp2, C = zpad_ref.shape
    TH, W = THp2 - 2, Wp2 - 2
    cdt = zpad_ref.dtype
    s = s_ref[...]
    bb = b_ref[...]

    # Column halo: re-zeroed every step (cheap skinny store).  It cannot be
    # zeroed "once" because each TensorCore owns its own scratch copy under
    # megacore grid sharding.
    zcol = jnp.zeros((THp2, 1, C), cdt)
    zpad_ref[:, 0:1, :] = zcol
    zpad_ref[:, W + 1:W + 2, :] = zcol

    # bn1 + relu written straight into the scratch interior (no f32 copy).
    z_mid = jnp.maximum(y1_ref[0].astype(jnp.float32) * s + bb, 0.0)
    zpad_ref[1:TH + 1, 1:W + 1, :] = z_mid.astype(cdt)

    # Halo rows: real neighbour rows are bn+relu'd; at the image border the
    # conv padding is zero *post-activation*, so select zeros there.
    z_top = jnp.maximum(hal_ref[0, 0].astype(jnp.float32) * s + bb, 0.0)
    z_top = jnp.where(rb == 0, 0.0, z_top)
    zpad_ref[0:1, 1:W + 1, :] = z_top[None].astype(cdt)
    z_bot = jnp.maximum(hal_ref[0, 1].astype(jnp.float32) * s + bb, 0.0)
    z_bot = jnp.where(rb == nrb - 1, 0.0, z_bot)
    zpad_ref[TH + 1:TH + 2, 1:W + 1, :] = z_bot[None].astype(cdt)

    # 3x3 conv as 3 accumulated MXU dots with K = 3*C (one per kernel row):
    # never materializes the (TH*W, 9*C) im2col patch.
    # (On v5e, 9 dots with K=C exactly match the 128-deep MXU; the grouped form
    #  fills the 256-deep v6e/v7x MXU when C == 128.)
    zp = zpad_ref[...]
    acc = jnp.zeros((TH * W, C), jnp.float32)
    for kh in range(3):
        slab = zp[kh:kh + TH]                                 # (TH, W+2, C)
        patch = jnp.concatenate([slab[:, kw:kw + W, :] for kw in range(3)],
                                axis=-1).reshape(TH * W, 3 * C)
        acc = acc + jnp.dot(patch, w_ref[kh],
                            preferred_element_type=jnp.float32)

    y2_ref[...] = acc.astype(y2_ref.dtype)
    _write_stats(st_ref, acc)


# ---------------------------------------------------------------------------
# Wrapper
# ---------------------------------------------------------------------------
def _fold_bn(stats, count, gamma, beta):
    # One-pass E[x]/E[x^2] from f32 partial sums; biased variance (training BN).
    tot = jnp.sum(stats, axis=0)                              # (2, C)
    mean = tot[0] / count
    var = jnp.maximum(tot[1] / count - mean * mean, 0.0)
    scale = gamma.reshape(-1) * jax.lax.rsqrt(var + EPS)
    bias = beta.reshape(-1) - mean * scale
    return scale.reshape(1, -1), bias.reshape(1, -1)


@functools.partial(jax.jit, static_argnames=("compute_dtype",))
def bottleneck_pallas(x_nchw, params, compute_dtype=jnp.bfloat16):
    f32 = jnp.float32
    cdt = compute_dtype
    B, Cin, H, W = x_nchw.shape
    planes = params["w1"].shape[1]
    Cout = params["w3"].shape[1]
    assert Cin == Cout, "downsample=None requires inplanes == planes * 4"

    Cp = _round_up(Cin, LANE)
    Pp = _round_up(planes, LANE)
    Op = _round_up(Cout, LANE)
    M = B * H * W
    cap = 2048 if max(Cp, Pp, Op) <= 256 else 1024
    TM = _pick_row_tile(M, cap)
    nM = M // TM
    TH = _pick_row_block(H, W, B)
    nRB = H // TH

    # ---- layout: NCHW -> NHWC rows, channels zero-padded to lane multiples.
    # The input stream is stored in the compute dtype (S1/S4 are HBM-bound).
    # TODO(synk): in an NHWC end-to-end model these two boundary transposes
    # (one full HBM round trip each) disappear; kept only because the PyTorch
    # spec is NCHW.
    x_nhwc = jnp.transpose(x_nchw, (0, 2, 3, 1))
    xf = jnp.pad(x_nhwc, ((0, 0), (0, 0), (0, 0), (0, Cp - Cin))
                 ).reshape(M, Cp).astype(cdt)

    w1 = jnp.pad(params["w1"].astype(f32),
                 ((0, Cp - Cin), (0, Pp - planes))).astype(cdt)
    w2g = jnp.zeros((3, 3, Pp, Pp), f32).at[:, :, :planes, :planes].set(
        params["w2"].astype(f32).reshape(3, 3, planes, planes)
    ).reshape(3, 3 * Pp, Pp).astype(cdt)
    w3 = jnp.pad(params["w3"].astype(f32),
                 ((0, Pp - planes), (0, Op - Cout))).astype(cdt)
    g1 = jnp.pad(params["g1"].astype(f32), ((0, 0), (0, Pp - planes)))
    b1 = jnp.pad(params["b1"].astype(f32), ((0, 0), (0, Pp - planes)))
    g2 = jnp.pad(params["g2"].astype(f32), ((0, 0), (0, Pp - planes)))
    b2 = jnp.pad(params["b2"].astype(f32), ((0, 0), (0, Pp - planes)))
    g3 = jnp.pad(params["g3"].astype(f32), ((0, 0), (0, Op - Cout)))
    b3 = jnp.pad(params["b3"].astype(f32), ((0, 0), (0, Op - Cout)))

    # TODO(synk): the constant-index weight/scale BlockSpecs could request
    # pipeline_mode=pl.Buffered(1) to drop their second VMEM buffer.
    row = lambda c: pl.BlockSpec((TM, c), lambda i: (i, 0))
    vec1 = lambda c: pl.BlockSpec((1, c), lambda i: (0, 0))
    mat1 = lambda r, c: pl.BlockSpec((r, c), lambda i: (0, 0))
    sts1 = lambda c: pl.BlockSpec((1, 2, c), lambda i: (i, 0, 0))

    # ---- S1: conv1 (1x1) + BN1 partial stats -------------------------------
    y1, st1 = pl.pallas_call(
        _conv1x1_stats_kernel,
        grid_spec=pltpu.PrefetchScalarGridSpec(
            num_scalar_prefetch=0, grid=(nM,),
            in_specs=[row(Cp), mat1(Cp, Pp)],
            out_specs=(row(Pp), sts1(Pp))),
        out_shape=(jax.ShapeDtypeStruct((M, Pp), cdt),
                   jax.ShapeDtypeStruct((nM, 2, Pp), f32)),
        compiler_params=_cp(1),
    )(xf, w1)
    s1, bb1 = _fold_bn(st1, M, g1, b1)

    # ---- S2: bn1+relu -> 3x3 conv + BN2 partial stats -----------------------
    # One-row halos gathered once in XLA (2/TH of y1's traffic) so the kernel
    # keeps plain BlockSpec auto-pipelining over a (B, row-block) grid.
    y1_img = y1.reshape(B, H, W, Pp)
    y1_blk = y1.reshape(B, nRB, TH, W, Pp)
    rows_last = y1_blk[:, :, TH - 1]
    rows_first = y1_blk[:, :, 0]
    zero_row = jnp.zeros_like(rows_last[:, :1])
    halo_top = jnp.concatenate([zero_row, rows_last[:, :-1]], axis=1)
    halo_bot = jnp.concatenate([rows_first[:, 1:], zero_row], axis=1)
    halos = jnp.stack([halo_top, halo_bot], axis=2).reshape(B * nRB, 2, W, Pp)

    vec2 = lambda c: pl.BlockSpec((1, c), lambda b, r: (0, 0))
    y2, st2 = pl.pallas_call(
        functools.partial(_bn_relu_conv3x3_stats_kernel, nRB),
        grid_spec=pltpu.PrefetchScalarGridSpec(
            num_scalar_prefetch=0, grid=(B, nRB),
            in_specs=[
                pl.BlockSpec((1, TH, W, Pp), lambda b, r: (b, r, 0, 0)),
                pl.BlockSpec((1, 2, W, Pp),
                             lambda b, r: (b * nRB + r, 0, 0, 0)),
                vec2(Pp), vec2(Pp),
                pl.BlockSpec((3, 3 * Pp, Pp), lambda b, r: (0, 0, 0)),
            ],
            out_specs=(pl.BlockSpec((TH * W, Pp),
                                    lambda b, r: (b * nRB + r, 0)),
                       pl.BlockSpec((1, 2, Pp),
                                    lambda b, r: (b * nRB + r, 0, 0))),
            scratch_shapes=[pltpu.VMEM((TH + 2, W + 2, Pp), cdt)]),
        out_shape=(jax.ShapeDtypeStruct((M, Pp), cdt),
                   jax.ShapeDtypeStruct((B * nRB, 2, Pp), f32)),
        compiler_params=_cp(2),
    )(y1_img, halos, s1, bb1, w2g)
    s2, bb2 = _fold_bn(st2, M, g2, b2)

    # ---- S3: bn2+relu -> conv3 (1x1) + BN3 partial stats --------------------
    y3, st3 = pl.pallas_call(
        _bn_relu_conv1x1_stats_kernel,
        grid_spec=pltpu.PrefetchScalarGridSpec(
            num_scalar_prefetch=0, grid=(nM,),
            in_specs=[row(Pp), vec1(Pp), vec1(Pp), mat1(Pp, Op)],
            out_specs=(row(Op), sts1(Op))),
        out_shape=(jax.ShapeDtypeStruct((M, Op), cdt),
                   jax.ShapeDtypeStruct((nM, 2, Op), f32)),
        compiler_params=_cp(1),
    )(y2, s2, bb2, w3)
    s3, bb3 = _fold_bn(st3, M, g3, b3)

    # ---- S4: bn3 + residual add + relu (mem-bound; compute-dtype streams) ---
    out = pl.pallas_call(
        _bn_add_relu_kernel,
        grid_spec=pltpu.PrefetchScalarGridSpec(
            num_scalar_prefetch=0, grid=(nM,),
            in_specs=[row(Op), row(Cp), vec1(Op), vec1(Op)],
            out_specs=row(Op)),
        out_shape=jax.ShapeDtypeStruct((M, Op), cdt),
        compiler_params=_cp(1),
    )(y3, xf, s3, bb3)

    out = out[:, :Cout].reshape(B, H, W, Cout)
    return jnp.transpose(out, (0, 3, 1, 2))


# ---------------------------------------------------------------------------
# Pure-JAX reference (mirrors PyTorch training-mode forward) + params
# ---------------------------------------------------------------------------
def bottleneck_ref(x_nchw, params):
    x = jnp.transpose(x_nchw, (0, 2, 3, 1)).astype(jnp.float32)
    P = params["w1"].shape[1]
    dn = ("NHWC", "HWIO", "NHWC")

    def conv(y, w, pad):
        return jax.lax.conv_general_dilated(y, w, (1, 1), pad,
                                            dimension_numbers=dn)

    def bn(y, g, b):
        m = jnp.mean(y, axis=(0, 1, 2))
        v = jnp.mean((y - m) ** 2, axis=(0, 1, 2))
        return (y - m) * jax.lax.rsqrt(v + EPS) * g + b

    w1 = params["w1"].reshape(1, 1, -1, P)
    w2 = params["w2"].reshape(3, 3, P, P)
    w3 = params["w3"].reshape(1, 1, P, -1)

    y = jax.nn.relu(bn(conv(x, w1, "VALID"), params["g1"][0], params["b1"][0]))
    y = jax.nn.relu(bn(conv(y, w2, "SAME"), params["g2"][0], params["b2"][0]))
    y = bn(conv(y, w3, "VALID"), params["g3"][0], params["b3"][0])
    y = jax.nn.relu(y + x)
    return jnp.transpose(y, (0, 3, 1, 2))


def init_params(key, inplanes, planes):
    ks = jax.random.split(key, 9)
    cout = planes * 4  # expansion = 4
    n = jax.random.normal
    return {
        # conv weights as (Cin, Cout) / (kh*kw, Cin, Cout)
        "w1": 0.1 * n(ks[0], (inplanes, planes), jnp.float32),
        "w2": 0.1 * n(ks[1], (9, planes, planes), jnp.float32),
        "w3": 0.1 * n(ks[2], (planes, cout), jnp.float32),
        "g1": 1.0 + 0.1 * n(ks[3], (1, planes), jnp.float32),
        "b1": 0.1 * n(ks[4], (1, planes), jnp.float32),
        "g2": 1.0 + 0.1 * n(ks[5], (1, planes), jnp.float32),
        "b2": 0.1 * n(ks[6], (1, planes), jnp.float32),
        "g3": 1.0 + 0.1 * n(ks[7], (1, cout), jnp.float32),
        "b3": 0.1 * n(ks[8], (1, cout), jnp.float32),
    }


if __name__ == "__main__":
    planes = 4
    inplanes = planes * 4          # required for residual add (downsample=None)
    B, H, W = 2, 16, 16

    key = jax.random.PRNGKey(0)
    kx, kp = jax.random.split(key)
    x = jax.random.normal(kx, (B, inplanes, H, W), jnp.float32)  # NCHW as in PyTorch
    params = init_params(kp, inplanes, planes)

    ref = jax.block_until_ready(bottleneck_ref(x, params))

    # Exact-algorithm check: f32 everywhere vs. pure-JAX reference.
    out_f32 = jax.block_until_ready(
        bottleneck_pallas(x, params, compute_dtype=jnp.float32))
    assert out_f32.shape == (B, inplanes, H, W)
    err32 = float(jnp.max(jnp.abs(out_f32 - ref)))
    assert jnp.allclose(out_f32, ref, atol=1e-4, rtol=1e-4), err32

    # Fast path: bf16 streams / bf16 MXU inputs with f32 accumulation and f32
    # BN statistics.  Loose tolerance reflects only bf16 rounding of the
    # input/intermediate/output streams; algorithmic exactness is established
    # by the f32 check above.
    out_bf16 = jax.block_until_ready(
        bottleneck_pallas(x, params, compute_dtype=jnp.bfloat16))
    diff = out_bf16.astype(jnp.float32) - ref
    rel_l2 = float(jnp.linalg.norm(diff) / (jnp.linalg.norm(ref) + 1e-12))
    assert rel_l2 < 3e-2, rel_l2
    assert jnp.allclose(out_bf16.astype(jnp.float32), ref,
                        atol=2e-1, rtol=2e-1), float(jnp.max(jnp.abs(diff)))

    print("KERNEL_OK")
</pallas_src>

<mosaic_0001>
module attributes {stable_mosaic.version = 11 : i64} {
  func.func @_conv1x1_stats_kernel(%arg0: i32, %arg1: memref<512x128xf32, #tpu.memory_space<vmem>>, %arg2: memref<128x128xf32, #tpu.memory_space<vmem>>, %arg3: memref<512x128xf32, #tpu.memory_space<vmem>>, %arg4: memref<1x2x128xf32, #tpu.memory_space<vmem>>) attributes {dimension_semantics = [#tpu.dimension_semantics<parallel>], iteration_bounds = array<i64: 1>, scalar_prefetch = 0 : i64, scratch_operands = 0 : i64, tpu.core_type = #tpu.core_type<tc>, window_params = [{transform_indices = @transform_0, window_bounds = array<i64: 512, 128>}, {pipeline_mode = #tpu.pipeline_mode<synchronous>, transform_indices = @transform_1, window_bounds = array<i64: 128, 128>}, {transform_indices = @transform_2, window_bounds = array<i64: 512, 128>}, {transform_indices = @transform_3, window_bounds = array<i64: 1, 2, 128>}]} {
    %c0 = arith.constant 0 : index
    %c0_0 = arith.constant 0 : index
    %0 = vector.load %arg1[%c0, %c0_0] : memref<512x128xf32, #tpu.memory_space<vmem>>, vector<512x128xf32>
    %c0_1 = arith.constant 0 : index
    %c0_2 = arith.constant 0 : index
    %1 = vector.load %arg2[%c0_1, %c0_2] : memref<128x128xf32, #tpu.memory_space<vmem>>, vector<128x128xf32>
    %cst = arith.constant dense<0.000000e+00> : vector<512x128xf32>
    %2 = tpu.matmul %0, %1, %cst {dimension_numbers = #tpu.dot_dimension_numbers<[1], [0], [0], [1], [0, 0, 1, 1], [], []>} : vector<512x128xf32>, vector<128x128xf32>, vector<512x128xf32> -> vector<512x128xf32>
    %c0_3 = arith.constant 0 : index
    %c0_4 = arith.constant 0 : index
    %3 = vector.load %arg3[%c0_3, %c0_4] : memref<512x128xf32, #tpu.memory_space<vmem>>, vector<512x128xf32>
    tpu.vector_store %arg3[%c0_3, %c0_4], %2 {strides = array<i32>} : memref<512x128xf32, #tpu.memory_space<vmem>>, vector<512x128xf32>,
    %cst_5 = arith.constant dense<0.000000e+00> : vector<128xf32>
    %4 = vector.multi_reduction <add>, %2, %cst_5 [0] : vector<512x128xf32> to vector<128xf32>
    %5 = vector.shape_cast %4 : vector<128xf32> to vector<1x128xf32>
    %c0_6 = arith.constant 0 : index
    %c0_7 = arith.constant 0 : index
    %c0_8 = arith.constant 0 : index
    %6 = vector.load %arg4[%c0_6, %c0_7, %c0_8] : memref<1x2x128xf32, #tpu.memory_space<vmem>>, vector<1x1x128xf32>
    %7 = vector.shape_cast %6 : vector<1x1x128xf32> to vector<1x128xf32>
    %8 = vector.shape_cast %5 : vector<1x128xf32> to vector<1x1x128xf32>
    tpu.vector_store %arg4[%c0_6, %c0_7, %c0_8], %8 {strides = array<i32>} : memref<1x2x128xf32, #tpu.memory_space<vmem>>, vector<1x1x128xf32>,
    %9 = arith.mulf %2, %2 : vector<512x128xf32>
    %cst_9 = arith.constant dense<0.000000e+00> : vector<128xf32>
    %10 = vector.multi_reduction <add>, %9, %cst_9 [0] : vector<512x128xf32> to vector<128xf32>
    %11 = vector.shape_cast %10 : vector<128xf32> to vector<1x128xf32>
    %c0_10 = arith.constant 0 : index
    %c1 = arith.constant 1 : index
    %c0_11 = arith.constant 0 : index
    %12 = vector.load %arg4[%c0_10, %c1, %c0_11] : memref<1x2x128xf32, #tpu.memory_space<vmem>>, vector<1x1x128xf32>
    %13 = vector.shape_cast %12 : vector<1x1x128xf32> to vector<1x128xf32>
    %14 = vector.shape_cast %11 : vector<1x128xf32> to vector<1x1x128xf32>
    tpu.vector_store %arg4[%c0_10, %c1, %c0_11], %14 {strides = array<i32>} : memref<1x2x128xf32, #tpu.memory_space<vmem>>, vector<1x1x128xf32>,
    return
  }
  func.func @transform_0(%arg0: i32) -> (i32, i32) {
    %c0_i32 = arith.constant 0 : i32
    %c0_i32_0 = arith.constant 0 : i32
    return %arg0, %c0_i32 : i32, i32
  }
  func.func @transform_1(%arg0: i32) -> (i32, i32) {
    %c0_i32 = arith.constant 0 : i32
    %c0_i32_0 = arith.constant 0 : i32
    %c0_i32_1 = arith.constant 0 : i32
    return %c0_i32, %c0_i32_0 : i32, i32
  }
  func.func @transform_2(%arg0: i32) -> (i32, i32) {
    %c0_i32 = arith.constant 0 : i32
    %c0_i32_0 = arith.constant 0 : i32
    return %arg0, %c0_i32 : i32, i32
  }
  func.func @transform_3(%arg0: i32) -> (i32, i32, i32) {
    %c0_i32 = arith.constant 0 : i32
    %c0_i32_0 = arith.constant 0 : i32
    %c0_i32_1 = arith.constant 0 : i32
    return %arg0, %c0_i32, %c0_i32_0 : i32, i32, i32
  }
}

module attributes {stable_mosaic.version = 11 : i64} {
  func.func @_bn_relu_conv3x3_stats_kernel(%arg0: i32, %arg1: i32, %arg2: memref<1x16x16x128xf32, #tpu.memory_space<vmem>>, %arg3: memref<1x2x16x128xf32, #tpu.memory_space<vmem>>, %arg4: memref<1x128xf32, #tpu.memory_space<vmem>>, %arg5: memref<1x128xf32, #tpu.memory_space<vmem>>, %arg6: memref<3x384x128xf32, #tpu.memory_space<vmem>>, %arg7: memref<256x128xf32, #tpu.memory_space<vmem>>, %arg8: memref<1x2x128xf32, #tpu.memory_space<vmem>>, %arg9: memref<18x18x128xf32, #tpu.memory_space<vmem>>) attributes {dimension_semantics = [#tpu.dimension_semantics<parallel>, #tpu.dimension_semantics<parallel>], iteration_bounds = array<i64: 2, 1>, scalar_prefetch = 0 : i64, scratch_operands = 1 : i64, tpu.core_type = #tpu.core_type<tc>, window_params = [{transform_indices = @transform_0, window_bounds = array<i64: 1, 16, 16, 128>}, {transform_indices = @transform_1, window_bounds = array<i64: 1, 2, 16, 128>}, {pipeline_mode = #tpu.pipeline_mode<synchronous>, transform_indices = @transform_2, window_bounds = array<i64: 1, 128>}, {pipeline_mode = #tpu.pipeline_mode<synchronous>, transform_indices = @transform_3, window_bounds = array<i64: 1, 128>}, {pipeline_mode = #tpu.pipeline_mode<synchronous>, transform_indices = @transform_4, window_bounds = array<i64: 3, 384, 128>}, {transform_indices = @transform_5, window_bounds = array<i64: 256, 128>}, {transform_indices = @transform_6, window_bounds = array<i64: 1, 2, 128>}]} {
    %c0 = arith.constant 0 : index
    %c0_0 = arith.constant 0 : index
    %0 = vector.load %arg4[%c0, %c0_0] : memref<1x128xf32, #tpu.memory_space<vmem>>, vector<1x128xf32>
    %c0_1 = arith.constant 0 : index
    %c0_2 = arith.constant 0 : index
    %1 = vector.load %arg5[%c0_1, %c0_2] : memref<1x128xf32, #tpu.memory_space<vmem>>, vector<1x128xf32>
    %cst = arith.constant 0.000000e+00 : f32
    %2 = vector.broadcast %cst : f32 to vector<18x1x128xf32>
    %c0_3 = arith.constant 0 : index
    %c0_4 = arith.constant 0 : index
    %c0_5 = arith.constant 0 : index
    %3 = vector.load %arg9[%c0_3, %c0_4, %c0_5] : memref<18x18x128xf32, #tpu.memory_space<vmem>>, vector<18x1x128xf32>
    tpu.vector_store %arg9[%c0_3, %c0_4, %c0_5], %2 {strides = array<i32>} : memref<18x18x128xf32, #tpu.memory_space<vmem>>, vector<18x1x128xf32>,
    %c0_6 = arith.constant 0 : index
    %c17 = arith.constant 17 : index
    %c0_7 = arith.constant 0 : index
    %4 = vector.load %arg9[%c0_6, %c17, %c0_7] : memref<18x18x128xf32, #tpu.memory_space<vmem>>, vector<18x1x128xf32>
    tpu.vector_store %arg9[%c0_6, %c17, %c0_7], %2 {strides = array<i32>} : memref<18x18x128xf32, #tpu.memory_space<vmem>>, vector<18x1x128xf32>,
    %c0_8 = arith.constant 0 : index
    %c0_9 = arith.constant 0 : index
    %c0_10 = arith.constant 0 : index
    %c0_11 = arith.constant 0 : index
    %5 = vector.load %arg2[%c0_8, %c0_9, %c0_10, %c0_11] : memref<1x16x16x128xf32, #tpu.memory_space<vmem>>, vector<1x16x16x128xf32>
    %6 = vector.shape_cast %5 : vector<1x16x16x128xf32> to vector<16x16x128xf32>
    %7 = vector.shape_cast %0 : vector<1x128xf32> to vector<1x1x128xf32>
    %8 = vector.broadcast %7 : vector<1x1x128xf32> to vector<16x16x128xf32>
    %9 = arith.mulf %6, %8 : vector<16x16x128xf32>
    %10 = vector.shape_cast %1 : vector<1x128xf32> to vector<1x1x128xf32>
    %11 = vector.broadcast %10 : vector<1x1x128xf32> to vector<16x16x128xf32>
    %12 = arith.addf %9, %11 : vector<16x16x128xf32>
    %cst_12 = arith.constant 0.000000e+00 : f32
    %13 = vector.broadcast %cst_12 : f32 to vector<16x16x128xf32>
    %14 = arith.maximumf %12, %13 : vector<16x16x128xf32>
    %c1 = arith.constant 1 : index
    %c1_13 = arith.constant 1 : index
    %c0_14 = arith.constant 0 : index
    %15 = vector.load %arg9[%c1, %c1_13, %c0_14] : memref<18x18x128xf32, #tpu.memory_space<vmem>>, vector<16x16x128xf32>
    tpu.vector_store %arg9[%c1, %c1_13, %c0_14], %14 {strides = array<i32>} : memref<18x18x128xf32, #tpu.memory_space<vmem>>, vector<16x16x128xf32>,
    %c0_15 = arith.constant 0 : index
    %c0_16 = arith.constant 0 : index
    %c0_17 = arith.constant 0 : index
    %c0_18 = arith.constant 0 : index
    %16 = vector.load %arg3[%c0_15, %c0_16, %c0_17, %c0_18] : memref<1x2x16x128xf32, #tpu.memory_space<vmem>>, vector<1x1x16x128xf32>
    %17 = vector.shape_cast %16 : vector<1x1x16x128xf32> to vector<16x128xf32>
    %18 = vector.broadcast %0 : vector<1x128xf32> to vector<16x128xf32>
    %19 = arith.mulf %17, %18 : vector<16x128xf32>
    %20 = vector.broadcast %1 : vector<1x128xf32> to vector<16x128xf32>
    %21 = arith.addf %19, %20 : vector<16x128xf32>
    %cst_19 = arith.constant 0.000000e+00 : f32
    %22 = vector.broadcast %cst_19 : f32 to vector<16x128xf32>
    %23 = arith.maximumf %21, %22 : vector<16x128xf32>
    %c0_i32 = arith.constant 0 : i32
    %24 = arith.cmpi eq, %arg1, %c0_i32 : i32
    %cst_20 = arith.constant 0.000000e+00 : f32
    %25 = vector.broadcast %cst_20 : f32 to vector<16x128xf32>
    %26 = arith.select %24, %25, %23 : vector<16x128xf32>
    %27 = vector.shape_cast %26 : vector<16x128xf32> to vector<1x16x128xf32>
    %c0_21 = arith.constant 0 : index
    %c1_22 = arith.constant 1 : index
    %c0_23 = arith.constant 0 : index
    %28 = vector.load %arg9[%c0_21, %c1_22, %c0_23] : memref<18x18x128xf32, #tpu.memory_space<vmem>>, vector<1x16x128xf32>
    tpu.vector_store %arg9[%c0_21, %c1_22, %c0_23], %27 {strides = array<i32>} : memref<18x18x128xf32, #tpu.memory_space<vmem>>, vector<1x16x128xf32>,
    %c0_24 = arith.constant 0 : index
    %c1_25 = arith.constant 1 : index
    %c0_26 = arith.constant 0 : index
    %c0_27 = arith.constant 0 : index
    %29 = vector.load %arg3[%c0_24, %c1_25, %c0_26, %c0_27] : memref<1x2x16x128xf32, #tpu.memory_space<vmem>>, vector<1x1x16x128xf32>
    %30 = vector.shape_cast %29 : vector<1x1x16x128xf32> to vector<16x128xf32>
    %31 = vector.broadcast %0 : vector<1x128xf32> to vector<16x128xf32>
    %32 = arith.mulf %30, %31 : vector<16x128xf32>
    %33 = vector.broadcast %1 : vector<1x128xf32> to vector<16x128xf32>
    %34 = arith.addf %32, %33 : vector<16x128xf32>
    %cst_28 = arith.constant 0.000000e+00 : f32
    %35 = vector.broadcast %cst_28 : f32 to vector<16x128xf32>
    %36 = arith.maximumf %34, %35 : vector<16x128xf32>
    %c0_i32_29 = arith.constant 0 : i32
    %37 = arith.cmpi eq, %arg1, %c0_i32_29 : i32
    %cst_30 = arith.constant 0.000000e+00 : f32
    %38 = vector.broadcast %cst_30 : f32 to vector<16x128xf32>
    %39 = arith.select %37, %38, %36 : vector<16x128xf32>
    %40 = vector.shape_cast %39 : vector<16x128xf32> to vector<1x16x128xf32>
    %c17_31 = arith.constant 17 : index
    %c1_32 = arith.constant 1 : index
    %c0_33 = arith.constant 0 : index
    %41 = vector.load %arg9[%c17_31, %c1_32, %c0_33] : memref<18x18x128xf32, #tpu.memory_space<vmem>>, vector<1x16x128xf32>
    tpu.vector_store %arg9[%c17_31, %c1_32, %c0_33], %40 {strides = array<i32>} : memref<18x18x128xf32, #tpu.memory_space<vmem>>, vector<1x16x128xf32>,
    %c0_34 = arith.constant 0 : index
    %c0_35 = arith.constant 0 : index
    %c0_36 = arith.constant 0 : index
    %42 = vector.load %arg9[%c0_34, %c0_35, %c0_36] : memref<18x18x128xf32, #tpu.memory_space<vmem>>, vector<18x18x128xf32>
    %cst_37 = arith.constant 0.000000e+00 : f32
    %43 = vector.broadcast %cst_37 : f32 to vector<256x128xf32>
    %44 = vector.extract_strided_slice %42 {offsets = [0, 0, 0], sizes = [16, 18, 128], strides = [1, 1, 1]} : vector<18x18x128xf32> to vector<16x18x128xf32>
    %45 = vector.extract_strided_slice %44 {offsets = [0, 0, 0], sizes = [16, 16, 128], strides = [1, 1, 1]} : vector<16x18x128xf32> to vector<16x16x128xf32>
    %46 = vector.extract_strided_slice %44 {offsets = [0, 1, 0], sizes = [16, 16, 128], strides = [1, 1, 1]} : vector<16x18x128xf32> to vector<16x16x128xf32>
    %47 = vector.extract_strided_slice %44 {offsets = [0, 2, 0], sizes = [16, 16, 128], strides = [1, 1, 1]} : vector<16x18x128xf32> to vector<16x16x128xf32>
    %48 = tpu.concatenate %45, %46, %47 in 2 : vector<16x16x128xf32>, vector<16x16x128xf32>, vector<16x16x128xf32> -> vector<16x16x384xf32>
    %49 = vector.shape_cast %48 : vector<16x16x384xf32> to vector<256x384xf32>
    %c0_38 = arith.constant 0 : index
    %c0_39 = arith.constant 0 : index
    %c0_40 = arith.constant 0 : index
    %50 = vector.load %arg6[%c0_38, %c0_39, %c0_40] : memref<3x384x128xf32, #tpu.memory_space<vmem>>, vector<1x384x128xf32>
    %51 = vector.shape_cast %50 : vector<1x384x128xf32> to vector<384x128xf32>
    %cst_41 = arith.constant dense<0.000000e+00> : vector<256x128xf32>
    %52 = tpu.matmul %49, %51, %cst_41 {dimension_numbers = #tpu.dot_dimension_numbers<[1], [0], [0], [1], [0, 0, 1, 1], [], []>} : vector<256x384xf32>, vector<384x128xf32>, vector<256x128xf32> -> vector<256x128xf32>
    %53 = arith.addf %43, %52 : vector<256x128xf32>
    %54 = vector.extract_strided_slice %42 {offsets = [1, 0, 0], sizes = [16, 18, 128], strides = [1, 1, 1]} : vector<18x18x128xf32> to vector<16x18x128xf32>
    %55 = vector.extract_strided_slice %54 {offsets = [0, 0, 0], sizes = [16, 16, 128], strides = [1, 1, 1]} : vector<16x18x128xf32> to vector<16x16x128xf32>
    %56 = vector.extract_strided_slice %54 {offsets = [0, 1, 0], sizes = [16, 16, 128], strides = [1, 1, 1]} : vector<16x18x128xf32> to vector<16x16x128xf32>
    %57 = vector.extract_strided_slice %54 {offsets = [0, 2, 0], sizes = [16, 16, 128], strides = [1, 1, 1]} : vector<16x18x128xf32> to vector<16x16x128xf32>
    %58 = tpu.concatenate %55, %56, %57 in 2 : vector<16x16x128xf32>, vector<16x16x128xf32>, vector<16x16x128xf32> -> vector<16x16x384xf32>
    %59 = vector.shape_cast %58 : vector<16x16x384xf32> to vector<256x384xf32>
    %c1_42 = arith.constant 1 : index
    %c0_43 = arith.constant 0 : index
    %c0_44 = arith.constant 0 : index
    %60 = vector.load %arg6[%c1_42, %c0_43, %c0_44] : memref<3x384x128xf32, #tpu.memory_space<vmem>>, vector<1x384x128xf32>
    %61 = vector.shape_cast %60 : vector<1x384x128xf32> to vector<384x128xf32>
    %cst_45 = arith.constant dense<0.000000e+00> : vector<256x128xf32>
    %62 = tpu.matmul %59, %61, %cst_45 {dimension_numbers = #tpu.dot_dimension_numbers<[1], [0], [0], [1], [0, 0, 1, 1], [], []>} : vector<256x384xf32>, vector<384x128xf32>, vector<256x128xf32> -> vector<256x128xf32>
    %63 = arith.addf %53, %62 : vector<256x128xf32>
    %64 = vector.extract_strided_slice %42 {offsets = [2, 0, 0], sizes = [16, 18, 128], strides = [1, 1, 1]} : vector<18x18x128xf32> to vector<16x18x128xf32>
    %65 = vector.extract_strided_slice %64 {offsets = [0, 0, 0], sizes = [16, 16, 128], strides = [1, 1, 1]} : vector<16x18x128xf32> to vector<16x16x128xf32>
    %66 = vector.extract_strided_slice %64 {offsets = [0, 1, 0], sizes = [16, 16, 128], strides = [1, 1, 1]} : vector<16x18x128xf32> to vector<16x16x128xf32>
    %67 = vector.extract_strided_slice %64 {offsets = [0, 2, 0], sizes = [16, 16, 128], strides = [1, 1, 1]} : vector<16x18x128xf32> to vector<16x16x128xf32>
    %68 = tpu.concatenate %65, %66, %67 in 2 : vector<16x16x128xf32>, vector<16x16x128xf32>, vector<16x16x128xf32> -> vector<16x16x384xf32>
    %69 = vector.shape_cast %68 : vector<16x16x384xf32> to vector<256x384xf32>
    %c2 = arith.constant 2 : index
    %c0_46 = arith.constant 0 : index
    %c0_47 = arith.constant 0 : index
    %70 = vector.load %arg6[%c2, %c0_46, %c0_47] : memref<3x384x128xf32, #tpu.memory_space<vmem>>, vector<1x384x128xf32>
    %71 = vector.shape_cast %70 : vector<1x384x128xf32> to vector<384x128xf32>
    %cst_48 = arith.constant dense<0.000000e+00> : vector<256x128xf32>
    %72 = tpu.matmul %69, %71, %cst_48 {dimension_numbers = #tpu.dot_dimension_numbers<[1], [0], [0], [1], [0, 0, 1, 1], [], []>} : vector<256x384xf32>, vector<384x128xf32>, vector<256x128xf32> -> vector<256x128xf32>
    %73 = arith.addf %63, %72 : vector<256x128xf32>
    %c0_49 = arith.constant 0 : index
    %c0_50 = arith.constant 0 : index
    %74 = vector.load %arg7[%c0_49, %c0_50] : memref<256x128xf32, #tpu.memory_space<vmem>>, vector<256x128xf32>
    tpu.vector_store %arg7[%c0_49, %c0_50], %73 {strides = array<i32>} : memref<256x128xf32, #tpu.memory_space<vmem>>, vector<256x128xf32>,
    %cst_51 = arith.constant dense<0.000000e+00> : vector<128xf32>
    %75 = vector.multi_reduction <add>, %73, %cst_51 [0] : vector<256x128xf32> to vector<128xf32>
    %76 = vector.shape_cast %75 : vector<128xf32> to vector<1x128xf32>
    %c0_52 = arith.constant 0 : index
    %c0_53 = arith.constant 0 : index
    %c0_54 = arith.constant 0 : index
    %77 = vector.load %arg8[%c0_52, %c0_53, %c0_54] : memref<1x2x128xf32, #tpu.memory_space<vmem>>, vector<1x1x128xf32>
    %78 = vector.shape_cast %77 : vector<1x1x128xf32> to vector<1x128xf32>
    %79 = vector.shape_cast %76 : vector<1x128xf32> to vector<1x1x128xf32>
    tpu.vector_store %arg8[%c0_52, %c0_53, %c0_54], %79 {strides = array<i32>} : memref<1x2x128xf32, #tpu.memory_space<vmem>>, vector<1x1x128xf32>,
    %80 = arith.mulf %73, %73 : vector<256x128xf32>
    %cst_55 = arith.constant dense<0.000000e+00> : vector<128xf32>
    %81 = vector.multi_reduction <add>, %80, %cst_55 [0] : vector<256x128xf32> to vector<128xf32>
    %82 = vector.shape_cast %81 : vector<128xf32> to vector<1x128xf32>
    %c0_56 = arith.constant 0 : index
    %c1_57 = arith.constant 1 : index
    %c0_58 = arith.constant 0 : index
    %83 = vector.load %arg8[%c0_56, %c1_57, %c0_58] : memref<1x2x128xf32, #tpu.memory_space<vmem>>, vector<1x1x128xf32>
    %84 = vector.shape_cast %83 : vector<1x1x128xf32> to vector<1x128xf32>
    %85 = vector.shape_cast %82 : vector<1x128xf32> to vector<1x1x128xf32>
    tpu.vector_store %arg8[%c0_56, %c1_57, %c0_58], %85 {strides = array<i32>} : memref<1x2x128xf32, #tpu.memory_space<vmem>>, vector<1x1x128xf32>,
    return
  }
  func.func @transform_0(%arg0: i32, %arg1: i32) -> (i32, i32, i32, i32) {
    %c0_i32 = arith.constant 0 : i32
    %c0_i32_0 = arith.constant 0 : i32
    %c0_i32_1 = arith.constant 0 : i32
    return %arg0, %arg1, %c0_i32, %c0_i32_0 : i32, i32, i32, i32
  }
  func.func @transform_1(%arg0: i32, %arg1: i32) -> (i32, i32, i32, i32) {
    %c1_i32 = arith.constant 1 : i32
    %0 = arith.muli %arg0, %c1_i32 : i32
    %1 = arith.addi %0, %arg1 : i32
    %c0_i32 = arith.constant 0 : i32
    %c0_i32_0 = arith.constant 0 : i32
    %c0_i32_1 = arith.constant 0 : i32
    %c0_i32_2 = arith.constant 0 : i32
    return %1, %c0_i32, %c0_i32_0, %c0_i32_1 : i32, i32, i32, i32
  }
  func.func @transform_2(%arg0: i32, %arg1: i32) -> (i32, i32) {
    %c0_i32 = arith.constant 0 : i32
    %c0_i32_0 = arith.constant 0 : i32
    %c0_i32_1 = arith.constant 0 : i32
    return %c0_i32, %c0_i32_0 : i32, i32
  }
  func.func @transform_3(%arg0: i32, %arg1: i32) -> (i32, i32) {
    %c0_i32 = arith.constant 0 : i32
    %c0_i32_0 = arith.constant 0 : i32
    %c0_i32_1 = arith.constant 0 : i32
    return %c0_i32, %c0_i32_0 : i32, i32
  }
  func.func @transform_4(%arg0: i32, %arg1: i32) -> (i32, i32, i32) {
    %c0_i32 = arith.constant 0 : i32
    %c0_i32_0 = arith.constant 0 : i32
    %c0_i32_1 = arith.constant 0 : i32
    %c0_i32_2 = arith.constant 0 : i32
    return %c0_i32, %c0_i32_0, %c0_i32_1 : i32, i32, i32
  }
  func.func @transform_5(%arg0: i32, %arg1: i32) -> (i32, i32) {
    %c1_i32 = arith.constant 1 : i32
    %0 = arith.muli %arg0, %c1_i32 : i32
    %1 = arith.addi %0, %arg1 : i32
    %c0_i32 = arith.constant 0 : i32
    %c0_i32_0 = arith.constant 0 : i32
    return %1, %c0_i32 : i32, i32
  }
  func.func @transform_6(%arg0: i32, %arg1: i32) -> (i32, i32, i32) {
    %c1_i32 = arith.constant 1 : i32
    %0 = arith.muli %arg0, %c1_i32 : i32
    %1 = arith.addi %0, %arg1 : i32
    %c0_i32 = arith.constant 0 : i32
    %c0_i32_0 = arith.constant 0 : i32
    %c0_i32_1 = arith.constant 0 : i32
    return %1, %c0_i32, %c0_i32_0 : i32, i32, i32
  }
}

module attributes {stable_mosaic.version = 11 : i64} {
  func.func @_bn_relu_conv1x1_stats_kernel(%arg0: i32, %arg1: memref<512x128xf32, #tpu.memory_space<vmem>>, %arg2: memref<1x128xf32, #tpu.memory_space<vmem>>, %arg3: memref<1x128xf32, #tpu.memory_space<vmem>>, %arg4: memref<128x128xf32, #tpu.memory_space<vmem>>, %arg5: memref<512x128xf32, #tpu.memory_space<vmem>>, %arg6: memref<1x2x128xf32, #tpu.memory_space<vmem>>) attributes {dimension_semantics = [#tpu.dimension_semantics<parallel>], iteration_bounds = array<i64: 1>, scalar_prefetch = 0 : i64, scratch_operands = 0 : i64, tpu.core_type = #tpu.core_type<tc>, window_params = [{transform_indices = @transform_0, window_bounds = array<i64: 512, 128>}, {pipeline_mode = #tpu.pipeline_mode<synchronous>, transform_indices = @transform_1, window_bounds = array<i64: 1, 128>}, {pipeline_mode = #tpu.pipeline_mode<synchronous>, transform_indices = @transform_2, window_bounds = array<i64: 1, 128>}, {pipeline_mode = #tpu.pipeline_mode<synchronous>, transform_indices = @transform_3, window_bounds = array<i64: 128, 128>}, {transform_indices = @transform_4, window_bounds = array<i64: 512, 128>}, {transform_indices = @transform_5, window_bounds = array<i64: 1, 2, 128>}]} {
    %c0 = arith.constant 0 : index
    %c0_0 = arith.constant 0 : index
    %0 = vector.load %arg1[%c0, %c0_0] : memref<512x128xf32, #tpu.memory_space<vmem>>, vector<512x128xf32>
    %c0_1 = arith.constant 0 : index
    %c0_2 = arith.constant 0 : index
    %1 = vector.load %arg2[%c0_1, %c0_2] : memref<1x128xf32, #tpu.memory_space<vmem>>, vector<1x128xf32>
    %2 = vector.broadcast %1 : vector<1x128xf32> to vector<512x128xf32>
    %3 = arith.mulf %0, %2 : vector<512x128xf32>
    %c0_3 = arith.constant 0 : index
    %c0_4 = arith.constant 0 : index
    %4 = vector.load %arg3[%c0_3, %c0_4] : memref<1x128xf32, #tpu.memory_space<vmem>>, vector<1x128xf32>
    %5 = vector.broadcast %4 : vector<1x128xf32> to vector<512x128xf32>
    %6 = arith.addf %3, %5 : vector<512x128xf32>
    %cst = arith.constant 0.000000e+00 : f32
    %7 = vector.broadcast %cst : f32 to vector<512x128xf32>
    %8 = arith.maximumf %6, %7 : vector<512x128xf32>
    %c0_5 = arith.constant 0 : index
    %c0_6 = arith.constant 0 : index
    %9 = vector.load %arg4[%c0_5, %c0_6] : memref<128x128xf32, #tpu.memory_space<vmem>>, vector<128x128xf32>
    %cst_7 = arith.constant dense<0.000000e+00> : vector<512x128xf32>
    %10 = tpu.matmul %8, %9, %cst_7 {dimension_numbers = #tpu.dot_dimension_numbers<[1], [0], [0], [1], [0, 0, 1, 1], [], []>} : vector<512x128xf32>, vector<128x128xf32>, vector<512x128xf32> -> vector<512x128xf32>
    %c0_8 = arith.constant 0 : index
    %c0_9 = arith.constant 0 : index
    %11 = vector.load %arg5[%c0_8, %c0_9] : memref<512x128xf32, #tpu.memory_space<vmem>>, vector<512x128xf32>
    tpu.vector_store %arg5[%c0_8, %c0_9], %10 {strides = array<i32>} : memref<512x128xf32, #tpu.memory_space<vmem>>, vector<512x128xf32>,
    %cst_10 = arith.constant dense<0.000000e+00> : vector<128xf32>
    %12 = vector.multi_reduction <add>, %10, %cst_10 [0] : vector<512x128xf32> to vector<128xf32>
    %13 = vector.shape_cast %12 : vector<128xf32> to vector<1x128xf32>
    %c0_11 = arith.constant 0 : index
    %c0_12 = arith.constant 0 : index
    %c0_13 = arith.constant 0 : index
    %14 = vector.load %arg6[%c0_11, %c0_12, %c0_13] : memref<1x2x128xf32, #tpu.memory_space<vmem>>, vector<1x1x128xf32>
    %15 = vector.shape_cast %14 : vector<1x1x128xf32> to vector<1x128xf32>
    %16 = vector.shape_cast %13 : vector<1x128xf32> to vector<1x1x128xf32>
    tpu.vector_store %arg6[%c0_11, %c0_12, %c0_13], %16 {strides = array<i32>} : memref<1x2x128xf32, #tpu.memory_space<vmem>>, vector<1x1x128xf32>,
    %17 = arith.mulf %10, %10 : vector<512x128xf32>
    %cst_14 = arith.constant dense<0.000000e+00> : vector<128xf32>
    %18 = vector.multi_reduction <add>, %17, %cst_14 [0] : vector<512x128xf32> to vector<128xf32>
    %19 = vector.shape_cast %18 : vector<128xf32> to vector<1x128xf32>
    %c0_15 = arith.constant 0 : index
    %c1 = arith.constant 1 : index
    %c0_16 = arith.constant 0 : index
    %20 = vector.load %arg6[%c0_15, %c1, %c0_16] : memref<1x2x128xf32, #tpu.memory_space<vmem>>, vector<1x1x128xf32>
    %21 = vector.shape_cast %20 : vector<1x1x128xf32> to vector<1x128xf32>
    %22 = vector.shape_cast %19 : vector<1x128xf32> to vector<1x1x128xf32>
    tpu.vector_store %arg6[%c0_15, %c1, %c0_16], %22 {strides = array<i32>} : memref<1x2x128xf32, #tpu.memory_space<vmem>>, vector<1x1x128xf32>,
    return
  }
  func.func @transform_0(%arg0: i32) -> (i32, i32) {
    %c0_i32 = arith.constant 0 : i32
    %c0_i32_0 = arith.constant 0 : i32
    return %arg0, %c0_i32 : i32, i32
  }
  func.func @transform_1(%arg0: i32) -> (i32, i32) {
    %c0_i32 = arith.constant 0 : i32
    %c0_i32_0 = arith.constant 0 : i32
    %c0_i32_1 = arith.constant 0 : i32
    return %c0_i32, %c0_i32_0 : i32, i32
  }
  func.func @transform_2(%arg0: i32) -> (i32, i32) {
    %c0_i32 = arith.constant 0 : i32
    %c0_i32_0 = arith.constant 0 : i32
    %c0_i32_1 = arith.constant 0 : i32
    return %c0_i32, %c0_i32_0 : i32, i32
  }
  func.func @transform_3(%arg0: i32) -> (i32, i32) {
    %c0_i32 = arith.constant 0 : i32
    %c0_i32_0 = arith.constant 0 : i32
    %c0_i32_1 = arith.constant 0 : i32
    return %c0_i32, %c0_i32_0 : i32, i32
  }
  func.func @transform_4(%arg0: i32) -> (i32, i32) {
    %c0_i32 = arith.constant 0 : i32
    %c0_i32_0 = arith.constant 0 : i32
    return %arg0, %c0_i32 : i32, i32
  }
  func.func @transform_5(%arg0: i32) -> (i32, i32, i32) {
    %c0_i32 = arith.constant 0 : i32
    %c0_i32_0 = arith.constant 0 : i32
    %c0_i32_1 = arith.constant 0 : i32
    return %arg0, %c0_i32, %c0_i32_0 : i32, i32, i32
  }
}

module attributes {stable_mosaic.version = 11 : i64} {
  func.func @_bn_add_relu_kernel(%arg0: i32, %arg1: memref<512x128xf32, #tpu.memory_space<vmem>>, %arg2: memref<512x128xf32, #tpu.memory_space<vmem>>, %arg3: memref<1x128xf32, #tpu.memory_space<vmem>>, %arg4: memref<1x128xf32, #tpu.memory_space<vmem>>, %arg5: memref<512x128xf32, #tpu.memory_space<vmem>>) attributes {dimension_semantics = [#tpu.dimension_semantics<parallel>], iteration_bounds = array<i64: 1>, scalar_prefetch = 0 : i64, scratch_operands = 0 : i64, tpu.core_type = #tpu.core_type<tc>, window_params = [{transform_indices = @transform_0, window_bounds = array<i64: 512, 128>}, {transform_indices = @transform_1, window_bounds = array<i64: 512, 128>}, {pipeline_mode = #tpu.pipeline_mode<synchronous>, transform_indices = @transform_2, window_bounds = array<i64: 1, 128>}, {pipeline_mode = #tpu.pipeline_mode<synchronous>, transform_indices = @transform_3, window_bounds = array<i64: 1, 128>}, {transform_indices = @transform_4, window_bounds = array<i64: 512, 128>}]} {
    %c0 = arith.constant 0 : index
    %c0_0 = arith.constant 0 : index
    %0 = vector.load %arg1[%c0, %c0_0] : memref<512x128xf32, #tpu.memory_space<vmem>>, vector<512x128xf32>
    %c0_1 = arith.constant 0 : index
    %c0_2 = arith.constant 0 : index
    %1 = vector.load %arg3[%c0_1, %c0_2] : memref<1x128xf32, #tpu.memory_space<vmem>>, vector<1x128xf32>
    %2 = vector.broadcast %1 : vector<1x128xf32> to vector<512x128xf32>
    %3 = arith.mulf %0, %2 : vector<512x128xf32>
    %c0_3 = arith.constant 0 : index
    %c0_4 = arith.constant 0 : index
    %4 = vector.load %arg4[%c0_3, %c0_4] : memref<1x128xf32, #tpu.memory_space<vmem>>, vector<1x128xf32>
    %5 = vector.broadcast %4 : vector<1x128xf32> to vector<512x128xf32>
    %6 = arith.addf %3, %5 : vector<512x128xf32>
    %c0_5 = arith.constant 0 : index
    %c0_6 = arith.constant 0 : index
    %7 = vector.load %arg2[%c0_5, %c0_6] : memref<512x128xf32, #tpu.memory_space<vmem>>, vector<512x128xf32>
    %8 = arith.addf %6, %7 : vector<512x128xf32>
    %cst = arith.constant 0.000000e+00 : f32
    %9 = vector.broadcast %cst : f32 to vector<512x128xf32>
    %10 = arith.maximumf %8, %9 : vector<512x128xf32>
    %c0_7 = arith.constant 0 : index
    %c0_8 = arith.constant 0 : index
    %11 = vector.load %arg5[%c0_7, %c0_8] : memref<512x128xf32, #tpu.memory_space<vmem>>, vector<512x128xf32>
    tpu.vector_store %arg5[%c0_7, %c0_8], %10 {strides = array<i32>} : memref<512x128xf32, #tpu.memory_space<vmem>>, vector<512x128xf32>,
    return
  }
  func.func @transform_0(%arg0: i32) -> (i32, i32) {
    %c0_i32 = arith.constant 0 : i32
    %c0_i32_0 = arith.constant 0 : i32
    return %arg0, %c0_i32 : i32, i32
  }
  func.func @transform_1(%arg0: i32) -> (i32, i32) {
    %c0_i32 = arith.constant 0 : i32
    %c0_i32_0 = arith.constant 0 : i32
    return %arg0, %c0_i32 : i32, i32
  }
  func.func @transform_2(%arg0: i32) -> (i32, i32) {
    %c0_i32 = arith.constant 0 : i32
    %c0_i32_0 = arith.constant 0 : i32
    %c0_i32_1 = arith.constant 0 : i32
    return %c0_i32, %c0_i32_0 : i32, i32
  }
  func.func @transform_3(%arg0: i32) -> (i32, i32) {
    %c0_i32 = arith.constant 0 : i32
    %c0_i32_0 = arith.constant 0 : i32
    %c0_i32_1 = arith.constant 0 : i32
    return %c0_i32, %c0_i32_0 : i32, i32
  }
  func.func @transform_4(%arg0: i32) -> (i32, i32) {
    %c0_i32 = arith.constant 0 : i32
    %c0_i32_0 = arith.constant 0 : i32
    return %arg0, %c0_i32 : i32, i32
  }
}

</mosaic_0001>

<llo_original>
// kernel: bottleneck_pallas.4
$region0: #{bottleneck_pallas.4}
  #allocation0 [shape = 'u32[]', space=smem, size = 0x4, offset = 0x4, fixed_abs, tag = 'smem constant byte address 0x4 - core index']
  #allocation1 [shape = 'u32[72,128]{1,0:T(1,128)}', space=vmem, size = 0x9000, scoped, tag = 'internal scratch']
  %s0 = inlined_call_operand.vmem [shape: f32[512,128], index: 0, kind: input, shape index: {}]
  %s1 = inlined_call_operand.vmem [shape: f32[128,128], index: 1, kind: input, shape index: {}]
  %s2 = inlined_call_operand.vmem [shape: f32[512,128], index: 2, kind: output, shape index: {0}]
  %s3 = inlined_call_operand.vmem [shape: f32[1,2,128], index: 3, kind: output, shape index: {1}]
  %4 = xla_tuple %s2, %s3
  %s5 = sld [smem:[#allocation0]]
  $region26: #{bottleneck_pallas.4} parent=0
    _
  %s7 = ssub.s32 1, %s5
  %s8 = scalar_select 0, %s7, %s5
  // Predicated region
  $region2: #{bottleneck_pallas.4} parent=0 // pred_check
    _
  $region3: #{bottleneck_pallas.4} parent=0 // pred_check_branch
    %10 = sbr.rel (0) target = $region5
  $region4: #{bottleneck_pallas.4} parent=0 // pred_region
    _
  $region5: #{bottleneck_pallas.4} parent=0 // pred_fallthru
    _
  // Predicated region
  $region6: #{bottleneck_pallas.4} parent=0 // pred_check
    _
  $region7: #{bottleneck_pallas.4} parent=0 // pred_check_branch
    %12 = sbr.rel (0) target = $region9
  $region8: #{bottleneck_pallas.4} parent=0 // pred_region
    _
  $region9: #{bottleneck_pallas.4} parent=0 // pred_fallthru
    _
  %v13 = vld [vmem:[%s0] sm:$0xff]
  %v14 = vld [vmem:[%s0 + $0x8] sm:$0xff]
  %v15 = vld [vmem:[%s0 + $0x10] sm:$0xff]
  %v16 = vld [vmem:[%s0 + $0x18] sm:$0xff]
  %v17 = vld [vmem:[%s0 + $0x20] sm:$0xff]
  %v18 = vld [vmem:[%s0 + $0x28] sm:$0xff]
  %v19 = vld [vmem:[%s0 + $0x30] sm:$0xff]
  %v20 = vld [vmem:[%s0 + $0x38] sm:$0xff]
  %v21 = vld [vmem:[%s0 + $0x40] sm:$0xff]
  %v22 = vld [vmem:[%s0 + $0x48] sm:$0xff]
  %v23 = vld [vmem:[%s0 + $0x50] sm:$0xff]
  %v24 = vld [vmem:[%s0 + $0x58] sm:$0xff]
  %v25 = vld [vmem:[%s0 + $0x60] sm:$0xff]
  %v26 = vld [vmem:[%s0 + $0x68] sm:$0xff]
  %v27 = vld [vmem:[%s0 + $0x70] sm:$0xff]
  %v28 = vld [vmem:[%s0 + $0x78] sm:$0xff]
  %v29 = vld [vmem:[%s0 + $0x80] sm:$0xff]
  %v30 = vld [vmem:[%s0 + $0x88] sm:$0xff]
  %v31 = vld [vmem:[%s0 + $0x90] sm:$0xff]
  %v32 = vld [vmem:[%s0 + $0x98] sm:$0xff]
  %v33 = vld [vmem:[%s0 + $0xa0] sm:$0xff]
  %v34 = vld [vmem:[%s0 + $0xa8] sm:$0xff]
  %v35 = vld [vmem:[%s0 + $0xb0] sm:$0xff]
  %v36 = vld [vmem:[%s0 + $0xb8] sm:$0xff]
  %v37 = vld [vmem:[%s0 + $0xc0] sm:$0xff]
  %v38 = vld [vmem:[%s0 + $0xc8] sm:$0xff]
  %v39 = vld [vmem:[%s0 + $0xd0] sm:$0xff]
  %v40 = vld [vmem:[%s0 + $0xd8] sm:$0xff]
  %v41 = vld [vmem:[%s0 + $0xe0] sm:$0xff]
  %v42 = vld [vmem:[%s0 + $0xe8] sm:$0xff]
  %v43 = vld [vmem:[%s0 + $0xf0] sm:$0xff]
  %v44 = vld [vmem:[%s0 + $0xf8] sm:$0xff]
  %v45 = vld [vmem:[%s0 + $0x100] sm:$0xff]
  %v46 = vld [vmem:[%s0 + $0x108] sm:$0xff]
  %v47 = vld [vmem:[%s0 + $0x110] sm:$0xff]
  %v48 = vld [vmem:[%s0 + $0x118] sm:$0xff]
  %v49 = vld [vmem:[%s0 + $0x120] sm:$0xff]
  %v50 = vld [vmem:[%s0 + $0x128] sm:$0xff]
  %v51 = vld [vmem:[%s0 + $0x130] sm:$0xff]
  %v52 = vld [vmem:[%s0 + $0x138] sm:$0xff]
  %v53 = vld [vmem:[%s0 + $0x140] sm:$0xff]
  %v54 = vld [vmem:[%s0 + $0x148] sm:$0xff]
  %v55 = vld [vmem:[%s0 + $0x150] sm:$0xff]
  %v56 = vld [vmem:[%s0 + $0x158] sm:$0xff]
  %v57 = vld [vmem:[%s0 + $0x160] sm:$0xff]
  %v58 = vld [vmem:[%s0 + $0x168] sm:$0xff]
  %v59 = vld [vmem:[%s0 + $0x170] sm:$0xff]
  %v60 = vld [vmem:[%s0 + $0x178] sm:$0xff]
  %v61 = vld [vmem:[%s0 + $0x180] sm:$0xff]
  %v62 = vld [vmem:[%s0 + $0x188] sm:$0xff]
  %v63 = vld [vmem:[%s0 + $0x190] sm:$0xff]
  %v64 = vld [vmem:[%s0 + $0x198] sm:$0xff]
  %v65 = vld [vmem:[%s0 + $0x1a0] sm:$0xff]
  %v66 = vld [vmem:[%s0 + $0x1a8] sm:$0xff]
  %v67 = vld [vmem:[%s0 + $0x1b0] sm:$0xff]
  %v68 = vld [vmem:[%s0 + $0x1b8] sm:$0xff]
  %v69 = vld [vmem:[%s0 + $0x1c0] sm:$0xff]
  %v70 = vld [vmem:[%s0 + $0x1c8] sm:$0xff]
  %v71 = vld [vmem:[%s0 + $0x1d0] sm:$0xff]
  %v72 = vld [vmem:[%s0 + $0x1d8] sm:$0xff]
  %v73 = vld [vmem:[%s0 + $0x1e0] sm:$0xff]
  %v74 = vld [vmem:[%s0 + $0x1e8] sm:$0xff]
  %v75 = vld [vmem:[%s0 + $0x1f0] sm:$0xff]
  %v76 = vld [vmem:[%s0 + $0x1f8] sm:$0xff]
  %v77 = vld [vmem:[%s1] sm:$0xff]
  %v78 = vld [vmem:[%s1 + $0x8] sm:$0xff]
  %v79 = vld [vmem:[%s1 + $0x10] sm:$0xff]
  %v80 = vld [vmem:[%s1 + $0x18] sm:$0xff]
  %v81 = vld [vmem:[%s1 + $0x20] sm:$0xff]
  %v82 = vld [vmem:[%s1 + $0x28] sm:$0xff]
  %v83 = vld [vmem:[%s1 + $0x30] sm:$0xff]
  %v84 = vld [vmem:[%s1 + $0x38] sm:$0xff]
  %v85 = vld [vmem:[%s1 + $0x40] sm:$0xff]
  %v86 = vld [vmem:[%s1 + $0x48] sm:$0xff]
  %v87 = vld [vmem:[%s1 + $0x50] sm:$0xff]
  %v88 = vld [vmem:[%s1 + $0x58] sm:$0xff]
  %v89 = vld [vmem:[%s1 + $0x60] sm:$0xff]
  %v90 = vld [vmem:[%s1 + $0x68] sm:$0xff]
  %v91 = vld [vmem:[%s1 + $0x70] sm:$0xff]
  %v92 = vld [vmem:[%s1 + $0x78] sm:$0xff]
  %93 = vmatpush.msra.mxu0 %v92
  %94 = vmatpush.msra.mxu0 %v91
  %95 = vmatpush.msra.mxu0 %v90
  %96 = vmatpush.msra.mxu0 %v89
  %97 = vmatpush.msra.mxu0 %v88
  %98 = vmatpush.msra.mxu0 %v87
  %99 = vmatpush.msra.mxu0 %v86
  %100 = vmatpush.msra.mxu0 %v85
  %101 = vmatpush.msra.mxu0 %v84
  %102 = vmatpush.msra.mxu0 %v83
  %103 = vmatpush.msra.mxu0 %v82
  %104 = vmatpush.msra.mxu0 %v81
  %105 = vmatpush.msra.mxu0 %v80
  %106 = vmatpush.msra.mxu0 %v79
  %107 = vmatpush.msra.mxu0 %v78
  %108 = vmatpush.msra.mxu0 %v77
  %109 = vmatmul.f32.gmra.mxu0 %v13
  %v110 = vpop.f32.mrf.mxu0
  %v111 = vadd.f32 0.0, %v110
  %112 = vmatmul.f32.gmra.mxu0 %v14
  %v113 = vpop.f32.mrf.mxu0
  %v114 = vadd.f32 0.0, %v113
  %115 = vmatmul.f32.gmra.mxu0 %v15
  %v116 = vpop.f32.mrf.mxu0
  %v117 = vadd.f32 0.0, %v116
  %118 = vmatmul.f32.gmra.mxu0 %v16
  %v119 = vpop.f32.mrf.mxu0
  %v120 = vadd.f32 0.0, %v119
  %121 = vmatmul.f32.gmra.mxu0 %v17
  %v122 = vpop.f32.mrf.mxu0
  %v123 = vadd.f32 0.0, %v122
  %124 = vmatmul.f32.gmra.mxu0 %v18
  %v125 = vpop.f32.mrf.mxu0
  %v126 = vadd.f32 0.0, %v125
  %127 = vmatmul.f32.gmra.mxu0 %v19
  %v128 = vpop.f32.mrf.mxu0
  %v129 = vadd.f32 0.0, %v128
  %130 = vmatmul.f32.gmra.mxu0 %v20
  %v131 = vpop.f32.mrf.mxu0
  %v132 = vadd.f32 0.0, %v131
  %133 = vmatmul.f32.gmra.mxu0 %v21
  %v134 = vpop.f32.mrf.mxu0
  %v135 = vadd.f32 0.0, %v134
  %136 = vmatmul.f32.gmra.mxu0 %v22
  %v137 = vpop.f32.mrf.mxu0
  %v138 = vadd.f32 0.0, %v137
  %139 = vmatmul.f32.gmra.mxu0 %v23
  %v140 = vpop.f32.mrf.mxu0
  %v141 = vadd.f32 0.0, %v140
  %142 = vmatmul.f32.gmra.mxu0 %v24
  %v143 = vpop.f32.mrf.mxu0
  %v144 = vadd.f32 0.0, %v143
  %145 = vmatmul.f32.gmra.mxu0 %v25
  %v146 = vpop.f32.mrf.mxu0
  %v147 = vadd.f32 0.0, %v146
  %148 = vmatmul.f32.gmra.mxu0 %v26
  %v149 = vpop.f32.mrf.mxu0
  %v150 = vadd.f32 0.0, %v149
  %151 = vmatmul.f32.gmra.mxu0 %v27
  %v152 = vpop.f32.mrf.mxu0
  %v153 = vadd.f32 0.0, %v152
  %154 = vmatmul.f32.gmra.mxu0 %v28
  %v155 = vpop.f32.mrf.mxu0
  %v156 = vadd.f32 0.0, %v155
  %157 = vmatmul.f32.gmra.mxu0 %v29
  %v158 = vpop.f32.mrf.mxu0
  %v159 = vadd.f32 0.0, %v158
  %160 = vmatmul.f32.gmra.mxu0 %v30
  %v161 = vpop.f32.mrf.mxu0
  %v162 = vadd.f32 0.0, %v161
  %163 = vmatmul.f32.gmra.mxu0 %v31
  %v164 = vpop.f32.mrf.mxu0
  %v165 = vadd.f32 0.0, %v164
  %166 = vmatmul.f32.gmra.mxu0 %v32
  %v167 = vpop.f32.mrf.mxu0
  %v168 = vadd.f32 0.0, %v167
  %169 = vmatmul.f32.gmra.mxu0 %v33
  %v170 = vpop.f32.mrf.mxu0
  %v171 = vadd.f32 0.0, %v170
  %172 = vmatmul.f32.gmra.mxu0 %v34
  %v173 = vpop.f32.mrf.mxu0
  %v174 = vadd.f32 0.0, %v173
  %175 = vmatmul.f32.gmra.mxu0 %v35
  %v176 = vpop.f32.mrf.mxu0
  %v177 = vadd.f32 0.0, %v176
  %178 = vmatmul.f32.gmra.mxu0 %v36
  %v179 = vpop.f32.mrf.mxu0
  %v180 = vadd.f32 0.0, %v179
  %181 = vmatmul.f32.gmra.mxu0 %v37
  %v182 = vpop.f32.mrf.mxu0
  %v183 = vadd.f32 0.0, %v182
  %184 = vmatmul.f32.gmra.mxu0 %v38
  %v185 = vpop.f32.mrf.mxu0
  %v186 = vadd.f32 0.0, %v185
  %187 = vmatmul.f32.gmra.mxu0 %v39
  %v188 = vpop.f32.mrf.mxu0
  %v189 = vadd.f32 0.0, %v188
  %190 = vmatmul.f32.gmra.mxu0 %v40
  %v191 = vpop.f32.mrf.mxu0
  %v192 = vadd.f32 0.0, %v191
  %193 = vmatmul.f32.gmra.mxu0 %v41
  %v194 = vpop.f32.mrf.mxu0
  %v195 = vadd.f32 0.0, %v194
  %196 = vmatmul.f32.gmra.mxu0 %v42
  %v197 = vpop.f32.mrf.mxu0
  %v198 = vadd.f32 0.0, %v197
  %199 = vmatmul.f32.gmra.mxu0 %v43
  %v200 = vpop.f32.mrf.mxu0
  %v201 = vadd.f32 0.0, %v200
  %202 = vmatmul.f32.gmra.mxu0 %v44
  %v203 = vpop.f32.mrf.mxu0
  %v204 = vadd.f32 0.0, %v203
  %205 = vmatmul.f32.gmra.mxu0 %v45
  %v206 = vpop.f32.mrf.mxu0
  %v207 = vadd.f32 0.0, %v206
  %208 = vmatmul.f32.gmra.mxu0 %v46
  %v209 = vpop.f32.mrf.mxu0
  %v210 = vadd.f32 0.0, %v209
  %211 = vmatmul.f32.gmra.mxu0 %v47
  %v212 = vpop.f32.mrf.mxu0
  %v213 = vadd.f32 0.0, %v212
  %214 = vmatmul.f32.gmra.mxu0 %v48
  %v215 = vpop.f32.mrf.mxu0
  %v216 = vadd.f32 0.0, %v215
  %217 = vmatmul.f32.gmra.mxu0 %v49
  %v218 = vpop.f32.mrf.mxu0
  %v219 = vadd.f32 0.0, %v218
  %220 = vmatmul.f32.gmra.mxu0 %v50
  %v221 = vpop.f32.mrf.mxu0
  %v222 = vadd.f32 0.0, %v221
  %223 = vmatmul.f32.gmra.mxu0 %v51
  %v224 = vpop.f32.mrf.mxu0
  %v225 = vadd.f32 0.0, %v224
  %226 = vmatmul.f32.gmra.mxu0 %v52
  %v227 = vpop.f32.mrf.mxu0
  %v228 = vadd.f32 0.0, %v227
  %229 = vmatmul.f32.gmra.mxu0 %v53
  %v230 = vpop.f32.mrf.mxu0
  %v231 = vadd.f32 0.0, %v230
  %232 = vmatmul.f32.gmra.mxu0 %v54
  %v233 = vpop.f32.mrf.mxu0
  %v234 = vadd.f32 0.0, %v233
  %235 = vmatmul.f32.gmra.mxu0 %v55
  %v236 = vpop.f32.mrf.mxu0
  %v237 = vadd.f32 0.0, %v236
  %238 = vmatmul.f32.gmra.mxu0 %v56
  %v239 = vpop.f32.mrf.mxu0
  %v240 = vadd.f32 0.0, %v239
  %241 = vmatmul.f32.gmra.mxu0 %v57
  %v242 = vpop.f32.mrf.mxu0
  %v243 = vadd.f32 0.0, %v242
  %244 = vmatmul.f32.gmra.mxu0 %v58
  %v245 = vpop.f32.mrf.mxu0
  %v246 = vadd.f32 0.0, %v245
  %247 = vmatmul.f32.gmra.mxu0 %v59
  %v248 = vpop.f32.mrf.mxu0
  %v249 = vadd.f32 0.0, %v248
  %250 = vmatmul.f32.gmra.mxu0 %v60
  %v251 = vpop.f32.mrf.mxu0
  %v252 = vadd.f32 0.0, %v251
  %253 = vmatmul.f32.gmra.mxu0 %v61
  %v254 = vpop.f32.mrf.mxu0
  %v255 = vadd.f32 0.0, %v254
  %256 = vmatmul.f32.gmra.mxu0 %v62
  %v257 = vpop.f32.mrf.mxu0
  %v258 = vadd.f32 0.0, %v257
  %259 = vmatmul.f32.gmra.mxu0 %v63
  %v260 = vpop.f32.mrf.mxu0
  %v261 = vadd.f32 0.0, %v260
  %262 = vmatmul.f32.gmra.mxu0 %v64
  %v263 = vpop.f32.mrf.mxu0
  %v264 = vadd.f32 0.0, %v263
  %265 = vmatmul.f32.gmra.mxu0 %v65
  %v266 = vpop.f32.mrf.mxu0
  %v267 = vadd.f32 0.0, %v266
  %268 = vmatmul.f32.gmra.mxu0 %v66
  %v269 = vpop.f32.mrf.mxu0
  %v270 = vadd.f32 0.0, %v269
  %271 = vmatmul.f32.gmra.mxu0 %v67
  %v272 = vpop.f32.mrf.mxu0
  %v273 = vadd.f32 0.0, %v272
  %274 = vmatmul.f32.gmra.mxu0 %v68
  %v275 = vpop.f32.mrf.mxu0
  %v276 = vadd.f32 0.0, %v275
  %277 = vmatmul.f32.gmra.mxu0 %v69
  %v278 = vpop.f32.mrf.mxu0
  %v279 = vadd.f32 0.0, %v278
  %280 = vmatmul.f32.gmra.mxu0 %v70
  %v281 = vpop.f32.mrf.mxu0
  %v282 = vadd.f32 0.0, %v281
  %283 = vmatmul.f32.gmra.mxu0 %v71
  %v284 = vpop.f32.mrf.mxu0
  %v285 = vadd.f32 0.0, %v284
  %286 = vmatmul.f32.gmra.mxu0 %v72
  %v287 = vpop.f32.mrf.mxu0
  %v288 = vadd.f32 0.0, %v287
  %289 = vmatmul.f32.gmra.mxu0 %v73
  %v290 = vpop.f32.mrf.mxu0
  %v291 = vadd.f32 0.0, %v290
  %292 = vmatmul.f32.gmra.mxu0 %v74
  %v293 = vpop.f32.mrf.mxu0
  %v294 = vadd.f32 0.0, %v293
  %295 = vmatmul.f32.gmra.mxu0 %v75
  %v296 = vpop.f32.mrf.mxu0
  %v297 = vadd.f32 0.0, %v296
  %298 = vmatmul.f32.gmra.mxu0 %v76
  %v299 = vpop.f32.mrf.mxu0
  %v300 = vadd.f32 0.0, %v299
  %301 = vdwg.mxu0
  %302 = vst [vmem:[%s2] sm:$0xff] %v111
  %303 = vst [vmem:[%s2 + $0x8] sm:$0xff] %v114
  %304 = vst [vmem:[%s2 + $0x10] sm:$0xff] %v117
  %305 = vst [vmem:[%s2 + $0x18] sm:$0xff] %v120
  %306 = vst [vmem:[%s2 + $0x20] sm:$0xff] %v123
  %307 = vst [vmem:[%s2 + $0x28] sm:$0xff] %v126
  %308 = vst [vmem:[%s2 + $0x30] sm:$0xff] %v129
  %309 = vst [vmem:[%s2 + $0x38] sm:$0xff] %v132
  %310 = vst [vmem:[%s2 + $0x40] sm:$0xff] %v135
  %311 = vst [vmem:[%s2 + $0x48] sm:$0xff] %v138
  %312 = vst [vmem:[%s2 + $0x50] sm:$0xff] %v141
  %313 = vst [vmem:[%s2 + $0x58] sm:$0xff] %v144
  %314 = vst [vmem:[%s2 + $0x60] sm:$0xff] %v147
  %315 = vst [vmem:[%s2 + $0x68] sm:$0xff] %v150
  %316 = vst [vmem:[%s2 + $0x70] sm:$0xff] %v153
  %317 = vst [vmem:[%s2 + $0x78] sm:$0xff] %v156
  %318 = vst [vmem:[%s2 + $0x80] sm:$0xff] %v159
  %319 = vst [vmem:[%s2 + $0x88] sm:$0xff] %v162
  %320 = vst [vmem:[%s2 + $0x90] sm:$0xff] %v165
  %321 = vst [vmem:[%s2 + $0x98] sm:$0xff] %v168
  %322 = vst [vmem:[%s2 + $0xa0] sm:$0xff] %v171
  %323 = vst [vmem:[%s2 + $0xa8] sm:$0xff] %v174
  %324 = vst [vmem:[%s2 + $0xb0] sm:$0xff] %v177
  %325 = vst [vmem:[%s2 + $0xb8] sm:$0xff] %v180
  %326 = vst [vmem:[%s2 + $0xc0] sm:$0xff] %v183
  %327 = vst [vmem:[%s2 + $0xc8] sm:$0xff] %v186
  %328 = vst [vmem:[%s2 + $0xd0] sm:$0xff] %v189
  %329 = vst [vmem:[%s2 + $0xd8] sm:$0xff] %v192
  %330 = vst [vmem:[%s2 + $0xe0] sm:$0xff] %v195
  %331 = vst [vmem:[%s2 + $0xe8] sm:$0xff] %v198
  %332 = vst [vmem:[%s2 + $0xf0] sm:$0xff] %v201
  %333 = vst [vmem:[%s2 + $0xf8] sm:$0xff] %v204
  %334 = vst [vmem:[%s2 + $0x100] sm:$0xff] %v207
  %335 = vst [vmem:[%s2 + $0x108] sm:$0xff] %v210
  %336 = vst [vmem:[%s2 + $0x110] sm:$0xff] %v213
  %337 = vst [vmem:[%s2 + $0x118] sm:$0xff] %v216
  %338 = vst [vmem:[%s2 + $0x120] sm:$0xff] %v219
  %339 = vst [vmem:[%s2 + $0x128] sm:$0xff] %v222
  %340 = vst [vmem:[%s2 + $0x130] sm:$0xff] %v225
  %341 = vst [vmem:[%s2 + $0x138] sm:$0xff] %v228
  %342 = vst [vmem:[%s2 + $0x140] sm:$0xff] %v231
  %343 = vst [vmem:[%s2 + $0x148] sm:$0xff] %v234
  %344 = vst [vmem:[%s2 + $0x150] sm:$0xff] %v237
  %345 = vst [vmem:[%s2 + $0x158] sm:$0xff] %v240
  %346 = vst [vmem:[%s2 + $0x160] sm:$0xff] %v243
  %347 = vst [vmem:[%s2 + $0x168] sm:$0xff] %v246
  %348 = vst [vmem:[%s2 + $0x170] sm:$0xff] %v249
  %349 = vst [vmem:[%s2 + $0x178] sm:$0xff] %v252
  %350 = vst [vmem:[%s2 + $0x180] sm:$0xff] %v255
  %351 = vst [vmem:[%s2 + $0x188] sm:$0xff] %v258
  %352 = vst [vmem:[%s2 + $0x190] sm:$0xff] %v261
  %353 = vst [vmem:[%s2 + $0x198] sm:$0xff] %v264
  %354 = vst [vmem:[%s2 + $0x1a0] sm:$0xff] %v267
  %355 = vst [vmem:[%s2 + $0x1a8] sm:$0xff] %v270
  %356 = vst [vmem:[%s2 + $0x1b0] sm:$0xff] %v273
  %357 = vst [vmem:[%s2 + $0x1b8] sm:$0xff] %v276
  %358 = vst [vmem:[%s2 + $0x1c0] sm:$0xff] %v279
  %359 = vst [vmem:[%s2 + $0x1c8] sm:$0xff] %v282
  %360 = vst [vmem:[%s2 + $0x1d0] sm:$0xff] %v285
  %361 = vst [vmem:[%s2 + $0x1d8] sm:$0xff] %v288
  %362 = vst [vmem:[%s2 + $0x1e0] sm:$0xff] %v291
  %363 = vst [vmem:[%s2 + $0x1e8] sm:$0xff] %v294
  %364 = vst [vmem:[%s2 + $0x1f0] sm:$0xff] %v297
  %365 = vst [vmem:[%s2 + $0x1f8] sm:$0xff] %v300
  %v366 = vadd.f32 %v111, %v114
  %v367 = vadd.f32 %v366, %v117
  %v368 = vadd.f32 %v367, %v120
  %v369 = vadd.f32 %v368, %v123
  %v370 = vadd.f32 %v369, %v126
  %v371 = vadd.f32 %v370, %v129
  %v372 = vadd.f32 %v371, %v132
  %v373 = vadd.f32 %v372, %v135
  %v374 = vadd.f32 %v373, %v138
  %v375 = vadd.f32 %v374, %v141
  %v376 = vadd.f32 %v375, %v144
  %v377 = vadd.f32 %v376, %v147
  %v378 = vadd.f32 %v377, %v150
  %v379 = vadd.f32 %v378, %v153
  %v380 = vadd.f32 %v379, %v156
  %v381 = vadd.f32 %v380, %v159
  %v382 = vadd.f32 %v381, %v162
  %v383 = vadd.f32 %v382, %v165
  %v384 = vadd.f32 %v383, %v168
  %v385 = vadd.f32 %v384, %v171
  %v386 = vadd.f32 %v385, %v174
  %v387 = vadd.f32 %v386, %v177
  %v388 = vadd.f32 %v387, %v180
  %v389 = vadd.f32 %v388, %v183
  %v390 = vadd.f32 %v389, %v186
  %v391 = vadd.f32 %v390, %v189
  %v392 = vadd.f32 %v391, %v192
  %v393 = vadd.f32 %v392, %v195
  %v394 = vadd.f32 %v393, %v198
  %v395 = vadd.f32 %v394, %v201
  %v396 = vadd.f32 %v395, %v204
  %v397 = vadd.f32 %v396, %v207
  %v398 = vadd.f32 %v397, %v210
  %v399 = vadd.f32 %v398, %v213
  %v400 = vadd.f32 %v399, %v216
  %v401 = vadd.f32 %v400, %v219
  %v402 = vadd.f32 %v401, %v222
  %v403 = vadd.f32 %v402, %v225
  %v404 = vadd.f32 %v403, %v228
  %v405 = vadd.f32 %v404, %v231
  %v406 = vadd.f32 %v405, %v234
  %v407 = vadd.f32 %v406, %v237
  %v408 = vadd.f32 %v407, %v240
  %v409 = vadd.f32 %v408, %v243
  %v410 = vadd.f32 %v409, %v246
  %v411 = vadd.f32 %v410, %v249
  %v412 = vadd.f32 %v411, %v252
  %v413 = vadd.f32 %v412, %v255
  %v414 = vadd.f32 %v413, %v258
  %v415 = vadd.f32 %v414, %v261
  %v416 = vadd.f32 %v415, %v264
  %v417 = vadd.f32 %v416, %v267
  %v418 = vadd.f32 %v417, %v270
  %v419 = vadd.f32 %v418, %v273
  %v420 = vadd.f32 %v419, %v276
  %v421 = vadd.f32 %v420, %v279
  %v422 = vadd.f32 %v421, %v282
  %v423 = vadd.f32 %v422, %v285
  %v424 = vadd.f32 %v423, %v288
  %v425 = vadd.f32 %v424, %v291
  %v426 = vadd.f32 %v425, %v294
  %v427 = vadd.f32 %v426, %v297
  %v428 = vadd.f32 %v427, %v300
  %v429 = vrot.slane %v428, 4
  %v430 = vadd.f32 %v428, %v429
  %v431 = vrot.slane %v430, 2
  %v432 = vadd.f32 %v430, %v431
  %v433 = vrot.slane %v432, 1
  %v434 = vadd.f32 %v432, %v433
  %435 = vst [vmem:[%s3] sm:$0x1] %v434
  %v436 = vmul.f32 %v111, %v111
  %v437 = vmul.f32 %v114, %v114
  %v438 = vmul.f32 %v117, %v117
  %v439 = vmul.f32 %v120, %v120
  %v440 = vmul.f32 %v123, %v123
  %v441 = vmul.f32 %v126, %v126
  %v442 = vmul.f32 %v129, %v129
  %v443 = vmul.f32 %v132, %v132
  %v444 = vmul.f32 %v135, %v135
  %v445 = vmul.f32 %v138, %v138
  %v446 = vmul.f32 %v141, %v141
  %v447 = vmul.f32 %v144, %v144
  %v448 = vmul.f32 %v147, %v147
  %v449 = vmul.f32 %v150, %v150
  %v450 = vmul.f32 %v153, %v153
  %v451 = vmul.f32 %v156, %v156
  %v452 = vmul.f32 %v159, %v159
  %v453 = vmul.f32 %v162, %v162
  %v454 = vmul.f32 %v165, %v165
  %v455 = vmul.f32 %v168, %v168
  %v456 = vmul.f32 %v171, %v171
  %v457 = vmul.f32 %v174, %v174
  %v458 = vmul.f32 %v177, %v177
  %v459 = vmul.f32 %v180, %v180
  %v460 = vmul.f32 %v183, %v183
  %v461 = vmul.f32 %v186, %v186
  %v462 = vmul.f32 %v189, %v189
  %v463 = vmul.f32 %v192, %v192
  %v464 = vmul.f32 %v195, %v195
  %v465 = vmul.f32 %v198, %v198
  %v466 = vmul.f32 %v201, %v201
  %v467 = vmul.f32 %v204, %v204
  %v468 = vmul.f32 %v207, %v207
  %v469 = vmul.f32 %v210, %v210
  %v470 = vmul.f32 %v213, %v213
  %v471 = vmul.f32 %v216, %v216
  %v472 = vmul.f32 %v219, %v219
  %v473 = vmul.f32 %v222, %v222
  %v474 = vmul.f32 %v225, %v225
  %v475 = vmul.f32 %v228, %v228
  %v476 = vmul.f32 %v231, %v231
  %v477 = vmul.f32 %v234, %v234
  %v478 = vmul.f32 %v237, %v237
  %v479 = vmul.f32 %v240, %v240
  %v480 = vmul.f32 %v243, %v243
  %v481 = vmul.f32 %v246, %v246
  %v482 = vmul.f32 %v249, %v249
  %v483 = vmul.f32 %v252, %v252
  %v484 = vmul.f32 %v255, %v255
  %v485 = vmul.f32 %v258, %v258
  %v486 = vmul.f32 %v261, %v261
  %v487 = vmul.f32 %v264, %v264
  %v488 = vmul.f32 %v267, %v267
  %v489 = vmul.f32 %v270, %v270
  %v490 = vmul.f32 %v273, %v273
  %v491 = vmul.f32 %v276, %v276
  %v492 = vmul.f32 %v279, %v279
  %v493 = vmul.f32 %v282, %v282
  %v494 = vmul.f32 %v285, %v285
  %v495 = vmul.f32 %v288, %v288
  %v496 = vmul.f32 %v291, %v291
  %v497 = vmul.f32 %v294, %v294
  %v498 = vmul.f32 %v297, %v297
  %v499 = vmul.f32 %v300, %v300
  %v500 = vadd.f32 %v436, %v437
  %v501 = vadd.f32 %v500, %v438
  %v502 = vadd.f32 %v501, %v439
  %v503 = vadd.f32 %v502, %v440
  %v504 = vadd.f32 %v503, %v441
  %v505 = vadd.f32 %v504, %v442
  %v506 = vadd.f32 %v505, %v443
  %v507 = vadd.f32 %v506, %v444
  %v508 = vadd.f32 %v507, %v445
  %v509 = vadd.f32 %v508, %v446
  %v510 = vadd.f32 %v509, %v447
  %v511 = vadd.f32 %v510, %v448
  %v512 = vadd.f32 %v511, %v449
  %v513 = vadd.f32 %v512, %v450
  %v514 = vadd.f32 %v513, %v451
  %v515 = vadd.f32 %v514, %v452
  %v516 = vadd.f32 %v515, %v453
  %v517 = vadd.f32 %v516, %v454
  %v518 = vadd.f32 %v517, %v455
  %v519 = vadd.f32 %v518, %v456
  %v520 = vadd.f32 %v519, %v457
  %v521 = vadd.f32 %v520, %v458
  %v522 = vadd.f32 %v521, %v459
  %v523 = vadd.f32 %v522, %v460
  %v524 = vadd.f32 %v523, %v461
  %v525 = vadd.f32 %v524, %v462
  %v526 = vadd.f32 %v525, %v463
  %v527 = vadd.f32 %v526, %v464
  %v528 = vadd.f32 %v527, %v465
  %v529 = vadd.f32 %v528, %v466
  %v530 = vadd.f32 %v529, %v467
  %v531 = vadd.f32 %v530, %v468
  %v532 = vadd.f32 %v531, %v469
  %v533 = vadd.f32 %v532, %v470
  %v534 = vadd.f32 %v533, %v471
  %v535 = vadd.f32 %v534, %v472
  %v536 = vadd.f32 %v535, %v473
  %v537 = vadd.f32 %v536, %v474
  %v538 = vadd.f32 %v537, %v475
  %v539 = vadd.f32 %v538, %v476
  %v540 = vadd.f32 %v539, %v477
  %v541 = vadd.f32 %v540, %v478
  %v542 = vadd.f32 %v541, %v479
  %v543 = vadd.f32 %v542, %v480
  %v544 = vadd.f32 %v543, %v481
  %v545 = vadd.f32 %v544, %v482
  %v546 = vadd.f32 %v545, %v483
  %v547 = vadd.f32 %v546, %v484
  %v548 = vadd.f32 %v547, %v485
  %v549 = vadd.f32 %v548, %v486
  %v550 = vadd.f32 %v549, %v487
  %v551 = vadd.f32 %v550, %v488
  %v552 = vadd.f32 %v551, %v489
  %v553 = vadd.f32 %v552, %v490
  %v554 = vadd.f32 %v553, %v491
  %v555 = vadd.f32 %v554, %v492
  %v556 = vadd.f32 %v555, %v493
  %v557 = vadd.f32 %v556, %v494
  %v558 = vadd.f32 %v557, %v495
  %v559 = vadd.f32 %v558, %v496
  %v560 = vadd.f32 %v559, %v497
  %v561 = vadd.f32 %v560, %v498
  %v562 = vadd.f32 %v561, %v499
  %v563 = vrot.slane %v562, 4
  %v564 = vadd.f32 %v562, %v563
  %v565 = vrot.slane %v564, 2
  %v566 = vadd.f32 %v564, %v565
  %v567 = vrot.slane %v566, 1
  %v568 = vadd.f32 %v566, %v567
  %569 = vst [vmem:[%s3 + $0x1] sm:$0x1] %v568
  // Predicated region
  $region10: #{bottleneck_pallas.4} parent=0 // pred_check
    _
  $region11: #{bottleneck_pallas.4} parent=0 // pred_check_branch
    %571 = sbr.rel (0) target = $region13
  $region12: #{bottleneck_pallas.4} parent=0 // pred_region
    _
  $region13: #{bottleneck_pallas.4} parent=0 // pred_fallthru
    _
  // Predicated region
  $region14: #{bottleneck_pallas.4} parent=0 // pred_check
    _
  $region15: #{bottleneck_pallas.4} parent=0 // pred_check_branch
    %573 = sbr.rel (0) target = $region17
  $region16: #{bottleneck_pallas.4} parent=0 // pred_region
    _
  $region17: #{bottleneck_pallas.4} parent=0 // pred_fallthru
    _
  // Predicated region
  $region18: #{bottleneck_pallas.4} parent=0 // pred_check
    _
  $region19: #{bottleneck_pallas.4} parent=0 // pred_check_branch
    %575 = sbr.rel (0) target = $region21
  $region20: #{bottleneck_pallas.4} parent=0 // pred_region
    _
  $region21: #{bottleneck_pallas.4} parent=0 // pred_fallthru
    _
  // Predicated region
  $region22: #{bottleneck_pallas.4} parent=0 // pred_check
    _
  $region23: #{bottleneck_pallas.4} parent=0 // pred_check_branch
    %577 = sbr.rel (0) target = $region25
  $region24: #{bottleneck_pallas.4} parent=0 // pred_region
    _
  $region25: #{bottleneck_pallas.4} parent=0 // pred_fallthru
    _

// kernel: bottleneck_pallas.6
$region0: #{bottleneck_pallas.6}
  #allocation0 [shape = 'u32[]', space=smem, size = 0x4, offset = 0x4, fixed_abs, tag = 'smem constant byte address 0x4 - core index']
  #allocation1 [shape = 'u32[72,128]{1,0:T(1,128)}', space=vmem, size = 0x9000, scoped, tag = 'internal scratch']
  %s0 = inlined_call_operand.vmem [shape: f32[512,128], index: 0, kind: input, shape index: {}]
  %s1 = inlined_call_operand.vmem [shape: f32[1,128], index: 1, kind: input, shape index: {}]
  %s2 = inlined_call_operand.vmem [shape: f32[1,128], index: 2, kind: input, shape index: {}]
  %s3 = inlined_call_operand.vmem [shape: f32[128,128], index: 3, kind: input, shape index: {}]
  %s4 = inlined_call_operand.vmem [shape: f32[512,128], index: 4, kind: output, shape index: {0}]
  %s5 = inlined_call_operand.vmem [shape: f32[1,2,128], index: 5, kind: output, shape index: {1}]
  %6 = xla_tuple %s4, %s5
  %s7 = sld [smem:[#allocation0]]
  $region34: #{bottleneck_pallas.6} parent=0
    _
  %s9 = ssub.s32 1, %s7
  %s10 = scalar_select 0, %s9, %s7
  // Predicated region
  $region2: #{bottleneck_pallas.6} parent=0 // pred_check
    _
  $region3: #{bottleneck_pallas.6} parent=0 // pred_check_branch
    %12 = sbr.rel (0) target = $region5
  $region4: #{bottleneck_pallas.6} parent=0 // pred_region
    _
  $region5: #{bottleneck_pallas.6} parent=0 // pred_fallthru
    _
  // Predicated region
  $region6: #{bottleneck_pallas.6} parent=0 // pred_check
    _
  $region7: #{bottleneck_pallas.6} parent=0 // pred_check_branch
    %14 = sbr.rel (0) target = $region9
  $region8: #{bottleneck_pallas.6} parent=0 // pred_region
    _
  $region9: #{bottleneck_pallas.6} parent=0 // pred_fallthru
    _
  // Predicated region
  $region10: #{bottleneck_pallas.6} parent=0 // pred_check
    _
  $region11: #{bottleneck_pallas.6} parent=0 // pred_check_branch
    %16 = sbr.rel (0) target = $region13
  $region12: #{bottleneck_pallas.6} parent=0 // pred_region
    _
  $region13: #{bottleneck_pallas.6} parent=0 // pred_fallthru
    _
  // Predicated region
  $region14: #{bottleneck_pallas.6} parent=0 // pred_check
    _
  $region15: #{bottleneck_pallas.6} parent=0 // pred_check_branch
    %18 = sbr.rel (0) target = $region17
  $region16: #{bottleneck_pallas.6} parent=0 // pred_region
    _
  $region17: #{bottleneck_pallas.6} parent=0 // pred_fallthru
    _
  %v19 = vld [vmem:[%s0] sm:$0xff]
  %v20 = vld [vmem:[%s0 + $0x8] sm:$0xff]
  %v21 = vld [vmem:[%s0 + $0x10] sm:$0xff]
  %v22 = vld [vmem:[%s0 + $0x18] sm:$0xff]
  %v23 = vld [vmem:[%s0 + $0x20] sm:$0xff]
  %v24 = vld [vmem:[%s0 + $0x28] sm:$0xff]
  %v25 = vld [vmem:[%s0 + $0x30] sm:$0xff]
  %v26 = vld [vmem:[%s0 + $0x38] sm:$0xff]
  %v27 = vld [vmem:[%s0 + $0x40] sm:$0xff]
  %v28 = vld [vmem:[%s0 + $0x48] sm:$0xff]
  %v29 = vld [vmem:[%s0 + $0x50] sm:$0xff]
  %v30 = vld [vmem:[%s0 + $0x58] sm:$0xff]
  %v31 = vld [vmem:[%s0 + $0x60] sm:$0xff]
  %v32 = vld [vmem:[%s0 + $0x68] sm:$0xff]
  %v33 = vld [vmem:[%s0 + $0x70] sm:$0xff]
  %v34 = vld [vmem:[%s0 + $0x78] sm:$0xff]
  %v35 = vld [vmem:[%s0 + $0x80] sm:$0xff]
  %v36 = vld [vmem:[%s0 + $0x88] sm:$0xff]
  %v37 = vld [vmem:[%s0 + $0x90] sm:$0xff]
  %v38 = vld [vmem:[%s0 + $0x98] sm:$0xff]
  %v39 = vld [vmem:[%s0 + $0xa0] sm:$0xff]
  %v40 = vld [vmem:[%s0 + $0xa8] sm:$0xff]
  %v41 = vld [vmem:[%s0 + $0xb0] sm:$0xff]
  %v42 = vld [vmem:[%s0 + $0xb8] sm:$0xff]
  %v43 = vld [vmem:[%s0 + $0xc0] sm:$0xff]
  %v44 = vld [vmem:[%s0 + $0xc8] sm:$0xff]
  %v45 = vld [vmem:[%s0 + $0xd0] sm:$0xff]
  %v46 = vld [vmem:[%s0 + $0xd8] sm:$0xff]
  %v47 = vld [vmem:[%s0 + $0xe0] sm:$0xff]
  %v48 = vld [vmem:[%s0 + $0xe8] sm:$0xff]
  %v49 = vld [vmem:[%s0 + $0xf0] sm:$0xff]
  %v50 = vld [vmem:[%s0 + $0xf8] sm:$0xff]
  %v51 = vld [vmem:[%s0 + $0x100] sm:$0xff]
  %v52 = vld [vmem:[%s0 + $0x108] sm:$0xff]
  %v53 = vld [vmem:[%s0 + $0x110] sm:$0xff]
  %v54 = vld [vmem:[%s0 + $0x118] sm:$0xff]
  %v55 = vld [vmem:[%s0 + $0x120] sm:$0xff]
  %v56 = vld [vmem:[%s0 + $0x128] sm:$0xff]
  %v57 = vld [vmem:[%s0 + $0x130] sm:$0xff]
  %v58 = vld [vmem:[%s0 + $0x138] sm:$0xff]
  %v59 = vld [vmem:[%s0 + $0x140] sm:$0xff]
  %v60 = vld [vmem:[%s0 + $0x148] sm:$0xff]
  %v61 = vld [vmem:[%s0 + $0x150] sm:$0xff]
  %v62 = vld [vmem:[%s0 + $0x158] sm:$0xff]
  %v63 = vld [vmem:[%s0 + $0x160] sm:$0xff]
  %v64 = vld [vmem:[%s0 + $0x168] sm:$0xff]
  %v65 = vld [vmem:[%s0 + $0x170] sm:$0xff]
  %v66 = vld [vmem:[%s0 + $0x178] sm:$0xff]
  %v67 = vld [vmem:[%s0 + $0x180] sm:$0xff]
  %v68 = vld [vmem:[%s0 + $0x188] sm:$0xff]
  %v69 = vld [vmem:[%s0 + $0x190] sm:$0xff]
  %v70 = vld [vmem:[%s0 + $0x198] sm:$0xff]
  %v71 = vld [vmem:[%s0 + $0x1a0] sm:$0xff]
  %v72 = vld [vmem:[%s0 + $0x1a8] sm:$0xff]
  %v73 = vld [vmem:[%s0 + $0x1b0] sm:$0xff]
  %v74 = vld [vmem:[%s0 + $0x1b8] sm:$0xff]
  %v75 = vld [vmem:[%s0 + $0x1c0] sm:$0xff]
  %v76 = vld [vmem:[%s0 + $0x1c8] sm:$0xff]
  %v77 = vld [vmem:[%s0 + $0x1d0] sm:$0xff]
  %v78 = vld [vmem:[%s0 + $0x1d8] sm:$0xff]
  %v79 = vld [vmem:[%s0 + $0x1e0] sm:$0xff]
  %v80 = vld [vmem:[%s0 + $0x1e8] sm:$0xff]
  %v81 = vld [vmem:[%s0 + $0x1f0] sm:$0xff]
  %v82 = vld [vmem:[%s0 + $0x1f8] sm:$0xff]
  %v83 = vld [vmem:[%s1] sm:$0x1]
  %v85 = vperm.slane %v83, 0
  %v87 = vmul.f32 %v19, %v85
  %v88 = vmul.f32 %v20, %v85
  %v89 = vmul.f32 %v21, %v85
  %v90 = vmul.f32 %v22, %v85
  %v91 = vmul.f32 %v23, %v85
  %v92 = vmul.f32 %v24, %v85
  %v93 = vmul.f32 %v25, %v85
  %v94 = vmul.f32 %v26, %v85
  %v95 = vmul.f32 %v27, %v85
  %v96 = vmul.f32 %v28, %v85
  %v97 = vmul.f32 %v29, %v85
  %v98 = vmul.f32 %v30, %v85
  %v99 = vmul.f32 %v31, %v85
  %v100 = vmul.f32 %v32, %v85
  %v101 = vmul.f32 %v33, %v85
  %v102 = vmul.f32 %v34, %v85
  %v103 = vmul.f32 %v35, %v85
  %v104 = vmul.f32 %v36, %v85
  %v105 = vmul.f32 %v37, %v85
  %v106 = vmul.f32 %v38, %v85
  %v107 = vmul.f32 %v39, %v85
  %v108 = vmul.f32 %v40, %v85
  %v109 = vmul.f32 %v41, %v85
  %v110 = vmul.f32 %v42, %v85
  %v111 = vmul.f32 %v43, %v85
  %v112 = vmul.f32 %v44, %v85
  %v113 = vmul.f32 %v45, %v85
  %v114 = vmul.f32 %v46, %v85
  %v115 = vmul.f32 %v47, %v85
  %v116 = vmul.f32 %v48, %v85
  %v117 = vmul.f32 %v49, %v85
  %v118 = vmul.f32 %v50, %v85
  %v119 = vmul.f32 %v51, %v85
  %v120 = vmul.f32 %v52, %v85
  %v121 = vmul.f32 %v53, %v85
  %v122 = vmul.f32 %v54, %v85
  %v123 = vmul.f32 %v55, %v85
  %v124 = vmul.f32 %v56, %v85
  %v125 = vmul.f32 %v57, %v85
  %v126 = vmul.f32 %v58, %v85
  %v127 = vmul.f32 %v59, %v85
  %v128 = vmul.f32 %v60, %v85
  %v129 = vmul.f32 %v61, %v85
  %v130 = vmul.f32 %v62, %v85
  %v131 = vmul.f32 %v63, %v85
  %v132 = vmul.f32 %v64, %v85
  %v133 = vmul.f32 %v65, %v85
  %v134 = vmul.f32 %v66, %v85
  %v135 = vmul.f32 %v67, %v85
  %v136 = vmul.f32 %v68, %v85
  %v137 = vmul.f32 %v69, %v85
  %v138 = vmul.f32 %v70, %v85
  %v139 = vmul.f32 %v71, %v85
  %v140 = vmul.f32 %v72, %v85
  %v141 = vmul.f32 %v73, %v85
  %v142 = vmul.f32 %v74, %v85
  %v143 = vmul.f32 %v75, %v85
  %v144 = vmul.f32 %v76, %v85
  %v145 = vmul.f32 %v77, %v85
  %v146 = vmul.f32 %v78, %v85
  %v147 = vmul.f32 %v79, %v85
  %v148 = vmul.f32 %v80, %v85
  %v149 = vmul.f32 %v81, %v85
  %v150 = vmul.f32 %v82, %v85
  %v151 = vld [vmem:[%s2] sm:$0x1]
  %v153 = vperm.slane %v151, 0
  %v155 = vadd.f32 %v87, %v153
  %v156 = vadd.f32 %v88, %v153
  %v157 = vadd.f32 %v89, %v153
  %v158 = vadd.f32 %v90, %v153
  %v159 = vadd.f32 %v91, %v153
  %v160 = vadd.f32 %v92, %v153
  %v161 = vadd.f32 %v93, %v153
  %v162 = vadd.f32 %v94, %v153
  %v163 = vadd.f32 %v95, %v153
  %v164 = vadd.f32 %v96, %v153
  %v165 = vadd.f32 %v97, %v153
  %v166 = vadd.f32 %v98, %v153
  %v167 = vadd.f32 %v99, %v153
  %v168 = vadd.f32 %v100, %v153
  %v169 = vadd.f32 %v101, %v153
  %v170 = vadd.f32 %v102, %v153
  %v171 = vadd.f32 %v103, %v153
  %v172 = vadd.f32 %v104, %v153
  %v173 = vadd.f32 %v105, %v153
  %v174 = vadd.f32 %v106, %v153
  %v175 = vadd.f32 %v107, %v153
  %v176 = vadd.f32 %v108, %v153
  %v177 = vadd.f32 %v109, %v153
  %v178 = vadd.f32 %v110, %v153
  %v179 = vadd.f32 %v111, %v153
  %v180 = vadd.f32 %v112, %v153
  %v181 = vadd.f32 %v113, %v153
  %v182 = vadd.f32 %v114, %v153
  %v183 = vadd.f32 %v115, %v153
  %v184 = vadd.f32 %v116, %v153
  %v185 = vadd.f32 %v117, %v153
  %v186 = vadd.f32 %v118, %v153
  %v187 = vadd.f32 %v119, %v153
  %v188 = vadd.f32 %v120, %v153
  %v189 = vadd.f32 %v121, %v153
  %v190 = vadd.f32 %v122, %v153
  %v191 = vadd.f32 %v123, %v153
  %v192 = vadd.f32 %v124, %v153
  %v193 = vadd.f32 %v125, %v153
  %v194 = vadd.f32 %v126, %v153
  %v195 = vadd.f32 %v127, %v153
  %v196 = vadd.f32 %v128, %v153
  %v197 = vadd.f32 %v129, %v153
  %v198 = vadd.f32 %v130, %v153
  %v199 = vadd.f32 %v131, %v153
  %v200 = vadd.f32 %v132, %v153
  %v201 = vadd.f32 %v133, %v153
  %v202 = vadd.f32 %v134, %v153
  %v203 = vadd.f32 %v135, %v153
  %v204 = vadd.f32 %v136, %v153
  %v205 = vadd.f32 %v137, %v153
  %v206 = vadd.f32 %v138, %v153
  %v207 = vadd.f32 %v139, %v153
  %v208 = vadd.f32 %v140, %v153
  %v209 = vadd.f32 %v141, %v153
  %v210 = vadd.f32 %v142, %v153
  %v211 = vadd.f32 %v143, %v153
  %v212 = vadd.f32 %v144, %v153
  %v213 = vadd.f32 %v145, %v153
  %v214 = vadd.f32 %v146, %v153
  %v215 = vadd.f32 %v147, %v153
  %v216 = vadd.f32 %v148, %v153
  %v217 = vadd.f32 %v149, %v153
  %v218 = vadd.f32 %v150, %v153
  %v219 = vmax.f32 %v155, 0.0
  %v220 = vmax.f32 %v156, 0.0
  %v221 = vmax.f32 %v157, 0.0
  %v222 = vmax.f32 %v158, 0.0
  %v223 = vmax.f32 %v159, 0.0
  %v224 = vmax.f32 %v160, 0.0
  %v225 = vmax.f32 %v161, 0.0
  %v226 = vmax.f32 %v162, 0.0
  %v227 = vmax.f32 %v163, 0.0
  %v228 = vmax.f32 %v164, 0.0
  %v229 = vmax.f32 %v165, 0.0
  %v230 = vmax.f32 %v166, 0.0
  %v231 = vmax.f32 %v167, 0.0
  %v232 = vmax.f32 %v168, 0.0
  %v233 = vmax.f32 %v169, 0.0
  %v234 = vmax.f32 %v170, 0.0
  %v235 = vmax.f32 %v171, 0.0
  %v236 = vmax.f32 %v172, 0.0
  %v237 = vmax.f32 %v173, 0.0
  %v238 = vmax.f32 %v174, 0.0
  %v239 = vmax.f32 %v175, 0.0
  %v240 = vmax.f32 %v176, 0.0
  %v241 = vmax.f32 %v177, 0.0
  %v242 = vmax.f32 %v178, 0.0
  %v243 = vmax.f32 %v179, 0.0
  %v244 = vmax.f32 %v180, 0.0
  %v245 = vmax.f32 %v181, 0.0
  %v246 = vmax.f32 %v182, 0.0
  %v247 = vmax.f32 %v183, 0.0
  %v248 = vmax.f32 %v184, 0.0
  %v249 = vmax.f32 %v185, 0.0
  %v250 = vmax.f32 %v186, 0.0
  %v251 = vmax.f32 %v187, 0.0
  %v252 = vmax.f32 %v188, 0.0
  %v253 = vmax.f32 %v189, 0.0
  %v254 = vmax.f32 %v190, 0.0
  %v255 = vmax.f32 %v191, 0.0
  %v256 = vmax.f32 %v192, 0.0
  %v257 = vmax.f32 %v193, 0.0
  %v258 = vmax.f32 %v194, 0.0
  %v259 = vmax.f32 %v195, 0.0
  %v260 = vmax.f32 %v196, 0.0
  %v261 = vmax.f32 %v197, 0.0
  %v262 = vmax.f32 %v198, 0.0
  %v263 = vmax.f32 %v199, 0.0
  %v264 = vmax.f32 %v200, 0.0
  %v265 = vmax.f32 %v201, 0.0
  %v266 = vmax.f32 %v202, 0.0
  %v267 = vmax.f32 %v203, 0.0
  %v268 = vmax.f32 %v204, 0.0
  %v269 = vmax.f32 %v205, 0.0
  %v270 = vmax.f32 %v206, 0.0
  %v271 = vmax.f32 %v207, 0.0
  %v272 = vmax.f32 %v208, 0.0
  %v273 = vmax.f32 %v209, 0.0
  %v274 = vmax.f32 %v210, 0.0
  %v275 = vmax.f32 %v211, 0.0
  %v276 = vmax.f32 %v212, 0.0
  %v277 = vmax.f32 %v213, 0.0
  %v278 = vmax.f32 %v214, 0.0
  %v279 = vmax.f32 %v215, 0.0
  %v280 = vmax.f32 %v216, 0.0
  %v281 = vmax.f32 %v217, 0.0
  %v282 = vmax.f32 %v218, 0.0
  %v283 = vld [vmem:[%s3] sm:$0xff]
  %v284 = vld [vmem:[%s3 + $0x8] sm:$0xff]
  %v285 = vld [vmem:[%s3 + $0x10] sm:$0xff]
  %v286 = vld [vmem:[%s3 + $0x18] sm:$0xff]
  %v287 = vld [vmem:[%s3 + $0x20] sm:$0xff]
  %v288 = vld [vmem:[%s3 + $0x28] sm:$0xff]
  %v289 = vld [vmem:[%s3 + $0x30] sm:$0xff]
  %v290 = vld [vmem:[%s3 + $0x38] sm:$0xff]
  %v291 = vld [vmem:[%s3 + $0x40] sm:$0xff]
  %v292 = vld [vmem:[%s3 + $0x48] sm:$0xff]
  %v293 = vld [vmem:[%s3 + $0x50] sm:$0xff]
  %v294 = vld [vmem:[%s3 + $0x58] sm:$0xff]
  %v295 = vld [vmem:[%s3 + $0x60] sm:$0xff]
  %v296 = vld [vmem:[%s3 + $0x68] sm:$0xff]
  %v297 = vld [vmem:[%s3 + $0x70] sm:$0xff]
  %v298 = vld [vmem:[%s3 + $0x78] sm:$0xff]
  %299 = vmatpush.msra.mxu0 %v298
  %300 = vmatpush.msra.mxu0 %v297
  %301 = vmatpush.msra.mxu0 %v296
  %302 = vmatpush.msra.mxu0 %v295
  %303 = vmatpush.msra.mxu0 %v294
  %304 = vmatpush.msra.mxu0 %v293
  %305 = vmatpush.msra.mxu0 %v292
  %306 = vmatpush.msra.mxu0 %v291
  %307 = vmatpush.msra.mxu0 %v290
  %308 = vmatpush.msra.mxu0 %v289
  %309 = vmatpush.msra.mxu0 %v288
  %310 = vmatpush.msra.mxu0 %v287
  %311 = vmatpush.msra.mxu0 %v286
  %312 = vmatpush.msra.mxu0 %v285
  %313 = vmatpush.msra.mxu0 %v284
  %314 = vmatpush.msra.mxu0 %v283
  %315 = vmatmul.f32.gmra.mxu0 %v219
  %v316 = vpop.f32.mrf.mxu0
  %v317 = vadd.f32 0.0, %v316
  %318 = vmatmul.f32.gmra.mxu0 %v220
  %v319 = vpop.f32.mrf.mxu0
  %v320 = vadd.f32 0.0, %v319
  %321 = vmatmul.f32.gmra.mxu0 %v221
  %v322 = vpop.f32.mrf.mxu0
  %v323 = vadd.f32 0.0, %v322
  %324 = vmatmul.f32.gmra.mxu0 %v222
  %v325 = vpop.f32.mrf.mxu0
  %v326 = vadd.f32 0.0, %v325
  %327 = vmatmul.f32.gmra.mxu0 %v223
  %v328 = vpop.f32.mrf.mxu0
  %v329 = vadd.f32 0.0, %v328
  %330 = vmatmul.f32.gmra.mxu0 %v224
  %v331 = vpop.f32.mrf.mxu0
  %v332 = vadd.f32 0.0, %v331
  %333 = vmatmul.f32.gmra.mxu0 %v225
  %v334 = vpop.f32.mrf.mxu0
  %v335 = vadd.f32 0.0, %v334
  %336 = vmatmul.f32.gmra.mxu0 %v226
  %v337 = vpop.f32.mrf.mxu0
  %v338 = vadd.f32 0.0, %v337
  %339 = vmatmul.f32.gmra.mxu0 %v227
  %v340 = vpop.f32.mrf.mxu0
  %v341 = vadd.f32 0.0, %v340
  %342 = vmatmul.f32.gmra.mxu0 %v228
  %v343 = vpop.f32.mrf.mxu0
  %v344 = vadd.f32 0.0, %v343
  %345 = vmatmul.f32.gmra.mxu0 %v229
  %v346 = vpop.f32.mrf.mxu0
  %v347 = vadd.f32 0.0, %v346
  %348 = vmatmul.f32.gmra.mxu0 %v230
  %v349 = vpop.f32.mrf.mxu0
  %v350 = vadd.f32 0.0, %v349
  %351 = vmatmul.f32.gmra.mxu0 %v231
  %v352 = vpop.f32.mrf.mxu0
  %v353 = vadd.f32 0.0, %v352
  %354 = vmatmul.f32.gmra.mxu0 %v232
  %v355 = vpop.f32.mrf.mxu0
  %v356 = vadd.f32 0.0, %v355
  %357 = vmatmul.f32.gmra.mxu0 %v233
  %v358 = vpop.f32.mrf.mxu0
  %v359 = vadd.f32 0.0, %v358
  %360 = vmatmul.f32.gmra.mxu0 %v234
  %v361 = vpop.f32.mrf.mxu0
  %v362 = vadd.f32 0.0, %v361
  %363 = vmatmul.f32.gmra.mxu0 %v235
  %v364 = vpop.f32.mrf.mxu0
  %v365 = vadd.f32 0.0, %v364
  %366 = vmatmul.f32.gmra.mxu0 %v236
  %v367 = vpop.f32.mrf.mxu0
  %v368 = vadd.f32 0.0, %v367
  %369 = vmatmul.f32.gmra.mxu0 %v237
  %v370 = vpop.f32.mrf.mxu0
  %v371 = vadd.f32 0.0, %v370
  %372 = vmatmul.f32.gmra.mxu0 %v238
  %v373 = vpop.f32.mrf.mxu0
  %v374 = vadd.f32 0.0, %v373
  %375 = vmatmul.f32.gmra.mxu0 %v239
  %v376 = vpop.f32.mrf.mxu0
  %v377 = vadd.f32 0.0, %v376
  %378 = vmatmul.f32.gmra.mxu0 %v240
  %v379 = vpop.f32.mrf.mxu0
  %v380 = vadd.f32 0.0, %v379
  %381 = vmatmul.f32.gmra.mxu0 %v241
  %v382 = vpop.f32.mrf.mxu0
  %v383 = vadd.f32 0.0, %v382
  %384 = vmatmul.f32.gmra.mxu0 %v242
  %v385 = vpop.f32.mrf.mxu0
  %v386 = vadd.f32 0.0, %v385
  %387 = vmatmul.f32.gmra.mxu0 %v243
  %v388 = vpop.f32.mrf.mxu0
  %v389 = vadd.f32 0.0, %v388
  %390 = vmatmul.f32.gmra.mxu0 %v244
  %v391 = vpop.f32.mrf.mxu0
  %v392 = vadd.f32 0.0, %v391
  %393 = vmatmul.f32.gmra.mxu0 %v245
  %v394 = vpop.f32.mrf.mxu0
  %v395 = vadd.f32 0.0, %v394
  %396 = vmatmul.f32.gmra.mxu0 %v246
  %v397 = vpop.f32.mrf.mxu0
  %v398 = vadd.f32 0.0, %v397
  %399 = vmatmul.f32.gmra.mxu0 %v247
  %v400 = vpop.f32.mrf.mxu0
  %v401 = vadd.f32 0.0, %v400
  %402 = vmatmul.f32.gmra.mxu0 %v248
  %v403 = vpop.f32.mrf.mxu0
  %v404 = vadd.f32 0.0, %v403
  %405 = vmatmul.f32.gmra.mxu0 %v249
  %v406 = vpop.f32.mrf.mxu0
  %v407 = vadd.f32 0.0, %v406
  %408 = vmatmul.f32.gmra.mxu0 %v250
  %v409 = vpop.f32.mrf.mxu0
  %v410 = vadd.f32 0.0, %v409
  %411 = vmatmul.f32.gmra.mxu0 %v251
  %v412 = vpop.f32.mrf.mxu0
  %v413 = vadd.f32 0.0, %v412
  %414 = vmatmul.f32.gmra.mxu0 %v252
  %v415 = vpop.f32.mrf.mxu0
  %v416 = vadd.f32 0.0, %v415
  %417 = vmatmul.f32.gmra.mxu0 %v253
  %v418 = vpop.f32.mrf.mxu0
  %v419 = vadd.f32 0.0, %v418
  %420 = vmatmul.f32.gmra.mxu0 %v254
  %v421 = vpop.f32.mrf.mxu0
  %v422 = vadd.f32 0.0, %v421
  %423 = vmatmul.f32.gmra.mxu0 %v255
  %v424 = vpop.f32.mrf.mxu0
  %v425 = vadd.f32 0.0, %v424
  %426 = vmatmul.f32.gmra.mxu0 %v256
  %v427 = vpop.f32.mrf.mxu0
  %v428 = vadd.f32 0.0, %v427
  %429 = vmatmul.f32.gmra.mxu0 %v257
  %v430 = vpop.f32.mrf.mxu0
  %v431 = vadd.f32 0.0, %v430
  %432 = vmatmul.f32.gmra.mxu0 %v258
  %v433 = vpop.f32.mrf.mxu0
  %v434 = vadd.f32 0.0, %v433
  %435 = vmatmul.f32.gmra.mxu0 %v259
  %v436 = vpop.f32.mrf.mxu0
  %v437 = vadd.f32 0.0, %v436
  %438 = vmatmul.f32.gmra.mxu0 %v260
  %v439 = vpop.f32.mrf.mxu0
  %v440 = vadd.f32 0.0, %v439
  %441 = vmatmul.f32.gmra.mxu0 %v261
  %v442 = vpop.f32.mrf.mxu0
  %v443 = vadd.f32 0.0, %v442
  %444 = vmatmul.f32.gmra.mxu0 %v262
  %v445 = vpop.f32.mrf.mxu0
  %v446 = vadd.f32 0.0, %v445
  %447 = vmatmul.f32.gmra.mxu0 %v263
  %v448 = vpop.f32.mrf.mxu0
  %v449 = vadd.f32 0.0, %v448
  %450 = vmatmul.f32.gmra.mxu0 %v264
  %v451 = vpop.f32.mrf.mxu0
  %v452 = vadd.f32 0.0, %v451
  %453 = vmatmul.f32.gmra.mxu0 %v265
  %v454 = vpop.f32.mrf.mxu0
  %v455 = vadd.f32 0.0, %v454
  %456 = vmatmul.f32.gmra.mxu0 %v266
  %v457 = vpop.f32.mrf.mxu0
  %v458 = vadd.f32 0.0, %v457
  %459 = vmatmul.f32.gmra.mxu0 %v267
  %v460 = vpop.f32.mrf.mxu0
  %v461 = vadd.f32 0.0, %v460
  %462 = vmatmul.f32.gmra.mxu0 %v268
  %v463 = vpop.f32.mrf.mxu0
  %v464 = vadd.f32 0.0, %v463
  %465 = vmatmul.f32.gmra.mxu0 %v269
  %v466 = vpop.f32.mrf.mxu0
  %v467 = vadd.f32 0.0, %v466
  %468 = vmatmul.f32.gmra.mxu0 %v270
  %v469 = vpop.f32.mrf.mxu0
  %v470 = vadd.f32 0.0, %v469
  %471 = vmatmul.f32.gmra.mxu0 %v271
  %v472 = vpop.f32.mrf.mxu0
  %v473 = vadd.f32 0.0, %v472
  %474 = vmatmul.f32.gmra.mxu0 %v272
  %v475 = vpop.f32.mrf.mxu0
  %v476 = vadd.f32 0.0, %v475
  %477 = vmatmul.f32.gmra.mxu0 %v273
  %v478 = vpop.f32.mrf.mxu0
  %v479 = vadd.f32 0.0, %v478
  %480 = vmatmul.f32.gmra.mxu0 %v274
  %v481 = vpop.f32.mrf.mxu0
  %v482 = vadd.f32 0.0, %v481
  %483 = vmatmul.f32.gmra.mxu0 %v275
  %v484 = vpop.f32.mrf.mxu0
  %v485 = vadd.f32 0.0, %v484
  %486 = vmatmul.f32.gmra.mxu0 %v276
  %v487 = vpop.f32.mrf.mxu0
  %v488 = vadd.f32 0.0, %v487
  %489 = vmatmul.f32.gmra.mxu0 %v277
  %v490 = vpop.f32.mrf.mxu0
  %v491 = vadd.f32 0.0, %v490
  %492 = vmatmul.f32.gmra.mxu0 %v278
  %v493 = vpop.f32.mrf.mxu0
  %v494 = vadd.f32 0.0, %v493
  %495 = vmatmul.f32.gmra.mxu0 %v279
  %v496 = vpop.f32.mrf.mxu0
  %v497 = vadd.f32 0.0, %v496
  %498 = vmatmul.f32.gmra.mxu0 %v280
  %v499 = vpop.f32.mrf.mxu0
  %v500 = vadd.f32 0.0, %v499
  %501 = vmatmul.f32.gmra.mxu0 %v281
  %v502 = vpop.f32.mrf.mxu0
  %v503 = vadd.f32 0.0, %v502
  %504 = vmatmul.f32.gmra.mxu0 %v282
  %v505 = vpop.f32.mrf.mxu0
  %v506 = vadd.f32 0.0, %v505
  %507 = vdwg.mxu0
  %508 = vst [vmem:[%s4] sm:$0xff] %v317
  %509 = vst [vmem:[%s4 + $0x8] sm:$0xff] %v320
  %510 = vst [vmem:[%s4 + $0x10] sm:$0xff] %v323
  %511 = vst [vmem:[%s4 + $0x18] sm:$0xff] %v326
  %512 = vst [vmem:[%s4 + $0x20] sm:$0xff] %v329
  %513 = vst [vmem:[%s4 + $0x28] sm:$0xff] %v332
  %514 = vst [vmem:[%s4 + $0x30] sm:$0xff] %v335
  %515 = vst [vmem:[%s4 + $0x38] sm:$0xff] %v338
  %516 = vst [vmem:[%s4 + $0x40] sm:$0xff] %v341
  %517 = vst [vmem:[%s4 + $0x48] sm:$0xff] %v344
  %518 = vst [vmem:[%s4 + $0x50] sm:$0xff] %v347
  %519 = vst [vmem:[%s4 + $0x58] sm:$0xff] %v350
  %520 = vst [vmem:[%s4 + $0x60] sm:$0xff] %v353
  %521 = vst [vmem:[%s4 + $0x68] sm:$0xff] %v356
  %522 = vst [vmem:[%s4 + $0x70] sm:$0xff] %v359
  %523 = vst [vmem:[%s4 + $0x78] sm:$0xff] %v362
  %524 = vst [vmem:[%s4 + $0x80] sm:$0xff] %v365
  %525 = vst [vmem:[%s4 + $0x88] sm:$0xff] %v368
  %526 = vst [vmem:[%s4 + $0x90] sm:$0xff] %v371
  %527 = vst [vmem:[%s4 + $0x98] sm:$0xff] %v374
  %528 = vst [vmem:[%s4 + $0xa0] sm:$0xff] %v377
  %529 = vst [vmem:[%s4 + $0xa8] sm:$0xff] %v380
  %530 = vst [vmem:[%s4 + $0xb0] sm:$0xff] %v383
  %531 = vst [vmem:[%s4 + $0xb8] sm:$0xff] %v386
  %532 = vst [vmem:[%s4 + $0xc0] sm:$0xff] %v389
  %533 = vst [vmem:[%s4 + $0xc8] sm:$0xff] %v392
  %534 = vst [vmem:[%s4 + $0xd0] sm:$0xff] %v395
  %535 = vst [vmem:[%s4 + $0xd8] sm:$0xff] %v398
  %536 = vst [vmem:[%s4 + $0xe0] sm:$0xff] %v401
  %537 = vst [vmem:[%s4 + $0xe8] sm:$0xff] %v404
  %538 = vst [vmem:[%s4 + $0xf0] sm:$0xff] %v407
  %539 = vst [vmem:[%s4 + $0xf8] sm:$0xff] %v410
  %540 = vst [vmem:[%s4 + $0x100] sm:$0xff] %v413
  %541 = vst [vmem:[%s4 + $0x108] sm:$0xff] %v416
  %542 = vst [vmem:[%s4 + $0x110] sm:$0xff] %v419
  %543 = vst [vmem:[%s4 + $0x118] sm:$0xff] %v422
  %544 = vst [vmem:[%s4 + $0x120] sm:$0xff] %v425
  %545 = vst [vmem:[%s4 + $0x128] sm:$0xff] %v428
  %546 = vst [vmem:[%s4 + $0x130] sm:$0xff] %v431
  %547 = vst [vmem:[%s4 + $0x138] sm:$0xff] %v434
  %548 = vst [vmem:[%s4 + $0x140] sm:$0xff] %v437
  %549 = vst [vmem:[%s4 + $0x148] sm:$0xff] %v440
  %550 = vst [vmem:[%s4 + $0x150] sm:$0xff] %v443
  %551 = vst [vmem:[%s4 + $0x158] sm:$0xff] %v446
  %552 = vst [vmem:[%s4 + $0x160] sm:$0xff] %v449
  %553 = vst [vmem:[%s4 + $0x168] sm:$0xff] %v452
  %554 = vst [vmem:[%s4 + $0x170] sm:$0xff] %v455
  %555 = vst [vmem:[%s4 + $0x178] sm:$0xff] %v458
  %556 = vst [vmem:[%s4 + $0x180] sm:$0xff] %v461
  %557 = vst [vmem:[%s4 + $0x188] sm:$0xff] %v464
  %558 = vst [vmem:[%s4 + $0x190] sm:$0xff] %v467
  %559 = vst [vmem:[%s4 + $0x198] sm:$0xff] %v470
  %560 = vst [vmem:[%s4 + $0x1a0] sm:$0xff] %v473
  %561 = vst [vmem:[%s4 + $0x1a8] sm:$0xff] %v476
  %562 = vst [vmem:[%s4 + $0x1b0] sm:$0xff] %v479
  %563 = vst [vmem:[%s4 + $0x1b8] sm:$0xff] %v482
  %564 = vst [vmem:[%s4 + $0x1c0] sm:$0xff] %v485
  %565 = vst [vmem:[%s4 + $0x1c8] sm:$0xff] %v488
  %566 = vst [vmem:[%s4 + $0x1d0] sm:$0xff] %v491
  %567 = vst [vmem:[%s4 + $0x1d8] sm:$0xff] %v494
  %568 = vst [vmem:[%s4 + $0x1e0] sm:$0xff] %v497
  %569 = vst [vmem:[%s4 + $0x1e8] sm:$0xff] %v500
  %570 = vst [vmem:[%s4 + $0x1f0] sm:$0xff] %v503
  %571 = vst [vmem:[%s4 + $0x1f8] sm:$0xff] %v506
  %v572 = vadd.f32 %v317, %v320
  %v573 = vadd.f32 %v572, %v323
  %v574 = vadd.f32 %v573, %v326
  %v575 = vadd.f32 %v574, %v329
  %v576 = vadd.f32 %v575, %v332
  %v577 = vadd.f32 %v576, %v335
  %v578 = vadd.f32 %v577, %v338
  %v579 = vadd.f32 %v578, %v341
  %v580 = vadd.f32 %v579, %v344
  %v581 = vadd.f32 %v580, %v347
  %v582 = vadd.f32 %v581, %v350
  %v583 = vadd.f32 %v582, %v353
  %v584 = vadd.f32 %v583, %v356
  %v585 = vadd.f32 %v584, %v359
  %v586 = vadd.f32 %v585, %v362
  %v587 = vadd.f32 %v586, %v365
  %v588 = vadd.f32 %v587, %v368
  %v589 = vadd.f32 %v588, %v371
  %v590 = vadd.f32 %v589, %v374
  %v591 = vadd.f32 %v590, %v377
  %v592 = vadd.f32 %v591, %v380
  %v593 = vadd.f32 %v592, %v383
  %v594 = vadd.f32 %v593, %v386
  %v595 = vadd.f32 %v594, %v389
  %v596 = vadd.f32 %v595, %v392
  %v597 = vadd.f32 %v596, %v395
  %v598 = vadd.f32 %v597, %v398
  %v599 = vadd.f32 %v598, %v401
  %v600 = vadd.f32 %v599, %v404
  %v601 = vadd.f32 %v600, %v407
  %v602 = vadd.f32 %v601, %v410
  %v603 = vadd.f32 %v602, %v413
  %v604 = vadd.f32 %v603, %v416
  %v605 = vadd.f32 %v604, %v419
  %v606 = vadd.f32 %v605, %v422
  %v607 = vadd.f32 %v606, %v425
  %v608 = vadd.f32 %v607, %v428
  %v609 = vadd.f32 %v608, %v431
  %v610 = vadd.f32 %v609, %v434
  %v611 = vadd.f32 %v610, %v437
  %v612 = vadd.f32 %v611, %v440
  %v613 = vadd.f32 %v612, %v443
  %v614 = vadd.f32 %v613, %v446
  %v615 = vadd.f32 %v614, %v449
  %v616 = vadd.f32 %v615, %v452
  %v617 = vadd.f32 %v616, %v455
  %v618 = vadd.f32 %v617, %v458
  %v619 = vadd.f32 %v618, %v461
  %v620 = vadd.f32 %v619, %v464
  %v621 = vadd.f32 %v620, %v467
  %v622 = vadd.f32 %v621, %v470
  %v623 = vadd.f32 %v622, %v473
  %v624 = vadd.f32 %v623, %v476
  %v625 = vadd.f32 %v624, %v479
  %v626 = vadd.f32 %v625, %v482
  %v627 = vadd.f32 %v626, %v485
  %v628 = vadd.f32 %v627, %v488
  %v629 = vadd.f32 %v628, %v491
  %v630 = vadd.f32 %v629, %v494
  %v631 = vadd.f32 %v630, %v497
  %v632 = vadd.f32 %v631, %v500
  %v633 = vadd.f32 %v632, %v503
  %v634 = vadd.f32 %v633, %v506
  %v635 = vrot.slane %v634, 4
  %v636 = vadd.f32 %v634, %v635
  %v637 = vrot.slane %v636, 2
  %v638 = vadd.f32 %v636, %v637
  %v639 = vrot.slane %v638, 1
  %v640 = vadd.f32 %v638, %v639
  %641 = vst [vmem:[%s5] sm:$0x1] %v640
  %v642 = vmul.f32 %v317, %v317
  %v643 = vmul.f32 %v320, %v320
  %v644 = vmul.f32 %v323, %v323
  %v645 = vmul.f32 %v326, %v326
  %v646 = vmul.f32 %v329, %v329
  %v647 = vmul.f32 %v332, %v332
  %v648 = vmul.f32 %v335, %v335
  %v649 = vmul.f32 %v338, %v338
  %v650 = vmul.f32 %v341, %v341
  %v651 = vmul.f32 %v344, %v344
  %v652 = vmul.f32 %v347, %v347
  %v653 = vmul.f32 %v350, %v350
  %v654 = vmul.f32 %v353, %v353
  %v655 = vmul.f32 %v356, %v356
  %v656 = vmul.f32 %v359, %v359
  %v657 = vmul.f32 %v362, %v362
  %v658 = vmul.f32 %v365, %v365
  %v659 = vmul.f32 %v368, %v368
  %v660 = vmul.f32 %v371, %v371
  %v661 = vmul.f32 %v374, %v374
  %v662 = vmul.f32 %v377, %v377
  %v663 = vmul.f32 %v380, %v380
  %v664 = vmul.f32 %v383, %v383
  %v665 = vmul.f32 %v386, %v386
  %v666 = vmul.f32 %v389, %v389
  %v667 = vmul.f32 %v392, %v392
  %v668 = vmul.f32 %v395, %v395
  %v669 = vmul.f32 %v398, %v398
  %v670 = vmul.f32 %v401, %v401
  %v671 = vmul.f32 %v404, %v404
  %v672 = vmul.f32 %v407, %v407
  %v673 = vmul.f32 %v410, %v410
  %v674 = vmul.f32 %v413, %v413
  %v675 = vmul.f32 %v416, %v416
  %v676 = vmul.f32 %v419, %v419
  %v677 = vmul.f32 %v422, %v422
  %v678 = vmul.f32 %v425, %v425
  %v679 = vmul.f32 %v428, %v428
  %v680 = vmul.f32 %v431, %v431
  %v681 = vmul.f32 %v434, %v434
  %v682 = vmul.f32 %v437, %v437
  %v683 = vmul.f32 %v440, %v440
  %v684 = vmul.f32 %v443, %v443
  %v685 = vmul.f32 %v446, %v446
  %v686 = vmul.f32 %v449, %v449
  %v687 = vmul.f32 %v452, %v452
  %v688 = vmul.f32 %v455, %v455
  %v689 = vmul.f32 %v458, %v458
  %v690 = vmul.f32 %v461, %v461
  %v691 = vmul.f32 %v464, %v464
  %v692 = vmul.f32 %v467, %v467
  %v693 = vmul.f32 %v470, %v470
  %v694 = vmul.f32 %v473, %v473
  %v695 = vmul.f32 %v476, %v476
  %v696 = vmul.f32 %v479, %v479
  %v697 = vmul.f32 %v482, %v482
  %v698 = vmul.f32 %v485, %v485
  %v699 = vmul.f32 %v488, %v488
  %v700 = vmul.f32 %v491, %v491
  %v701 = vmul.f32 %v494, %v494
  %v702 = vmul.f32 %v497, %v497
  %v703 = vmul.f32 %v500, %v500
  %v704 = vmul.f32 %v503, %v503
  %v705 = vmul.f32 %v506, %v506
  %v706 = vadd.f32 %v642, %v643
  %v707 = vadd.f32 %v706, %v644
  %v708 = vadd.f32 %v707, %v645
  %v709 = vadd.f32 %v708, %v646
  %v710 = vadd.f32 %v709, %v647
  %v711 = vadd.f32 %v710, %v648
  %v712 = vadd.f32 %v711, %v649
  %v713 = vadd.f32 %v712, %v650
  %v714 = vadd.f32 %v713, %v651
  %v715 = vadd.f32 %v714, %v652
  %v716 = vadd.f32 %v715, %v653
  %v717 = vadd.f32 %v716, %v654
  %v718 = vadd.f32 %v717, %v655
  %v719 = vadd.f32 %v718, %v656
  %v720 = vadd.f32 %v719, %v657
  %v721 = vadd.f32 %v720, %v658
  %v722 = vadd.f32 %v721, %v659
  %v723 = vadd.f32 %v722, %v660
  %v724 = vadd.f32 %v723, %v661
  %v725 = vadd.f32 %v724, %v662
  %v726 = vadd.f32 %v725, %v663
  %v727 = vadd.f32 %v726, %v664
  %v728 = vadd.f32 %v727, %v665
  %v729 = vadd.f32 %v728, %v666
  %v730 = vadd.f32 %v729, %v667
  %v731 = vadd.f32 %v730, %v668
  %v732 = vadd.f32 %v731, %v669
  %v733 = vadd.f32 %v732, %v670
  %v734 = vadd.f32 %v733, %v671
  %v735 = vadd.f32 %v734, %v672
  %v736 = vadd.f32 %v735, %v673
  %v737 = vadd.f32 %v736, %v674
  %v738 = vadd.f32 %v737, %v675
  %v739 = vadd.f32 %v738, %v676
  %v740 = vadd.f32 %v739, %v677
  %v741 = vadd.f32 %v740, %v678
  %v742 = vadd.f32 %v741, %v679
  %v743 = vadd.f32 %v742, %v680
  %v744 = vadd.f32 %v743, %v681
  %v745 = vadd.f32 %v744, %v682
  %v746 = vadd.f32 %v745, %v683
  %v747 = vadd.f32 %v746, %v684
  %v748 = vadd.f32 %v747, %v685
  %v749 = vadd.f32 %v748, %v686
  %v750 = vadd.f32 %v749, %v687
  %v751 = vadd.f32 %v750, %v688
  %v752 = vadd.f32 %v751, %v689
  %v753 = vadd.f32 %v752, %v690
  %v754 = vadd.f32 %v753, %v691
  %v755 = vadd.f32 %v754, %v692
  %v756 = vadd.f32 %v755, %v693
  %v757 = vadd.f32 %v756, %v694
  %v758 = vadd.f32 %v757, %v695
  %v759 = vadd.f32 %v758, %v696
  %v760 = vadd.f32 %v759, %v697
  %v761 = vadd.f32 %v760, %v698
  %v762 = vadd.f32 %v761, %v699
  %v763 = vadd.f32 %v762, %v700
  %v764 = vadd.f32 %v763, %v701
  %v765 = vadd.f32 %v764, %v702
  %v766 = vadd.f32 %v765, %v703
  %v767 = vadd.f32 %v766, %v704
  %v768 = vadd.f32 %v767, %v705
  %v769 = vrot.slane %v768, 4
  %v770 = vadd.f32 %v768, %v769
  %v771 = vrot.slane %v770, 2
  %v772 = vadd.f32 %v770, %v771
  %v773 = vrot.slane %v772, 1
  %v774 = vadd.f32 %v772, %v773
  %775 = vst [vmem:[%s5 + $0x1] sm:$0x1] %v774
  // Predicated region
  $region18: #{bottleneck_pallas.6} parent=0 // pred_check
    _
  $region19: #{bottleneck_pallas.6} parent=0 // pred_check_branch
    %777 = sbr.rel (0) target = $region21
  $region20: #{bottleneck_pallas.6} parent=0 // pred_region
    _
  $region21: #{bottleneck_pallas.6} parent=0 // pred_fallthru
    _
  // Predicated region
  $region22: #{bottleneck_pallas.6} parent=0 // pred_check
    _
  $region23: #{bottleneck_pallas.6} parent=0 // pred_check_branch
    %779 = sbr.rel (0) target = $region25
  $region24: #{bottleneck_pallas.6} parent=0 // pred_region
    _
  $region25: #{bottleneck_pallas.6} parent=0 // pred_fallthru
    _
  // Predicated region
  $region26: #{bottleneck_pallas.6} parent=0 // pred_check
    _
  $region27: #{bottleneck_pallas.6} parent=0 // pred_check_branch
    %781 = sbr.rel (0) target = $region29
  $region28: #{bottleneck_pallas.6} parent=0 // pred_region
    _
  $region29: #{bottleneck_pallas.6} parent=0 // pred_fallthru
    _
  // Predicated region
  $region30: #{bottleneck_pallas.6} parent=0 // pred_check
    _
  $region31: #{bottleneck_pallas.6} parent=0 // pred_check_branch
    %783 = sbr.rel (0) target = $region33
  $region32: #{bottleneck_pallas.6} parent=0 // pred_region
    _
  $region33: #{bottleneck_pallas.6} parent=0 // pred_fallthru
    _

// kernel: bottleneck_pallas.7
$region0: #{bottleneck_pallas.7}
  #allocation0 [shape = 'u32[]', space=smem, size = 0x4, offset = 0x4, fixed_abs, tag = 'smem constant byte address 0x4 - core index']
  #allocation1 [shape = 'u32[72,128]{1,0:T(1,128)}', space=vmem, size = 0x9000, scoped, tag = 'internal scratch']
  %s0 = inlined_call_operand.vmem [shape: f32[512,128], index: 0, kind: input, shape index: {}]
  %s1 = inlined_call_operand.vmem [shape: f32[512,128], index: 1, kind: input, shape index: {}]
  %s2 = inlined_call_operand.vmem [shape: f32[1,128], index: 2, kind: input, shape index: {}]
  %s3 = inlined_call_operand.vmem [shape: f32[1,128], index: 3, kind: input, shape index: {}]
  %s4 = inlined_call_operand.vmem [shape: f32[512,128], index: 4, kind: output, shape index: {}]
  %s5 = sld [smem:[#allocation0]]
  $region26: #{bottleneck_pallas.7} parent=0
    _
  %s7 = ssub.s32 1, %s5
  %s8 = scalar_select 0, %s7, %s5
  // Predicated region
  $region2: #{bottleneck_pallas.7} parent=0 // pred_check
    _
  $region3: #{bottleneck_pallas.7} parent=0 // pred_check_branch
    %10 = sbr.rel (0) target = $region5
  $region4: #{bottleneck_pallas.7} parent=0 // pred_region
    _
  $region5: #{bottleneck_pallas.7} parent=0 // pred_fallthru
    _
  // Predicated region
  $region6: #{bottleneck_pallas.7} parent=0 // pred_check
    _
  $region7: #{bottleneck_pallas.7} parent=0 // pred_check_branch
    %12 = sbr.rel (0) target = $region9
  $region8: #{bottleneck_pallas.7} parent=0 // pred_region
    _
  $region9: #{bottleneck_pallas.7} parent=0 // pred_fallthru
    _
  // Predicated region
  $region10: #{bottleneck_pallas.7} parent=0 // pred_check
    _
  $region11: #{bottleneck_pallas.7} parent=0 // pred_check_branch
    %14 = sbr.rel (0) target = $region13
  $region12: #{bottleneck_pallas.7} parent=0 // pred_region
    _
  $region13: #{bottleneck_pallas.7} parent=0 // pred_fallthru
    _
  // Predicated region
  $region14: #{bottleneck_pallas.7} parent=0 // pred_check
    _
  $region15: #{bottleneck_pallas.7} parent=0 // pred_check_branch
    %16 = sbr.rel (0) target = $region17
  $region16: #{bottleneck_pallas.7} parent=0 // pred_region
    _
  $region17: #{bottleneck_pallas.7} parent=0 // pred_fallthru
    _
  %v17 = vld [vmem:[%s0] sm:$0xff]
  %v18 = vld [vmem:[%s0 + $0x8] sm:$0xff]
  %v19 = vld [vmem:[%s0 + $0x10] sm:$0xff]
  %v20 = vld [vmem:[%s0 + $0x18] sm:$0xff]
  %v21 = vld [vmem:[%s0 + $0x20] sm:$0xff]
  %v22 = vld [vmem:[%s0 + $0x28] sm:$0xff]
  %v23 = vld [vmem:[%s0 + $0x30] sm:$0xff]
  %v24 = vld [vmem:[%s0 + $0x38] sm:$0xff]
  %v25 = vld [vmem:[%s0 + $0x40] sm:$0xff]
  %v26 = vld [vmem:[%s0 + $0x48] sm:$0xff]
  %v27 = vld [vmem:[%s0 + $0x50] sm:$0xff]
  %v28 = vld [vmem:[%s0 + $0x58] sm:$0xff]
  %v29 = vld [vmem:[%s0 + $0x60] sm:$0xff]
  %v30 = vld [vmem:[%s0 + $0x68] sm:$0xff]
  %v31 = vld [vmem:[%s0 + $0x70] sm:$0xff]
  %v32 = vld [vmem:[%s0 + $0x78] sm:$0xff]
  %v33 = vld [vmem:[%s0 + $0x80] sm:$0xff]
  %v34 = vld [vmem:[%s0 + $0x88] sm:$0xff]
  %v35 = vld [vmem:[%s0 + $0x90] sm:$0xff]
  %v36 = vld [vmem:[%s0 + $0x98] sm:$0xff]
  %v37 = vld [vmem:[%s0 + $0xa0] sm:$0xff]
  %v38 = vld [vmem:[%s0 + $0xa8] sm:$0xff]
  %v39 = vld [vmem:[%s0 + $0xb0] sm:$0xff]
  %v40 = vld [vmem:[%s0 + $0xb8] sm:$0xff]
  %v41 = vld [vmem:[%s0 + $0xc0] sm:$0xff]
  %v42 = vld [vmem:[%s0 + $0xc8] sm:$0xff]
  %v43 = vld [vmem:[%s0 + $0xd0] sm:$0xff]
  %v44 = vld [vmem:[%s0 + $0xd8] sm:$0xff]
  %v45 = vld [vmem:[%s0 + $0xe0] sm:$0xff]
  %v46 = vld [vmem:[%s0 + $0xe8] sm:$0xff]
  %v47 = vld [vmem:[%s0 + $0xf0] sm:$0xff]
  %v48 = vld [vmem:[%s0 + $0xf8] sm:$0xff]
  %v49 = vld [vmem:[%s0 + $0x100] sm:$0xff]
  %v50 = vld [vmem:[%s0 + $0x108] sm:$0xff]
  %v51 = vld [vmem:[%s0 + $0x110] sm:$0xff]
  %v52 = vld [vmem:[%s0 + $0x118] sm:$0xff]
  %v53 = vld [vmem:[%s0 + $0x120] sm:$0xff]
  %v54 = vld [vmem:[%s0 + $0x128] sm:$0xff]
  %v55 = vld [vmem:[%s0 + $0x130] sm:$0xff]
  %v56 = vld [vmem:[%s0 + $0x138] sm:$0xff]
  %v57 = vld [vmem:[%s0 + $0x140] sm:$0xff]
  %v58 = vld [vmem:[%s0 + $0x148] sm:$0xff]
  %v59 = vld [vmem:[%s0 + $0x150] sm:$0xff]
  %v60 = vld [vmem:[%s0 + $0x158] sm:$0xff]
  %v61 = vld [vmem:[%s0 + $0x160] sm:$0xff]
  %v62 = vld [vmem:[%s0 + $0x168] sm:$0xff]
  %v63 = vld [vmem:[%s0 + $0x170] sm:$0xff]
  %v64 = vld [vmem:[%s0 + $0x178] sm:$0xff]
  %v65 = vld [vmem:[%s0 + $0x180] sm:$0xff]
  %v66 = vld [vmem:[%s0 + $0x188] sm:$0xff]
  %v67 = vld [vmem:[%s0 + $0x190] sm:$0xff]
  %v68 = vld [vmem:[%s0 + $0x198] sm:$0xff]
  %v69 = vld [vmem:[%s0 + $0x1a0] sm:$0xff]
  %v70 = vld [vmem:[%s0 + $0x1a8] sm:$0xff]
  %v71 = vld [vmem:[%s0 + $0x1b0] sm:$0xff]
  %v72 = vld [vmem:[%s0 + $0x1b8] sm:$0xff]
  %v73 = vld [vmem:[%s0 + $0x1c0] sm:$0xff]
  %v74 = vld [vmem:[%s0 + $0x1c8] sm:$0xff]
  %v75 = vld [vmem:[%s0 + $0x1d0] sm:$0xff]
  %v76 = vld [vmem:[%s0 + $0x1d8] sm:$0xff]
  %v77 = vld [vmem:[%s0 + $0x1e0] sm:$0xff]
  %v78 = vld [vmem:[%s0 + $0x1e8] sm:$0xff]
  %v79 = vld [vmem:[%s0 + $0x1f0] sm:$0xff]
  %v80 = vld [vmem:[%s0 + $0x1f8] sm:$0xff]
  %v81 = vld [vmem:[%s2] sm:$0x1]
  %v83 = vperm.slane %v81, 0
  %v85 = vmul.f32 %v17, %v83
  %v86 = vmul.f32 %v18, %v83
  %v87 = vmul.f32 %v19, %v83
  %v88 = vmul.f32 %v20, %v83
  %v89 = vmul.f32 %v21, %v83
  %v90 = vmul.f32 %v22, %v83
  %v91 = vmul.f32 %v23, %v83
  %v92 = vmul.f32 %v24, %v83
  %v93 = vmul.f32 %v25, %v83
  %v94 = vmul.f32 %v26, %v83
  %v95 = vmul.f32 %v27, %v83
  %v96 = vmul.f32 %v28, %v83
  %v97 = vmul.f32 %v29, %v83
  %v98 = vmul.f32 %v30, %v83
  %v99 = vmul.f32 %v31, %v83
  %v100 = vmul.f32 %v32, %v83
  %v101 = vmul.f32 %v33, %v83
  %v102 = vmul.f32 %v34, %v83
  %v103 = vmul.f32 %v35, %v83
  %v104 = vmul.f32 %v36, %v83
  %v105 = vmul.f32 %v37, %v83
  %v106 = vmul.f32 %v38, %v83
  %v107 = vmul.f32 %v39, %v83
  %v108 = vmul.f32 %v40, %v83
  %v109 = vmul.f32 %v41, %v83
  %v110 = vmul.f32 %v42, %v83
  %v111 = vmul.f32 %v43, %v83
  %v112 = vmul.f32 %v44, %v83
  %v113 = vmul.f32 %v45, %v83
  %v114 = vmul.f32 %v46, %v83
  %v115 = vmul.f32 %v47, %v83
  %v116 = vmul.f32 %v48, %v83
  %v117 = vmul.f32 %v49, %v83
  %v118 = vmul.f32 %v50, %v83
  %v119 = vmul.f32 %v51, %v83
  %v120 = vmul.f32 %v52, %v83
  %v121 = vmul.f32 %v53, %v83
  %v122 = vmul.f32 %v54, %v83
  %v123 = vmul.f32 %v55, %v83
  %v124 = vmul.f32 %v56, %v83
  %v125 = vmul.f32 %v57, %v83
  %v126 = vmul.f32 %v58, %v83
  %v127 = vmul.f32 %v59, %v83
  %v128 = vmul.f32 %v60, %v83
  %v129 = vmul.f32 %v61, %v83
  %v130 = vmul.f32 %v62, %v83
  %v131 = vmul.f32 %v63, %v83
  %v132 = vmul.f32 %v64, %v83
  %v133 = vmul.f32 %v65, %v83
  %v134 = vmul.f32 %v66, %v83
  %v135 = vmul.f32 %v67, %v83
  %v136 = vmul.f32 %v68, %v83
  %v137 = vmul.f32 %v69, %v83
  %v138 = vmul.f32 %v70, %v83
  %v139 = vmul.f32 %v71, %v83
  %v140 = vmul.f32 %v72, %v83
  %v141 = vmul.f32 %v73, %v83
  %v142 = vmul.f32 %v74, %v83
  %v143 = vmul.f32 %v75, %v83
  %v144 = vmul.f32 %v76, %v83
  %v145 = vmul.f32 %v77, %v83
  %v146 = vmul.f32 %v78, %v83
  %v147 = vmul.f32 %v79, %v83
  %v148 = vmul.f32 %v80, %v83
  %v149 = vld [vmem:[%s3] sm:$0x1]
  %v151 = vperm.slane %v149, 0
  %v153 = vadd.f32 %v85, %v151
  %v154 = vadd.f32 %v86, %v151
  %v155 = vadd.f32 %v87, %v151
  %v156 = vadd.f32 %v88, %v151
  %v157 = vadd.f32 %v89, %v151
  %v158 = vadd.f32 %v90, %v151
  %v159 = vadd.f32 %v91, %v151
  %v160 = vadd.f32 %v92, %v151
  %v161 = vadd.f32 %v93, %v151
  %v162 = vadd.f32 %v94, %v151
  %v163 = vadd.f32 %v95, %v151
  %v164 = vadd.f32 %v96, %v151
  %v165 = vadd.f32 %v97, %v151
  %v166 = vadd.f32 %v98, %v151
  %v167 = vadd.f32 %v99, %v151
  %v168 = vadd.f32 %v100, %v151
  %v169 = vadd.f32 %v101, %v151
  %v170 = vadd.f32 %v102, %v151
  %v171 = vadd.f32 %v103, %v151
  %v172 = vadd.f32 %v104, %v151
  %v173 = vadd.f32 %v105, %v151
  %v174 = vadd.f32 %v106, %v151
  %v175 = vadd.f32 %v107, %v151
  %v176 = vadd.f32 %v108, %v151
  %v177 = vadd.f32 %v109, %v151
  %v178 = vadd.f32 %v110, %v151
  %v179 = vadd.f32 %v111, %v151
  %v180 = vadd.f32 %v112, %v151
  %v181 = vadd.f32 %v113, %v151
  %v182 = vadd.f32 %v114, %v151
  %v183 = vadd.f32 %v115, %v151
  %v184 = vadd.f32 %v116, %v151
  %v185 = vadd.f32 %v117, %v151
  %v186 = vadd.f32 %v118, %v151
  %v187 = vadd.f32 %v119, %v151
  %v188 = vadd.f32 %v120, %v151
  %v189 = vadd.f32 %v121, %v151
  %v190 = vadd.f32 %v122, %v151
  %v191 = vadd.f32 %v123, %v151
  %v192 = vadd.f32 %v124, %v151
  %v193 = vadd.f32 %v125, %v151
  %v194 = vadd.f32 %v126, %v151
  %v195 = vadd.f32 %v127, %v151
  %v196 = vadd.f32 %v128, %v151
  %v197 = vadd.f32 %v129, %v151
  %v198 = vadd.f32 %v130, %v151
  %v199 = vadd.f32 %v131, %v151
  %v200 = vadd.f32 %v132, %v151
  %v201 = vadd.f32 %v133, %v151
  %v202 = vadd.f32 %v134, %v151
  %v203 = vadd.f32 %v135, %v151
  %v204 = vadd.f32 %v136, %v151
  %v205 = vadd.f32 %v137, %v151
  %v206 = vadd.f32 %v138, %v151
  %v207 = vadd.f32 %v139, %v151
  %v208 = vadd.f32 %v140, %v151
  %v209 = vadd.f32 %v141, %v151
  %v210 = vadd.f32 %v142, %v151
  %v211 = vadd.f32 %v143, %v151
  %v212 = vadd.f32 %v144, %v151
  %v213 = vadd.f32 %v145, %v151
  %v214 = vadd.f32 %v146, %v151
  %v215 = vadd.f32 %v147, %v151
  %v216 = vadd.f32 %v148, %v151
  %v217 = vld [vmem:[%s1] sm:$0xff]
  %v218 = vld [vmem:[%s1 + $0x8] sm:$0xff]
  %v219 = vld [vmem:[%s1 + $0x10] sm:$0xff]
  %v220 = vld [vmem:[%s1 + $0x18] sm:$0xff]
  %v221 = vld [vmem:[%s1 + $0x20] sm:$0xff]
  %v222 = vld [vmem:[%s1 + $0x28] sm:$0xff]
  %v223 = vld [vmem:[%s1 + $0x30] sm:$0xff]
  %v224 = vld [vmem:[%s1 + $0x38] sm:$0xff]
  %v225 = vld [vmem:[%s1 + $0x40] sm:$0xff]
  %v226 = vld [vmem:[%s1 + $0x48] sm:$0xff]
  %v227 = vld [vmem:[%s1 + $0x50] sm:$0xff]
  %v228 = vld [vmem:[%s1 + $0x58] sm:$0xff]
  %v229 = vld [vmem:[%s1 + $0x60] sm:$0xff]
  %v230 = vld [vmem:[%s1 + $0x68] sm:$0xff]
  %v231 = vld [vmem:[%s1 + $0x70] sm:$0xff]
  %v232 = vld [vmem:[%s1 + $0x78] sm:$0xff]
  %v233 = vld [vmem:[%s1 + $0x80] sm:$0xff]
  %v234 = vld [vmem:[%s1 + $0x88] sm:$0xff]
  %v235 = vld [vmem:[%s1 + $0x90] sm:$0xff]
  %v236 = vld [vmem:[%s1 + $0x98] sm:$0xff]
  %v237 = vld [vmem:[%s1 + $0xa0] sm:$0xff]
  %v238 = vld [vmem:[%s1 + $0xa8] sm:$0xff]
  %v239 = vld [vmem:[%s1 + $0xb0] sm:$0xff]
  %v240 = vld [vmem:[%s1 + $0xb8] sm:$0xff]
  %v241 = vld [vmem:[%s1 + $0xc0] sm:$0xff]
  %v242 = vld [vmem:[%s1 + $0xc8] sm:$0xff]
  %v243 = vld [vmem:[%s1 + $0xd0] sm:$0xff]
  %v244 = vld [vmem:[%s1 + $0xd8] sm:$0xff]
  %v245 = vld [vmem:[%s1 + $0xe0] sm:$0xff]
  %v246 = vld [vmem:[%s1 + $0xe8] sm:$0xff]
  %v247 = vld [vmem:[%s1 + $0xf0] sm:$0xff]
  %v248 = vld [vmem:[%s1 + $0xf8] sm:$0xff]
  %v249 = vld [vmem:[%s1 + $0x100] sm:$0xff]
  %v250 = vld [vmem:[%s1 + $0x108] sm:$0xff]
  %v251 = vld [vmem:[%s1 + $0x110] sm:$0xff]
  %v252 = vld [vmem:[%s1 + $0x118] sm:$0xff]
  %v253 = vld [vmem:[%s1 + $0x120] sm:$0xff]
  %v254 = vld [vmem:[%s1 + $0x128] sm:$0xff]
  %v255 = vld [vmem:[%s1 + $0x130] sm:$0xff]
  %v256 = vld [vmem:[%s1 + $0x138] sm:$0xff]
  %v257 = vld [vmem:[%s1 + $0x140] sm:$0xff]
  %v258 = vld [vmem:[%s1 + $0x148] sm:$0xff]
  %v259 = vld [vmem:[%s1 + $0x150] sm:$0xff]
  %v260 = vld [vmem:[%s1 + $0x158] sm:$0xff]
  %v261 = vld [vmem:[%s1 + $0x160] sm:$0xff]
  %v262 = vld [vmem:[%s1 + $0x168] sm:$0xff]
  %v263 = vld [vmem:[%s1 + $0x170] sm:$0xff]
  %v264 = vld [vmem:[%s1 + $0x178] sm:$0xff]
  %v265 = vld [vmem:[%s1 + $0x180] sm:$0xff]
  %v266 = vld [vmem:[%s1 + $0x188] sm:$0xff]
  %v267 = vld [vmem:[%s1 + $0x190] sm:$0xff]
  %v268 = vld [vmem:[%s1 + $0x198] sm:$0xff]
  %v269 = vld [vmem:[%s1 + $0x1a0] sm:$0xff]
  %v270 = vld [vmem:[%s1 + $0x1a8] sm:$0xff]
  %v271 = vld [vmem:[%s1 + $0x1b0] sm:$0xff]
  %v272 = vld [vmem:[%s1 + $0x1b8] sm:$0xff]
  %v273 = vld [vmem:[%s1 + $0x1c0] sm:$0xff]
  %v274 = vld [vmem:[%s1 + $0x1c8] sm:$0xff]
  %v275 = vld [vmem:[%s1 + $0x1d0] sm:$0xff]
  %v276 = vld [vmem:[%s1 + $0x1d8] sm:$0xff]
  %v277 = vld [vmem:[%s1 + $0x1e0] sm:$0xff]
  %v278 = vld [vmem:[%s1 + $0x1e8] sm:$0xff]
  %v279 = vld [vmem:[%s1 + $0x1f0] sm:$0xff]
  %v280 = vld [vmem:[%s1 + $0x1f8] sm:$0xff]
  %v281 = vadd.f32 %v153, %v217
  %v282 = vadd.f32 %v154, %v218
  %v283 = vadd.f32 %v155, %v219
  %v284 = vadd.f32 %v156, %v220
  %v285 = vadd.f32 %v157, %v221
  %v286 = vadd.f32 %v158, %v222
  %v287 = vadd.f32 %v159, %v223
  %v288 = vadd.f32 %v160, %v224
  %v289 = vadd.f32 %v161, %v225
  %v290 = vadd.f32 %v162, %v226
  %v291 = vadd.f32 %v163, %v227
  %v292 = vadd.f32 %v164, %v228
  %v293 = vadd.f32 %v165, %v229
  %v294 = vadd.f32 %v166, %v230
  %v295 = vadd.f32 %v167, %v231
  %v296 = vadd.f32 %v168, %v232
  %v297 = vadd.f32 %v169, %v233
  %v298 = vadd.f32 %v170, %v234
  %v299 = vadd.f32 %v171, %v235
  %v300 = vadd.f32 %v172, %v236
  %v301 = vadd.f32 %v173, %v237
  %v302 = vadd.f32 %v174, %v238
  %v303 = vadd.f32 %v175, %v239
  %v304 = vadd.f32 %v176, %v240
  %v305 = vadd.f32 %v177, %v241
  %v306 = vadd.f32 %v178, %v242
  %v307 = vadd.f32 %v179, %v243
  %v308 = vadd.f32 %v180, %v244
  %v309 = vadd.f32 %v181, %v245
  %v310 = vadd.f32 %v182, %v246
  %v311 = vadd.f32 %v183, %v247
  %v312 = vadd.f32 %v184, %v248
  %v313 = vadd.f32 %v185, %v249
  %v314 = vadd.f32 %v186, %v250
  %v315 = vadd.f32 %v187, %v251
  %v316 = vadd.f32 %v188, %v252
  %v317 = vadd.f32 %v189, %v253
  %v318 = vadd.f32 %v190, %v254
  %v319 = vadd.f32 %v191, %v255
  %v320 = vadd.f32 %v192, %v256
  %v321 = vadd.f32 %v193, %v257
  %v322 = vadd.f32 %v194, %v258
  %v323 = vadd.f32 %v195, %v259
  %v324 = vadd.f32 %v196, %v260
  %v325 = vadd.f32 %v197, %v261
  %v326 = vadd.f32 %v198, %v262
  %v327 = vadd.f32 %v199, %v263
  %v328 = vadd.f32 %v200, %v264
  %v329 = vadd.f32 %v201, %v265
  %v330 = vadd.f32 %v202, %v266
  %v331 = vadd.f32 %v203, %v267
  %v332 = vadd.f32 %v204, %v268
  %v333 = vadd.f32 %v205, %v269
  %v334 = vadd.f32 %v206, %v270
  %v335 = vadd.f32 %v207, %v271
  %v336 = vadd.f32 %v208, %v272
  %v337 = vadd.f32 %v209, %v273
  %v338 = vadd.f32 %v210, %v274
  %v339 = vadd.f32 %v211, %v275
  %v340 = vadd.f32 %v212, %v276
  %v341 = vadd.f32 %v213, %v277
  %v342 = vadd.f32 %v214, %v278
  %v343 = vadd.f32 %v215, %v279
  %v344 = vadd.f32 %v216, %v280
  %v345 = vmax.f32 %v281, 0.0
  %v346 = vmax.f32 %v282, 0.0
  %v347 = vmax.f32 %v283, 0.0
  %v348 = vmax.f32 %v284, 0.0
  %v349 = vmax.f32 %v285, 0.0
  %v350 = vmax.f32 %v286, 0.0
  %v351 = vmax.f32 %v287, 0.0
  %v352 = vmax.f32 %v288, 0.0
  %v353 = vmax.f32 %v289, 0.0
  %v354 = vmax.f32 %v290, 0.0
  %v355 = vmax.f32 %v291, 0.0
  %v356 = vmax.f32 %v292, 0.0
  %v357 = vmax.f32 %v293, 0.0
  %v358 = vmax.f32 %v294, 0.0
  %v359 = vmax.f32 %v295, 0.0
  %v360 = vmax.f32 %v296, 0.0
  %v361 = vmax.f32 %v297, 0.0
  %v362 = vmax.f32 %v298, 0.0
  %v363 = vmax.f32 %v299, 0.0
  %v364 = vmax.f32 %v300, 0.0
  %v365 = vmax.f32 %v301, 0.0
  %v366 = vmax.f32 %v302, 0.0
  %v367 = vmax.f32 %v303, 0.0
  %v368 = vmax.f32 %v304, 0.0
  %v369 = vmax.f32 %v305, 0.0
  %v370 = vmax.f32 %v306, 0.0
  %v371 = vmax.f32 %v307, 0.0
  %v372 = vmax.f32 %v308, 0.0
  %v373 = vmax.f32 %v309, 0.0
  %v374 = vmax.f32 %v310, 0.0
  %v375 = vmax.f32 %v311, 0.0
  %v376 = vmax.f32 %v312, 0.0
  %v377 = vmax.f32 %v313, 0.0
  %v378 = vmax.f32 %v314, 0.0
  %v379 = vmax.f32 %v315, 0.0
  %v380 = vmax.f32 %v316, 0.0
  %v381 = vmax.f32 %v317, 0.0
  %v382 = vmax.f32 %v318, 0.0
  %v383 = vmax.f32 %v319, 0.0
  %v384 = vmax.f32 %v320, 0.0
  %v385 = vmax.f32 %v321, 0.0
  %v386 = vmax.f32 %v322, 0.0
  %v387 = vmax.f32 %v323, 0.0
  %v388 = vmax.f32 %v324, 0.0
  %v389 = vmax.f32 %v325, 0.0
  %v390 = vmax.f32 %v326, 0.0
  %v391 = vmax.f32 %v327, 0.0
  %v392 = vmax.f32 %v328, 0.0
  %v393 = vmax.f32 %v329, 0.0
  %v394 = vmax.f32 %v330, 0.0
  %v395 = vmax.f32 %v331, 0.0
  %v396 = vmax.f32 %v332, 0.0
  %v397 = vmax.f32 %v333, 0.0
  %v398 = vmax.f32 %v334, 0.0
  %v399 = vmax.f32 %v335, 0.0
  %v400 = vmax.f32 %v336, 0.0
  %v401 = vmax.f32 %v337, 0.0
  %v402 = vmax.f32 %v338, 0.0
  %v403 = vmax.f32 %v339, 0.0
  %v404 = vmax.f32 %v340, 0.0
  %v405 = vmax.f32 %v341, 0.0
  %v406 = vmax.f32 %v342, 0.0
  %v407 = vmax.f32 %v343, 0.0
  %v408 = vmax.f32 %v344, 0.0
  %409 = vst [vmem:[%s4] sm:$0xff] %v345
  %410 = vst [vmem:[%s4 + $0x8] sm:$0xff] %v346
  %411 = vst [vmem:[%s4 + $0x10] sm:$0xff] %v347
  %412 = vst [vmem:[%s4 + $0x18] sm:$0xff] %v348
  %413 = vst [vmem:[%s4 + $0x20] sm:$0xff] %v349
  %414 = vst [vmem:[%s4 + $0x28] sm:$0xff] %v350
  %415 = vst [vmem:[%s4 + $0x30] sm:$0xff] %v351
  %416 = vst [vmem:[%s4 + $0x38] sm:$0xff] %v352
  %417 = vst [vmem:[%s4 + $0x40] sm:$0xff] %v353
  %418 = vst [vmem:[%s4 + $0x48] sm:$0xff] %v354
  %419 = vst [vmem:[%s4 + $0x50] sm:$0xff] %v355
  %420 = vst [vmem:[%s4 + $0x58] sm:$0xff] %v356
  %421 = vst [vmem:[%s4 + $0x60] sm:$0xff] %v357
  %422 = vst [vmem:[%s4 + $0x68] sm:$0xff] %v358
  %423 = vst [vmem:[%s4 + $0x70] sm:$0xff] %v359
  %424 = vst [vmem:[%s4 + $0x78] sm:$0xff] %v360
  %425 = vst [vmem:[%s4 + $0x80] sm:$0xff] %v361
  %426 = vst [vmem:[%s4 + $0x88] sm:$0xff] %v362
  %427 = vst [vmem:[%s4 + $0x90] sm:$0xff] %v363
  %428 = vst [vmem:[%s4 + $0x98] sm:$0xff] %v364
  %429 = vst [vmem:[%s4 + $0xa0] sm:$0xff] %v365
  %430 = vst [vmem:[%s4 + $0xa8] sm:$0xff] %v366
  %431 = vst [vmem:[%s4 + $0xb0] sm:$0xff] %v367
  %432 = vst [vmem:[%s4 + $0xb8] sm:$0xff] %v368
  %433 = vst [vmem:[%s4 + $0xc0] sm:$0xff] %v369
  %434 = vst [vmem:[%s4 + $0xc8] sm:$0xff] %v370
  %435 = vst [vmem:[%s4 + $0xd0] sm:$0xff] %v371
  %436 = vst [vmem:[%s4 + $0xd8] sm:$0xff] %v372
  %437 = vst [vmem:[%s4 + $0xe0] sm:$0xff] %v373
  %438 = vst [vmem:[%s4 + $0xe8] sm:$0xff] %v374
  %439 = vst [vmem:[%s4 + $0xf0] sm:$0xff] %v375
  %440 = vst [vmem:[%s4 + $0xf8] sm:$0xff] %v376
  %441 = vst [vmem:[%s4 + $0x100] sm:$0xff] %v377
  %442 = vst [vmem:[%s4 + $0x108] sm:$0xff] %v378
  %443 = vst [vmem:[%s4 + $0x110] sm:$0xff] %v379
  %444 = vst [vmem:[%s4 + $0x118] sm:$0xff] %v380
  %445 = vst [vmem:[%s4 + $0x120] sm:$0xff] %v381
  %446 = vst [vmem:[%s4 + $0x128] sm:$0xff] %v382
  %447 = vst [vmem:[%s4 + $0x130] sm:$0xff] %v383
  %448 = vst [vmem:[%s4 + $0x138] sm:$0xff] %v384
  %449 = vst [vmem:[%s4 + $0x140] sm:$0xff] %v385
  %450 = vst [vmem:[%s4 + $0x148] sm:$0xff] %v386
  %451 = vst [vmem:[%s4 + $0x150] sm:$0xff] %v387
  %452 = vst [vmem:[%s4 + $0x158] sm:$0xff] %v388
  %453 = vst [vmem:[%s4 + $0x160] sm:$0xff] %v389
  %454 = vst [vmem:[%s4 + $0x168] sm:$0xff] %v390
  %455 = vst [vmem:[%s4 + $0x170] sm:$0xff] %v391
  %456 = vst [vmem:[%s4 + $0x178] sm:$0xff] %v392
  %457 = vst [vmem:[%s4 + $0x180] sm:$0xff] %v393
  %458 = vst [vmem:[%s4 + $0x188] sm:$0xff] %v394
  %459 = vst [vmem:[%s4 + $0x190] sm:$0xff] %v395
  %460 = vst [vmem:[%s4 + $0x198] sm:$0xff] %v396
  %461 = vst [vmem:[%s4 + $0x1a0] sm:$0xff] %v397
  %462 = vst [vmem:[%s4 + $0x1a8] sm:$0xff] %v398
  %463 = vst [vmem:[%s4 + $0x1b0] sm:$0xff] %v399
  %464 = vst [vmem:[%s4 + $0x1b8] sm:$0xff] %v400
  %465 = vst [vmem:[%s4 + $0x1c0] sm:$0xff] %v401
  %466 = vst [vmem:[%s4 + $0x1c8] sm:$0xff] %v402
  %467 = vst [vmem:[%s4 + $0x1d0] sm:$0xff] %v403
  %468 = vst [vmem:[%s4 + $0x1d8] sm:$0xff] %v404
  %469 = vst [vmem:[%s4 + $0x1e0] sm:$0xff] %v405
  %470 = vst [vmem:[%s4 + $0x1e8] sm:$0xff] %v406
  %471 = vst [vmem:[%s4 + $0x1f0] sm:$0xff] %v407
  %472 = vst [vmem:[%s4 + $0x1f8] sm:$0xff] %v408
  // Predicated region
  $region18: #{bottleneck_pallas.7} parent=0 // pred_check
    _
  $region19: #{bottleneck_pallas.7} parent=0 // pred_check_branch
    %474 = sbr.rel (0) target = $region21
  $region20: #{bottleneck_pallas.7} parent=0 // pred_region
    _
  $region21: #{bottleneck_pallas.7} parent=0 // pred_fallthru
    _
  // Predicated region
  $region22: #{bottleneck_pallas.7} parent=0 // pred_check
    _
  $region23: #{bottleneck_pallas.7} parent=0 // pred_check_branch
    %476 = sbr.rel (0) target = $region25
  $region24: #{bottleneck_pallas.7} parent=0 // pred_region
    _
  $region25: #{bottleneck_pallas.7} parent=0 // pred_fallthru
    _

// kernel: bottleneck_pallas.5
$region0: #{bottleneck_pallas.5}
  #allocation0 [shape = 'u32[]', space=smem, size = 0x4, offset = 0x4, fixed_abs, tag = 'smem constant byte address 0x4 - core index']
  #allocation1 [shape = 'u32[72,128]{1,0:T(1,128)}', space=vmem, size = 0x9000, scoped, tag = 'internal scratch']
  #allocation2 [shape = 'f32[18,18,128]{2,1,0:T(8,128)}', space=vmem, size = 0x36000, scoped, tag = 'scratch operand']
  %s0 = inlined_call_operand.vmem [shape: f32[2,16,16,128], index: 0, kind: input, shape index: {}]
  %s1 = inlined_call_operand.vmem [shape: f32[2,2,16,128], index: 1, kind: input, shape index: {}]
  %s2 = inlined_call_operand.vmem [shape: f32[1,128], index: 2, kind: input, shape index: {}]
  %s3 = inlined_call_operand.vmem [shape: f32[1,128], index: 3, kind: input, shape index: {}]
  %s4 = inlined_call_operand.vmem [shape: f32[3,384,128], index: 4, kind: input, shape index: {}]
  %s5 = inlined_call_operand.vmem [shape: f32[512,128], index: 5, kind: output, shape index: {0}]
  %s6 = inlined_call_operand.vmem [shape: f32[2,2,128], index: 6, kind: output, shape index: {1}]
  %7 = xla_tuple %s5, %s6
  %s8 = sld [smem:[#allocation0]]
  $region61: #{bottleneck_pallas.5} parent=0
    _
  %s10 = ssub.s32 1, %s8
  %s11 = scalar_select 0, %s10, %s8
  loop: start=0, step=1, limit=4
  $region2: #{bottleneck_pallas.5} parent=0 // loop_pre_header
    _
  $region3: #{bottleneck_pallas.5} parent=0 // loop_header
    %s13 = sphi 0, %s17
    %p14 = scmp.ge.s32.totalorder %s13, 4
    %s20 = sphi 0, %s32
    %s21 = sphi 0, %s28
    %s22 = sphi 0, %s20
    %s23 = sphi 0, %s21
    %s24 = sphi 0, %s22
    %s25 = sphi 0, %s23
    %s37 = sphi 0, %s39
    %s40 = sphi 0, %s37
    %s41 = sphi 0, %s40
    %s57 = sphi 0, %s41
    %s65 = sphi 0, %s67
    %s68 = sphi 0, %s65
    %s69 = sphi 0, %s68
    %s85 = sphi 0, %s69
    %s89 = sphi 0, %s89
    %s91 = sphi 0, %s89
    %s92 = sphi 0, %s91
    %s106 = sphi 0, %s92
    %s110 = sphi 0, %s110
    %s112 = sphi 0, %s110
    %s113 = sphi 0, %s112
    %s127 = sphi 0, %s113
    %s131 = sphi 0, %s131
    %s133 = sphi 0, %s131
    %s134 = sphi 0, %s133
    %s148 = sphi 0, %s134
    %s156 = sphi 0, %s158
    %s159 = sphi 0, %s156
    %s160 = sphi 0, %s159
    %s176 = sphi 0, %s160
    %s184 = sphi 0, %s186
    %s187 = sphi 0, %s184
    %s188 = sphi 0, %s187
    %s204 = sphi 0, %s188
  $region4: #{bottleneck_pallas.5} parent=0 // loop_header_branch
    %16 = sbr.rel (%p14) target = $region8
  $region5: #{bottleneck_pallas.5} parent=0 // loop_body
    %s18 = ssub.s32 %s13, 1
    %s19 = ssub.s32 %s13, 2
    %s26 = sadd.s32 1, %s21
    %p27 = scmp.ge.s32.totalorder %s26, 1
    %s28 = scalar_select %p27, 0, %s26
    %s29 = sadd.s32 1, %s20
    %s30 = scalar_select %p27, %s29, %s20
    %p31 = scmp.ge.s32.totalorder %s30, 2
    %s32 = scalar_select %p31, 0, %s30
    %s33 = ssub.s32 %s20, %s32
    %s34 = ssub.s32 %s21, %s28
    %s35 = sor.u32 %s33, %s34
    %p36 = scmp.eq.s32.totalorder %s35, 0
    %s38 = sadd.s32 %s37, 1
    %s39 = scalar_select %p36, %s37, %s38
    %p42 = pneg %p36
    %p43 = scmp.eq.s32.totalorder %s13, 1
    %p44 = por %p42, %p43
    %p45 = scmp.ne.s32.totalorder %s37, %s40
    %p46 = scmp.eq.s32.totalorder %s13, 0
    %p47 = por %p45, %p46
    %p48 = scmp.ne.s32.totalorder %s37, %s40
    %p49 = scmp.eq.s32.totalorder %s18, 1
    %p50 = por %p48, %p49
    %p51 = scmp.ne.s32.totalorder %s40, %s41
    %p52 = scmp.eq.s32.totalorder %s18, 0
    %p53 = por %p51, %p52
    %p54 = scmp.ne.s32.totalorder %s40, %s41
    %p55 = scmp.eq.s32.totalorder %s19, 1
    %p56 = por %p54, %p55
    %p58 = scmp.ne.s32.totalorder %s41, %s57
    %p59 = scmp.eq.s32.totalorder %s19, 0
    %p60 = por %p58, %p59
    %s61 = sadd.s32 %s20, %s21
    %s62 = sadd.s32 %s32, %s28
    %s63 = ssub.s32 %s61, %s62
    %p64 = scmp.eq.s32.totalorder %s63, 0
    %s66 = sadd.s32 %s65, 1
    %s67 = scalar_select %p64, %s65, %s66
    %p70 = pneg %p64
    %p71 = scmp.eq.s32.totalorder %s13, 1
    %p72 = por %p70, %p71
    %p73 = scmp.ne.s32.totalorder %s65, %s68
    %p74 = scmp.eq.s32.totalorder %s13, 0
    %p75 = por %p73, %p74
    %p76 = scmp.ne.s32.totalorder %s65, %s68
    %p77 = scmp.eq.s32.totalorder %s18, 1
    %p78 = por %p76, %p77
    %p79 = scmp.ne.s32.totalorder %s68, %s69
    %p80 = scmp.eq.s32.totalorder %s18, 0
    %p81 = por %p79, %p80
    %p82 = scmp.ne.s32.totalorder %s68, %s69
    %p83 = scmp.eq.s32.totalorder %s19, 1
    %p84 = por %p82, %p83
    %p86 = scmp.ne.s32.totalorder %s69, %s85
    %p87 = scmp.eq.s32.totalorder %s19, 0
    %p88 = por %p86, %p87
    %s90 = sadd.s32 %s89, 1
    %p93 = scmp.eq.s32.totalorder %s13, 1
    %p94 = scmp.ne.s32.totalorder %s89, %s91
    %p95 = scmp.eq.s32.totalorder %s13, 0
    %p96 = por %p94, %p95
    %p97 = scmp.ne.s32.totalorder %s89, %s91
    %p98 = scmp.eq.s32.totalorder %s18, 1
    %p99 = por %p97, %p98
    %p100 = scmp.ne.s32.totalorder %s91, %s92
    %p101 = scmp.eq.s32.totalorder %s18, 0
    %p102 = por %p100, %p101
    %p103 = scmp.ne.s32.totalorder %s91, %s92
    %p104 = scmp.eq.s32.totalorder %s19, 1
    %p105 = por %p103, %p104
    %p107 = scmp.ne.s32.totalorder %s92, %s106
    %p108 = scmp.eq.s32.totalorder %s19, 0
    %p109 = por %p107, %p108
    %s111 = sadd.s32 %s110, 1
    %p114 = scmp.eq.s32.totalorder %s13, 1
    %p115 = scmp.ne.s32.totalorder %s110, %s112
    %p116 = scmp.eq.s32.totalorder %s13, 0
    %p117 = por %p115, %p116
    %p118 = scmp.ne.s32.totalorder %s110, %s112
    %p119 = scmp.eq.s32.totalorder %s18, 1
    %p120 = por %p118, %p119
    %p121 = scmp.ne.s32.totalorder %s112, %s113
    %p122 = scmp.eq.s32.totalorder %s18, 0
    %p123 = por %p121, %p122
    %p124 = scmp.ne.s32.totalorder %s112, %s113
    %p125 = scmp.eq.s32.totalorder %s19, 1
    %p126 = por %p124, %p125
    %p128 = scmp.ne.s32.totalorder %s113, %s127
    %p129 = scmp.eq.s32.totalorder %s19, 0
    %p130 = por %p128, %p129
    %s132 = sadd.s32 %s131, 1
    %p135 = scmp.eq.s32.totalorder %s13, 1
    %p136 = scmp.ne.s32.totalorder %s131, %s133
    %p137 = scmp.eq.s32.totalorder %s13, 0
    %p138 = por %p136, %p137
    %p139 = scmp.ne.s32.totalorder %s131, %s133
    %p140 = scmp.eq.s32.totalorder %s18, 1
    %p141 = por %p139, %p140
    %p142 = scmp.ne.s32.totalorder %s133, %s134
    %p143 = scmp.eq.s32.totalorder %s18, 0
    %p144 = por %p142, %p143
    %p145 = scmp.ne.s32.totalorder %s133, %s134
    %p146 = scmp.eq.s32.totalorder %s19, 1
    %p147 = por %p145, %p146
    %p149 = scmp.ne.s32.totalorder %s134, %s148
    %p150 = scmp.eq.s32.totalorder %s19, 0
    %p151 = por %p149, %p150
    %s152 = sadd.s32 %s20, %s21
    %s153 = sadd.s32 %s32, %s28
    %s154 = ssub.s32 %s152, %s153
    %p155 = scmp.eq.s32.totalorder %s154, 0
    %s157 = sadd.s32 %s156, 1
    %s158 = scalar_select %p155, %s156, %s157
    %p161 = pneg %p155
    %p162 = scmp.eq.s32.totalorder %s13, 1
    %p163 = por %p161, %p162
    %p164 = scmp.ne.s32.totalorder %s156, %s159
    %p165 = scmp.eq.s32.totalorder %s13, 0
    %p166 = por %p164, %p165
    %p167 = scmp.ne.s32.totalorder %s156, %s159
    %p168 = scmp.eq.s32.totalorder %s18, 1
    %p169 = por %p167, %p168
    %p170 = scmp.ne.s32.totalorder %s159, %s160
    %p171 = scmp.eq.s32.totalorder %s18, 0
    %p172 = por %p170, %p171
    %p173 = scmp.ne.s32.totalorder %s159, %s160
    %p174 = scmp.eq.s32.totalorder %s19, 1
    %p175 = por %p173, %p174
    %p177 = scmp.ne.s32.totalorder %s160, %s176
    %p178 = scmp.eq.s32.totalorder %s19, 0
    %p179 = por %p177, %p178
    %s180 = sadd.s32 %s20, %s21
    %s181 = sadd.s32 %s32, %s28
    %s182 = ssub.s32 %s180, %s181
    %p183 = scmp.eq.s32.totalorder %s182, 0
    %s185 = sadd.s32 %s184, 1
    %s186 = scalar_select %p183, %s184, %s185
    %p189 = pneg %p183
    %p190 = scmp.eq.s32.totalorder %s13, 1
    %p191 = por %p189, %p190
    %p192 = scmp.ne.s32.totalorder %s184, %s187
    %p193 = scmp.eq.s32.totalorder %s13, 0
    %p194 = por %p192, %p193
    %p195 = scmp.ne.s32.totalorder %s184, %s187
    %p196 = scmp.eq.s32.totalorder %s18, 1
    %p197 = por %p195, %p196
    %p198 = scmp.ne.s32.totalorder %s187, %s188
    %p199 = scmp.eq.s32.totalorder %s18, 0
    %p200 = por %p198, %p199
    %p201 = scmp.ne.s32.totalorder %s187, %s188
    %p202 = scmp.eq.s32.totalorder %s19, 1
    %p203 = por %p201, %p202
    %p205 = scmp.ne.s32.totalorder %s188, %s204
    %p206 = scmp.eq.s32.totalorder %s19, 0
    %p207 = por %p205, %p206
    %p208 = scmp.le.s32.totalorder 1, %s13
    %p209 = scmp.lt.s32.totalorder %s13, 3
    %p210 = pnand %p208, %p209
    %p211 = pneg %p210
    // Predicated region
    $region9: #{bottleneck_pallas.5} parent=5 // pred_check
      _
    $region10: #{bottleneck_pallas.5} parent=5 // pred_check_branch
      %213 = sbr.rel (%p210) target = $region12
    $region11: #{bottleneck_pallas.5} parent=5 // pred_region
      %s214 = ssub.s32 %s13, 1
      // Predicated region
      $region13: #{bottleneck_pallas.5} parent=11 // pred_check
        %p215 = pneg %p102
      $region14: #{bottleneck_pallas.5} parent=11 // pred_check_branch
        %217 = sbr.rel (%p215) target = $region16
      $region15: #{bottleneck_pallas.5} parent=11 // pred_region
        _
      $region16: #{bottleneck_pallas.5} parent=11 // pred_fallthru
        _
      // Predicated region
      $region17: #{bottleneck_pallas.5} parent=11 // pred_check
        %p218 = pneg %p123
      $region18: #{bottleneck_pallas.5} parent=11 // pred_check_branch
        %220 = sbr.rel (%p218) target = $region20
      $region19: #{bottleneck_pallas.5} parent=11 // pred_region
        _
      $region20: #{bottleneck_pallas.5} parent=11 // pred_fallthru
        _
      // Predicated region
      $region21: #{bottleneck_pallas.5} parent=11 // pred_check
        %p221 = pneg %p144
      $region22: #{bottleneck_pallas.5} parent=11 // pred_check_branch
        %223 = sbr.rel (%p221) target = $region24
      $region23: #{bottleneck_pallas.5} parent=11 // pred_region
        _
      $region24: #{bottleneck_pallas.5} parent=11 // pred_fallthru
        _
    $region12: #{bottleneck_pallas.5} parent=5 // pred_fallthru
      _
    %p224 = scmp.lt.s32.totalorder %s13, 2
    // Predicated region
    $region25: #{bottleneck_pallas.5} parent=5 // pred_check
      %p225 = pneg %p224
    $region26: #{bottleneck_pallas.5} parent=5 // pred_check_branch
      %227 = sbr.rel (%p225) target = $region28
    $region27: #{bottleneck_pallas.5} parent=5 // pred_region
      // Predicated region
      $region29: #{bottleneck_pallas.5} parent=27 // pred_check
        %p228 = pneg %p47
      $region30: #{bottleneck_pallas.5} parent=27 // pred_check_branch
        %230 = sbr.rel (%p228) target = $region32
      $region31: #{bottleneck_pallas.5} parent=27 // pred_region
        %s231 = smul.u32 16, %s21
        %p232 = scmp.lt.s32.totalorder %s20, 1
        %s233 = scalar_select %p232, %s20, 1
        %p234 = scmp.lt.s32.totalorder %s231, 15
        %s235 = scalar_select %p234, %s231, 15
        %s236 = smul.addr %s235, 2
        %s237 = smul.addr %s233, 32
        %s238 = sadd.s32 %s236, %s237
        %s239 = smul.addr %s238, 8
        %s240 = scalar_lea.vmem %s0, %s239
        %s241 = smul.u32 16, %s21
      $region32: #{bottleneck_pallas.5} parent=27 // pred_fallthru
        _
      // Predicated region
      $region33: #{bottleneck_pallas.5} parent=27 // pred_check
        %p242 = pneg %p75
      $region34: #{bottleneck_pallas.5} parent=27 // pred_check_branch
        %244 = sbr.rel (%p242) target = $region36
      $region35: #{bottleneck_pallas.5} parent=27 // pred_region
        %s245 = sadd.s32 %s20, %s21
        %p246 = scmp.lt.s32.totalorder %s245, 1
        %s247 = scalar_select %p246, %s245, 1
        %s248 = smul.addr %s247, 4
        %s249 = smul.addr %s248, 8
        %s250 = scalar_lea.vmem %s1, %s249
        %s251 = sadd.s32 %s20, %s21
      $region36: #{bottleneck_pallas.5} parent=27 // pred_fallthru
        _
    $region28: #{bottleneck_pallas.5} parent=5 // pred_fallthru
      _
    %p252 = scmp.le.s32.totalorder 1, %s13
    %p253 = scmp.lt.s32.totalorder %s13, 3
    %p254 = pnand %p252, %p253
    %p255 = pneg %p254
    // Predicated region
    $region37: #{bottleneck_pallas.5} parent=5 // pred_check
      _
    $region38: #{bottleneck_pallas.5} parent=5 // pred_check_branch
      %257 = sbr.rel (%p254) target = $region40
    $region39: #{bottleneck_pallas.5} parent=5 // pred_region
      %s258 = ssub.s32 %s13, 1
      %s259 = smul.u32 16, %s23
      %p260 = scmp.lt.s32.totalorder %s22, 1
      %s261 = scalar_select %p260, %s22, 1
      %p262 = scmp.lt.s32.totalorder %s259, 15
      %s263 = scalar_select %p262, %s259, 15
      %s264 = smul.addr %s263, 2
      %s265 = smul.addr %s261, 32
      %s266 = sadd.s32 %s264, %s265
      %s267 = smul.addr %s266, 8
      %s268 = scalar_lea.vmem %s0, %s267
      %p269 = pneg %p53
      %p270 = pneg %p50
      %s271 = sadd.s32 %s22, %s23
      %p272 = scmp.lt.s32.totalorder %s271, 1
      %s273 = scalar_select %p272, %s271, 1
      %s274 = smul.addr %s273, 4
      %s275 = smul.addr %s274, 8
      %s276 = scalar_lea.vmem %s1, %s275
      %p277 = pneg %p81
      %p278 = pneg %p78
      %p279 = pneg %p102
      %p280 = pneg %p99
      %p281 = pneg %p123
      %p282 = pneg %p120
      %p283 = pneg %p144
      %p284 = pneg %p141
      %p285 = pneg %p172
      %p286 = pneg %p169
      %s287 = sadd.s32 %s22, %s23
      %s288 = smul.u32 32, %s287
      %p289 = scmp.lt.s32.totalorder %s288, 63
      %s290 = scalar_select %p289, %s288, 63
      %s291 = smul.addr %s290, 8
      %s292 = scalar_lea.vmem %s5, %s291
      %p293 = pneg %p200
      %p294 = pneg %p197
      %s295 = sadd.s32 %s22, %s23
      %p296 = scmp.lt.s32.totalorder %s295, 1
      %s297 = scalar_select %p296, %s295, 1
      %s298 = smul.addr %s297, 2
      %s299 = scalar_lea.vmem %s6, %s298
      %s300 = smul.u32 16, %s23
      %p301 = scmp.lt.s32.totalorder %s22, 1
      %s302 = scalar_select %p301, %s22, 1
      %p303 = scmp.lt.s32.totalorder %s300, 15
      %s304 = scalar_select %p303, %s300, 15
      %s305 = smul.addr %s304, 2
      %s306 = smul.addr %s302, 32
      %s307 = sadd.s32 %s305, %s306
      %s308 = smul.addr %s307, 8
      %s309 = scalar_lea.vmem %s0, %s308
      %s310 = smul.u32 16, %s23
      %s311 = sadd.s32 %s22, %s23
      %p312 = scmp.lt.s32.totalorder %s311, 1
      %s313 = scalar_select %p312, %s311, 1
      %s314 = smul.addr %s313, 4
      %s315 = smul.addr %s314, 8
      %s316 = scalar_lea.vmem %s1, %s315
      %s317 = sadd.s32 %s22, %s23
      %s318 = sadd.s32 %s22, %s23
      %s319 = smul.u32 32, %s318
      %p320 = scmp.lt.s32.totalorder %s319, 63
      %s321 = scalar_select %p320, %s319, 63
      %s322 = smul.addr %s321, 8
      %s323 = scalar_lea.vmem %s5, %s322
      %s324 = sadd.s32 %s22, %s23
      %s325 = smul.u32 32, %s324
      %s326 = sadd.s32 %s22, %s23
      %p327 = scmp.lt.s32.totalorder %s326, 1
      %s328 = scalar_select %p327, %s326, 1
      %s329 = smul.addr %s328, 2
      %s330 = scalar_lea.vmem %s6, %s329
      %s331 = sadd.s32 %s22, %s23
      %v332 = vld [vmem:[%s2] sm:$0x1]
      %v333 = vld [vmem:[%s3] sm:$0x1]
      %334 = vst [vmem:[#allocation2] sm:$0x1] 0.0
      %335 = vst [vmem:[#allocation2 + $0x18] sm:$0x1] 0.0
      %336 = vst [vmem:[#allocation2 + $0x30] sm:$0x1] 0.0
      %337 = vst [vmem:[#allocation2 + $0x48] sm:$0x1] 0.0
      %338 = vst [vmem:[#allocation2 + $0x60] sm:$0x1] 0.0
      %339 = vst [vmem:[#allocation2 + $0x78] sm:$0x1] 0.0
      %340 = vst [vmem:[#allocation2 + $0x90] sm:$0x1] 0.0
      %341 = vst [vmem:[#allocation2 + $0xa8] sm:$0x1] 0.0
      %342 = vst [vmem:[#allocation2 + $0xc0] sm:$0x1] 0.0
      %343 = vst [vmem:[#allocation2 + $0xd8] sm:$0x1] 0.0
      %344 = vst [vmem:[#allocation2 + $0xf0] sm:$0x1] 0.0
      %345 = vst [vmem:[#allocation2 + $0x108] sm:$0x1] 0.0
      %346 = vst [vmem:[#allocation2 + $0x120] sm:$0x1] 0.0
      %347 = vst [vmem:[#allocation2 + $0x138] sm:$0x1] 0.0
      %348 = vst [vmem:[#allocation2 + $0x150] sm:$0x1] 0.0
      %349 = vst [vmem:[#allocation2 + $0x168] sm:$0x1] 0.0
      %350 = vst [vmem:[#allocation2 + $0x180] sm:$0x1] 0.0
      %351 = vst [vmem:[#allocation2 + $0x198] sm:$0x1] 0.0
      %352 = vst [vmem:[#allocation2 + $0x11] sm:$0x1] 0.0
      %353 = vst [vmem:[#allocation2 + $0x29] sm:$0x1] 0.0
      %354 = vst [vmem:[#allocation2 + $0x41] sm:$0x1] 0.0
      %355 = vst [vmem:[#allocation2 + $0x59] sm:$0x1] 0.0
      %356 = vst [vmem:[#allocation2 + $0x71] sm:$0x1] 0.0
      %357 = vst [vmem:[#allocation2 + $0x89] sm:$0x1] 0.0
      %358 = vst [vmem:[#allocation2 + $0xa1] sm:$0x1] 0.0
      %359 = vst [vmem:[#allocation2 + $0xb9] sm:$0x1] 0.0
      %360 = vst [vmem:[#allocation2 + $0xd1] sm:$0x1] 0.0
      %361 = vst [vmem:[#allocation2 + $0xe9] sm:$0x1] 0.0
      %362 = vst [vmem:[#allocation2 + $0x101] sm:$0x1] 0.0
      %363 = vst [vmem:[#allocation2 + $0x119] sm:$0x1] 0.0
      %364 = vst [vmem:[#allocation2 + $0x131] sm:$0x1] 0.0
      %365 = vst [vmem:[#allocation2 + $0x149] sm:$0x1] 0.0
      %366 = vst [vmem:[#allocation2 + $0x161] sm:$0x1] 0.0
      %367 = vst [vmem:[#allocation2 + $0x179] sm:$0x1] 0.0
      %368 = vst [vmem:[#allocation2 + $0x191] sm:$0x1] 0.0
      %369 = vst [vmem:[#allocation2 + $0x1a9] sm:$0x1] 0.0
      %v370 = vld [vmem:[%s309] sm:$0xff]
      %v371 = vld [vmem:[%s309 + $0x8] sm:$0xff]
      %v372 = vld [vmem:[%s309 + $0x10] sm:$0xff]
      %v373 = vld [vmem:[%s309 + $0x18] sm:$0xff]
      %v374 = vld [vmem:[%s309 + $0x20] sm:$0xff]
      %v375 = vld [vmem:[%s309 + $0x28] sm:$0xff]
      %v376 = vld [vmem:[%s309 + $0x30] sm:$0xff]
      %v377 = vld [vmem:[%s309 + $0x38] sm:$0xff]
      %v378 = vld [vmem:[%s309 + $0x40] sm:$0xff]
      %v379 = vld [vmem:[%s309 + $0x48] sm:$0xff]
      %v380 = vld [vmem:[%s309 + $0x50] sm:$0xff]
      %v381 = vld [vmem:[%s309 + $0x58] sm:$0xff]
      %v382 = vld [vmem:[%s309 + $0x60] sm:$0xff]
      %v383 = vld [vmem:[%s309 + $0x68] sm:$0xff]
      %v384 = vld [vmem:[%s309 + $0x70] sm:$0xff]
      %v385 = vld [vmem:[%s309 + $0x78] sm:$0xff]
      %v386 = vld [vmem:[%s309 + $0x80] sm:$0xff]
      %v387 = vld [vmem:[%s309 + $0x88] sm:$0xff]
      %v388 = vld [vmem:[%s309 + $0x90] sm:$0xff]
      %v389 = vld [vmem:[%s309 + $0x98] sm:$0xff]
      %v390 = vld [vmem:[%s309 + $0xa0] sm:$0xff]
      %v391 = vld [vmem:[%s309 + $0xa8] sm:$0xff]
      %v392 = vld [vmem:[%s309 + $0xb0] sm:$0xff]
      %v393 = vld [vmem:[%s309 + $0xb8] sm:$0xff]
      %v394 = vld [vmem:[%s309 + $0xc0] sm:$0xff]
      %v395 = vld [vmem:[%s309 + $0xc8] sm:$0xff]
      %v396 = vld [vmem:[%s309 + $0xd0] sm:$0xff]
      %v397 = vld [vmem:[%s309 + $0xd8] sm:$0xff]
      %v398 = vld [vmem:[%s309 + $0xe0] sm:$0xff]
      %v399 = vld [vmem:[%s309 + $0xe8] sm:$0xff]
      %v400 = vld [vmem:[%s309 + $0xf0] sm:$0xff]
      %v401 = vld [vmem:[%s309 + $0xf8] sm:$0xff]
      %v403 = vperm.slane %v332, 0
      %v405 = vmul.f32 %v370, %v403
      %v406 = vmul.f32 %v371, %v403
      %v407 = vmul.f32 %v372, %v403
      %v408 = vmul.f32 %v373, %v403
      %v409 = vmul.f32 %v374, %v403
      %v410 = vmul.f32 %v375, %v403
      %v411 = vmul.f32 %v376, %v403
      %v412 = vmul.f32 %v377, %v403
      %v413 = vmul.f32 %v378, %v403
      %v414 = vmul.f32 %v379, %v403
      %v415 = vmul.f32 %v380, %v403
      %v416 = vmul.f32 %v381, %v403
      %v417 = vmul.f32 %v382, %v403
      %v418 = vmul.f32 %v383, %v403
      %v419 = vmul.f32 %v384, %v403
      %v420 = vmul.f32 %v385, %v403
      %v421 = vmul.f32 %v386, %v403
      %v422 = vmul.f32 %v387, %v403
      %v423 = vmul.f32 %v388, %v403
      %v424 = vmul.f32 %v389, %v403
      %v425 = vmul.f32 %v390, %v403
      %v426 = vmul.f32 %v391, %v403
      %v427 = vmul.f32 %v392, %v403
      %v428 = vmul.f32 %v393, %v403
      %v429 = vmul.f32 %v394, %v403
      %v430 = vmul.f32 %v395, %v403
      %v431 = vmul.f32 %v396, %v403
      %v432 = vmul.f32 %v397, %v403
      %v433 = vmul.f32 %v398, %v403
      %v434 = vmul.f32 %v399, %v403
      %v435 = vmul.f32 %v400, %v403
      %v436 = vmul.f32 %v401, %v403
      %v438 = vperm.slane %v333, 0
      %v440 = vadd.f32 %v405, %v438
      %v441 = vadd.f32 %v406, %v438
      %v442 = vadd.f32 %v407, %v438
      %v443 = vadd.f32 %v408, %v438
      %v444 = vadd.f32 %v409, %v438
      %v445 = vadd.f32 %v410, %v438
      %v446 = vadd.f32 %v411, %v438
      %v447 = vadd.f32 %v412, %v438
      %v448 = vadd.f32 %v413, %v438
      %v449 = vadd.f32 %v414, %v438
      %v450 = vadd.f32 %v415, %v438
      %v451 = vadd.f32 %v416, %v438
      %v452 = vadd.f32 %v417, %v438
      %v453 = vadd.f32 %v418, %v438
      %v454 = vadd.f32 %v419, %v438
      %v455 = vadd.f32 %v420, %v438
      %v456 = vadd.f32 %v421, %v438
      %v457 = vadd.f32 %v422, %v438
      %v458 = vadd.f32 %v423, %v438
      %v459 = vadd.f32 %v424, %v438
      %v460 = vadd.f32 %v425, %v438
      %v461 = vadd.f32 %v426, %v438
      %v462 = vadd.f32 %v427, %v438
      %v463 = vadd.f32 %v428, %v438
      %v464 = vadd.f32 %v429, %v438
      %v465 = vadd.f32 %v430, %v438
      %v466 = vadd.f32 %v431, %v438
      %v467 = vadd.f32 %v432, %v438
      %v468 = vadd.f32 %v433, %v438
      %v469 = vadd.f32 %v434, %v438
      %v470 = vadd.f32 %v435, %v438
      %v471 = vadd.f32 %v436, %v438
      %v472 = vmax.f32 %v440, 0.0
      %v473 = vmax.f32 %v441, 0.0
      %v474 = vmax.f32 %v442, 0.0
      %v475 = vmax.f32 %v443, 0.0
      %v476 = vmax.f32 %v444, 0.0
      %v477 = vmax.f32 %v445, 0.0
      %v478 = vmax.f32 %v446, 0.0
      %v479 = vmax.f32 %v447, 0.0
      %v480 = vmax.f32 %v448, 0.0
      %v481 = vmax.f32 %v449, 0.0
      %v482 = vmax.f32 %v450, 0.0
      %v483 = vmax.f32 %v451, 0.0
      %v484 = vmax.f32 %v452, 0.0
      %v485 = vmax.f32 %v453, 0.0
      %v486 = vmax.f32 %v454, 0.0
      %v487 = vmax.f32 %v455, 0.0
      %v488 = vmax.f32 %v456, 0.0
      %v489 = vmax.f32 %v457, 0.0
      %v490 = vmax.f32 %v458, 0.0
      %v491 = vmax.f32 %v459, 0.0
      %v492 = vmax.f32 %v460, 0.0
      %v493 = vmax.f32 %v461, 0.0
      %v494 = vmax.f32 %v462, 0.0
      %v495 = vmax.f32 %v463, 0.0
      %v496 = vmax.f32 %v464, 0.0
      %v497 = vmax.f32 %v465, 0.0
      %v498 = vmax.f32 %v466, 0.0
      %v499 = vmax.f32 %v467, 0.0
      %v500 = vmax.f32 %v468, 0.0
      %v501 = vmax.f32 %v469, 0.0
      %v502 = vmax.f32 %v470, 0.0
      %v503 = vmax.f32 %v471, 0.0
      %s504 = scalar_lea.vmem [#allocation2], 24
      %505 = vst [vmem:[%s504 + $0x1] sm:$0xff] %v472
      %506 = vst [vmem:[%s504 + $0x9] sm:$0xff] %v473
      %507 = vst [vmem:[%s504 + $0x19] sm:$0xff] %v474
      %508 = vst [vmem:[%s504 + $0x21] sm:$0xff] %v475
      %509 = vst [vmem:[%s504 + $0x31] sm:$0xff] %v476
      %510 = vst [vmem:[%s504 + $0x39] sm:$0xff] %v477
      %511 = vst [vmem:[%s504 + $0x49] sm:$0xff] %v478
      %512 = vst [vmem:[%s504 + $0x51] sm:$0xff] %v479
      %513 = vst [vmem:[%s504 + $0x61] sm:$0xff] %v480
      %514 = vst [vmem:[%s504 + $0x69] sm:$0xff] %v481
      %515 = vst [vmem:[%s504 + $0x79] sm:$0xff] %v482
      %516 = vst [vmem:[%s504 + $0x81] sm:$0xff] %v483
      %517 = vst [vmem:[%s504 + $0x91] sm:$0xff] %v484
      %518 = vst [vmem:[%s504 + $0x99] sm:$0xff] %v485
      %519 = vst [vmem:[%s504 + $0xa9] sm:$0xff] %v486
      %520 = vst [vmem:[%s504 + $0xb1] sm:$0xff] %v487
      %521 = vst [vmem:[%s504 + $0xc1] sm:$0xff] %v488
      %522 = vst [vmem:[%s504 + $0xc9] sm:$0xff] %v489
      %523 = vst [vmem:[%s504 + $0xd9] sm:$0xff] %v490
      %524 = vst [vmem:[%s504 + $0xe1] sm:$0xff] %v491
      %525 = vst [vmem:[%s504 + $0xf1] sm:$0xff] %v492
      %526 = vst [vmem:[%s504 + $0xf9] sm:$0xff] %v493
      %527 = vst [vmem:[%s504 + $0x109] sm:$0xff] %v494
      %528 = vst [vmem:[%s504 + $0x111] sm:$0xff] %v495
      %529 = vst [vmem:[%s504 + $0x121] sm:$0xff] %v496
      %530 = vst [vmem:[%s504 + $0x129] sm:$0xff] %v497
      %531 = vst [vmem:[%s504 + $0x139] sm:$0xff] %v498
      %532 = vst [vmem:[%s504 + $0x141] sm:$0xff] %v499
      %533 = vst [vmem:[%s504 + $0x151] sm:$0xff] %v500
      %534 = vst [vmem:[%s504 + $0x159] sm:$0xff] %v501
      %535 = vst [vmem:[%s504 + $0x169] sm:$0xff] %v502
      %536 = vst [vmem:[%s504 + $0x171] sm:$0xff] %v503
      %v537 = vld [vmem:[%s316] sm:$0xff]
      %v538 = vld [vmem:[%s316 + $0x8] sm:$0xff]
      %v539 = vmul.f32 %v537, %v403
      %v540 = vmul.f32 %v538, %v403
      %v541 = vadd.f32 %v539, %v438
      %v542 = vadd.f32 %v540, %v438
      %v543 = vmax.f32 %v541, 0.0
      %v544 = vmax.f32 %v542, 0.0
      %p545 = scmp.eq.s32.totalorder %s23, 0
      %s546 = scalar_select %p545, 1, 0
      %v547 = vstv %s546
      %vm548 = vcmp.eq.s32.totalorder %v547, 1
      %v549 = vsel %vm548, 0.0, %v543
      %v550 = vsel %vm548, 0.0, %v544
      %551 = vst [vmem:[#allocation2 + $0x1] sm:$0xff] %v549
      %552 = vst [vmem:[#allocation2 + $0x9] sm:$0xff] %v550
      %s553 = scalar_lea.vmem %s316, 16
      %v554 = vld [vmem:[%s553] sm:$0xff]
      %v555 = vld [vmem:[%s553 + $0x8] sm:$0xff]
      %v556 = vmul.f32 %v554, %v403
      %v557 = vmul.f32 %v555, %v403
      %v558 = vadd.f32 %v556, %v438
      %v559 = vadd.f32 %v557, %v438
      %v560 = vmax.f32 %v558, 0.0
      %v561 = vmax.f32 %v559, 0.0
      %v562 = vsel %vm548, 0.0, %v560
      %v563 = vsel %vm548, 0.0, %v561
      %s564 = scalar_lea.vmem [#allocation2], 408
      %565 = vst [vmem:[%s564 + $0x1] sm:$0xff] %v562
      %566 = vst [vmem:[%s564 + $0x9] sm:$0xff] %v563
      %v567 = vld [vmem:[#allocation2] sm:$0xff]
      %v568 = vld [vmem:[#allocation2 + $0x8] sm:$0xff]
      %v569 = vld [vmem:[#allocation2 + $0x10] sm:$0x3]
      %v570 = vld [vmem:[#allocation2 + $0x18] sm:$0xff]
      %v571 = vld [vmem:[#allocation2 + $0x20] sm:$0xff]
      %v572 = vld [vmem:[#allocation2 + $0x28] sm:$0x3]
      %v573 = vld [vmem:[#allocation2 + $0x30] sm:$0xff]
      %v574 = vld [vmem:[#allocation2 + $0x38] sm:$0xff]
      %v575 = vld [vmem:[#allocation2 + $0x40] sm:$0x3]
      %v576 = vld [vmem:[#allocation2 + $0x48] sm:$0xff]
      %v577 = vld [vmem:[#allocation2 + $0x50] sm:$0xff]
      %v578 = vld [vmem:[#allocation2 + $0x58] sm:$0x3]
      %v579 = vld [vmem:[#allocation2 + $0x60] sm:$0xff]
      %v580 = vld [vmem:[#allocation2 + $0x68] sm:$0xff]
      %v581 = vld [vmem:[#allocation2 + $0x70] sm:$0x3]
      %v582 = vld [vmem:[#allocation2 + $0x78] sm:$0xff]
      %v583 = vld [vmem:[#allocation2 + $0x80] sm:$0xff]
      %v584 = vld [vmem:[#allocation2 + $0x88] sm:$0x3]
      %v585 = vld [vmem:[#allocation2 + $0x90] sm:$0xff]
      %v586 = vld [vmem:[#allocation2 + $0x98] sm:$0xff]
      %v587 = vld [vmem:[#allocation2 + $0xa0] sm:$0x3]
      %v588 = vld [vmem:[#allocation2 + $0xa8] sm:$0xff]
      %v589 = vld [vmem:[#allocation2 + $0xb0] sm:$0xff]
      %v590 = vld [vmem:[#allocation2 + $0xb8] sm:$0x3]
      %v591 = vld [vmem:[#allocation2 + $0xc0] sm:$0xff]
      %v592 = vld [vmem:[#allocation2 + $0xc8] sm:$0xff]
      %v593 = vld [vmem:[#allocation2 + $0xd0] sm:$0x3]
      %v594 = vld [vmem:[#allocation2 + $0xd8] sm:$0xff]
      %v595 = vld [vmem:[#allocation2 + $0xe0] sm:$0xff]
      %v596 = vld [vmem:[#allocation2 + $0xe8] sm:$0x3]
      %v597 = vld [vmem:[#allocation2 + $0xf0] sm:$0xff]
      %v598 = vld [vmem:[#allocation2 + $0xf8] sm:$0xff]
      %v599 = vld [vmem:[#allocation2 + $0x100] sm:$0x3]
      %v600 = vld [vmem:[#allocation2 + $0x108] sm:$0xff]
      %v601 = vld [vmem:[#allocation2 + $0x110] sm:$0xff]
      %v602 = vld [vmem:[#allocation2 + $0x118] sm:$0x3]
      %v603 = vld [vmem:[#allocation2 + $0x120] sm:$0xff]
      %v604 = vld [vmem:[#allocation2 + $0x128] sm:$0xff]
      %v605 = vld [vmem:[#allocation2 + $0x130] sm:$0x3]
      %v606 = vld [vmem:[#allocation2 + $0x138] sm:$0xff]
      %v607 = vld [vmem:[#allocation2 + $0x140] sm:$0xff]
      %v608 = vld [vmem:[#allocation2 + $0x148] sm:$0x3]
      %v609 = vld [vmem:[#allocation2 + $0x150] sm:$0xff]
      %v610 = vld [vmem:[#allocation2 + $0x158] sm:$0xff]
      %v611 = vld [vmem:[#allocation2 + $0x160] sm:$0x3]
      %v612 = vld [vmem:[#allocation2 + $0x168] sm:$0xff]
      %v613 = vld [vmem:[#allocation2 + $0x170] sm:$0xff]
      %v614 = vld [vmem:[#allocation2 + $0x178] sm:$0x3]
      %v615 = vld [vmem:[#allocation2 + $0x180] sm:$0xff]
      %v616 = vld [vmem:[#allocation2 + $0x188] sm:$0xff]
      %v617 = vld [vmem:[#allocation2 + $0x190] sm:$0x3]
      %v618 = vld [vmem:[#allocation2 + $0x198] sm:$0xff]
      %v619 = vld [vmem:[#allocation2 + $0x1a0] sm:$0xff]
      %v620 = vld [vmem:[#allocation2 + $0x1a8] sm:$0x3]
      %vm669 = vcmask 1046528
      %v670 = vrot.slane %v567, 1
      %v671 = vrot.slane %v568, 1
      %v672 = vsel %vm669, %v670, %v671
      %v673 = vrot.slane %v569, 1
      %v674 = vsel %vm669, %v671, %v673
      %v675 = vrot.slane %v570, 1
      %v676 = vrot.slane %v571, 1
      %v677 = vsel %vm669, %v675, %v676
      %v678 = vrot.slane %v572, 1
      %v679 = vsel %vm669, %v676, %v678
      %v680 = vrot.slane %v573, 1
      %v681 = vrot.slane %v574, 1
      %v682 = vsel %vm669, %v680, %v681
      %v683 = vrot.slane %v575, 1
      %v684 = vsel %vm669, %v681, %v683
      %v685 = vrot.slane %v576, 1
      %v686 = vrot.slane %v577, 1
      %v687 = vsel %vm669, %v685, %v686
      %v688 = vrot.slane %v578, 1
      %v689 = vsel %vm669, %v686, %v688
      %v690 = vrot.slane %v579, 1
      %v691 = vrot.slane %v580, 1
      %v692 = vsel %vm669, %v690, %v691
      %v693 = vrot.slane %v581, 1
      %v694 = vsel %vm669, %v691, %v693
      %v695 = vrot.slane %v582, 1
      %v696 = vrot.slane %v583, 1
      %v697 = vsel %vm669, %v695, %v696
      %v698 = vrot.slane %v584, 1
      %v699 = vsel %vm669, %v696, %v698
      %v700 = vrot.slane %v585, 1
      %v701 = vrot.slane %v586, 1
      %v702 = vsel %vm669, %v700, %v701
      %v703 = vrot.slane %v587, 1
      %v704 = vsel %vm669, %v701, %v703
      %v705 = vrot.slane %v588, 1
      %v706 = vrot.slane %v589, 1
      %v707 = vsel %vm669, %v705, %v706
      %v708 = vrot.slane %v590, 1
      %v709 = vsel %vm669, %v706, %v708
      %v710 = vrot.slane %v591, 1
      %v711 = vrot.slane %v592, 1
      %v712 = vsel %vm669, %v710, %v711
      %v713 = vrot.slane %v593, 1
      %v714 = vsel %vm669, %v711, %v713
      %v715 = vrot.slane %v594, 1
      %v716 = vrot.slane %v595, 1
      %v717 = vsel %vm669, %v715, %v716
      %v718 = vrot.slane %v596, 1
      %v719 = vsel %vm669, %v716, %v718
      %v720 = vrot.slane %v597, 1
      %v721 = vrot.slane %v598, 1
      %v722 = vsel %vm669, %v720, %v721
      %v723 = vrot.slane %v599, 1
      %v724 = vsel %vm669, %v721, %v723
      %v725 = vrot.slane %v600, 1
      %v726 = vrot.slane %v601, 1
      %v727 = vsel %vm669, %v725, %v726
      %v728 = vrot.slane %v602, 1
      %v729 = vsel %vm669, %v726, %v728
      %v730 = vrot.slane %v603, 1
      %v731 = vrot.slane %v604, 1
      %v732 = vsel %vm669, %v730, %v731
      %v733 = vrot.slane %v605, 1
      %v734 = vsel %vm669, %v731, %v733
      %v735 = vrot.slane %v606, 1
      %v736 = vrot.slane %v607, 1
      %v737 = vsel %vm669, %v735, %v736
      %v738 = vrot.slane %v608, 1
      %v739 = vsel %vm669, %v736, %v738
      %v740 = vrot.slane %v609, 1
      %v741 = vrot.slane %v610, 1
      %v742 = vsel %vm669, %v740, %v741
      %v743 = vrot.slane %v611, 1
      %v744 = vsel %vm669, %v741, %v743
      %v745 = vrot.slane %v612, 1
      %v746 = vrot.slane %v613, 1
      %v747 = vsel %vm669, %v745, %v746
      %v748 = vrot.slane %v614, 1
      %v749 = vsel %vm669, %v746, %v748
      %vm782 = vcmask 1045504
      %v783 = vrot.slane %v567, 2
      %v784 = vrot.slane %v568, 2
      %v785 = vsel %vm782, %v783, %v784
      %v786 = vrot.slane %v569, 2
      %v787 = vsel %vm782, %v784, %v786
      %v788 = vrot.slane %v570, 2
      %v789 = vrot.slane %v571, 2
      %v790 = vsel %vm782, %v788, %v789
      %v791 = vrot.slane %v572, 2
      %v792 = vsel %vm782, %v789, %v791
      %v793 = vrot.slane %v573, 2
      %v794 = vrot.slane %v574, 2
      %v795 = vsel %vm782, %v793, %v794
      %v796 = vrot.slane %v575, 2
      %v797 = vsel %vm782, %v794, %v796
      %v798 = vrot.slane %v576, 2
      %v799 = vrot.slane %v577, 2
      %v800 = vsel %vm782, %v798, %v799
      %v801 = vrot.slane %v578, 2
      %v802 = vsel %vm782, %v799, %v801
      %v803 = vrot.slane %v579, 2
      %v804 = vrot.slane %v580, 2
      %v805 = vsel %vm782, %v803, %v804
      %v806 = vrot.slane %v581, 2
      %v807 = vsel %vm782, %v804, %v806
      %v808 = vrot.slane %v582, 2
      %v809 = vrot.slane %v583, 2
      %v810 = vsel %vm782, %v808, %v809
      %v811 = vrot.slane %v584, 2
      %v812 = vsel %vm782, %v809, %v811
      %v813 = vrot.slane %v585, 2
      %v814 = vrot.slane %v586, 2
      %v815 = vsel %vm782, %v813, %v814
      %v816 = vrot.slane %v587, 2
      %v817 = vsel %vm782, %v814, %v816
      %v818 = vrot.slane %v588, 2
      %v819 = vrot.slane %v589, 2
      %v820 = vsel %vm782, %v818, %v819
      %v821 = vrot.slane %v590, 2
      %v822 = vsel %vm782, %v819, %v821
      %v823 = vrot.slane %v591, 2
      %v824 = vrot.slane %v592, 2
      %v825 = vsel %vm782, %v823, %v824
      %v826 = vrot.slane %v593, 2
      %v827 = vsel %vm782, %v824, %v826
      %v828 = vrot.slane %v594, 2
      %v829 = vrot.slane %v595, 2
      %v830 = vsel %vm782, %v828, %v829
      %v831 = vrot.slane %v596, 2
      %v832 = vsel %vm782, %v829, %v831
      %v833 = vrot.slane %v597, 2
      %v834 = vrot.slane %v598, 2
      %v835 = vsel %vm782, %v833, %v834
      %v836 = vrot.slane %v599, 2
      %v837 = vsel %vm782, %v834, %v836
      %v838 = vrot.slane %v600, 2
      %v839 = vrot.slane %v601, 2
      %v840 = vsel %vm782, %v838, %v839
      %v841 = vrot.slane %v602, 2
      %v842 = vsel %vm782, %v839, %v841
      %v843 = vrot.slane %v603, 2
      %v844 = vrot.slane %v604, 2
      %v845 = vsel %vm782, %v843, %v844
      %v846 = vrot.slane %v605, 2
      %v847 = vsel %vm782, %v844, %v846
      %v848 = vrot.slane %v606, 2
      %v849 = vrot.slane %v607, 2
      %v850 = vsel %vm782, %v848, %v849
      %v851 = vrot.slane %v608, 2
      %v852 = vsel %vm782, %v849, %v851
      %v853 = vrot.slane %v609, 2
      %v854 = vrot.slane %v610, 2
      %v855 = vsel %vm782, %v853, %v854
      %v856 = vrot.slane %v611, 2
      %v857 = vsel %vm782, %v854, %v856
      %v858 = vrot.slane %v612, 2
      %v859 = vrot.slane %v613, 2
      %v860 = vsel %vm782, %v858, %v859
      %v861 = vrot.slane %v614, 2
      %v862 = vsel %vm782, %v859, %v861
      %v895 = vld [vmem:[%s4] sm:$0xff]
      %v896 = vld [vmem:[%s4 + $0x8] sm:$0xff]
      %v897 = vld [vmem:[%s4 + $0x10] sm:$0xff]
      %v898 = vld [vmem:[%s4 + $0x18] sm:$0xff]
      %v899 = vld [vmem:[%s4 + $0x20] sm:$0xff]
      %v900 = vld [vmem:[%s4 + $0x28] sm:$0xff]
      %v901 = vld [vmem:[%s4 + $0x30] sm:$0xff]
      %v902 = vld [vmem:[%s4 + $0x38] sm:$0xff]
      %v903 = vld [vmem:[%s4 + $0x40] sm:$0xff]
      %v904 = vld [vmem:[%s4 + $0x48] sm:$0xff]
      %v905 = vld [vmem:[%s4 + $0x50] sm:$0xff]
      %v906 = vld [vmem:[%s4 + $0x58] sm:$0xff]
      %v907 = vld [vmem:[%s4 + $0x60] sm:$0xff]
      %v908 = vld [vmem:[%s4 + $0x68] sm:$0xff]
      %v909 = vld [vmem:[%s4 + $0x70] sm:$0xff]
      %v910 = vld [vmem:[%s4 + $0x78] sm:$0xff]
      %v911 = vld [vmem:[%s4 + $0x80] sm:$0xff]
      %v912 = vld [vmem:[%s4 + $0x88] sm:$0xff]
      %v913 = vld [vmem:[%s4 + $0x90] sm:$0xff]
      %v914 = vld [vmem:[%s4 + $0x98] sm:$0xff]
      %v915 = vld [vmem:[%s4 + $0xa0] sm:$0xff]
      %v916 = vld [vmem:[%s4 + $0xa8] sm:$0xff]
      %v917 = vld [vmem:[%s4 + $0xb0] sm:$0xff]
      %v918 = vld [vmem:[%s4 + $0xb8] sm:$0xff]
      %v919 = vld [vmem:[%s4 + $0xc0] sm:$0xff]
      %v920 = vld [vmem:[%s4 + $0xc8] sm:$0xff]
      %v921 = vld [vmem:[%s4 + $0xd0] sm:$0xff]
      %v922 = vld [vmem:[%s4 + $0xd8] sm:$0xff]
      %v923 = vld [vmem:[%s4 + $0xe0] sm:$0xff]
      %v924 = vld [vmem:[%s4 + $0xe8] sm:$0xff]
      %v925 = vld [vmem:[%s4 + $0xf0] sm:$0xff]
      %v926 = vld [vmem:[%s4 + $0xf8] sm:$0xff]
      %v927 = vld [vmem:[%s4 + $0x100] sm:$0xff]
      %v928 = vld [vmem:[%s4 + $0x108] sm:$0xff]
      %v929 = vld [vmem:[%s4 + $0x110] sm:$0xff]
      %v930 = vld [vmem:[%s4 + $0x118] sm:$0xff]
      %v931 = vld [vmem:[%s4 + $0x120] sm:$0xff]
      %v932 = vld [vmem:[%s4 + $0x128] sm:$0xff]
      %v933 = vld [vmem:[%s4 + $0x130] sm:$0xff]
      %v934 = vld [vmem:[%s4 + $0x138] sm:$0xff]
      %v935 = vld [vmem:[%s4 + $0x140] sm:$0xff]
      %v936 = vld [vmem:[%s4 + $0x148] sm:$0xff]
      %v937 = vld [vmem:[%s4 + $0x150] sm:$0xff]
      %v938 = vld [vmem:[%s4 + $0x158] sm:$0xff]
      %v939 = vld [vmem:[%s4 + $0x160] sm:$0xff]
      %v940 = vld [vmem:[%s4 + $0x168] sm:$0xff]
      %v941 = vld [vmem:[%s4 + $0x170] sm:$0xff]
      %v942 = vld [vmem:[%s4 + $0x178] sm:$0xff]
      %v946 = vrot.slane %v615, 1
      %v947 = vrot.slane %v616, 1
      %v948 = vsel %vm669, %v946, %v947
      %v949 = vrot.slane %v617, 1
      %v950 = vsel %vm669, %v947, %v949
      %v953 = vrot.slane %v615, 2
      %v954 = vrot.slane %v616, 2
      %v955 = vsel %vm782, %v953, %v954
      %v956 = vrot.slane %v617, 2
      %v957 = vsel %vm782, %v954, %v956
      %s960 = scalar_lea.vmem %s4, 384
      %v961 = vld [vmem:[%s960] sm:$0xff]
      %v962 = vld [vmem:[%s960 + $0x8] sm:$0xff]
      %v963 = vld [vmem:[%s960 + $0x10] sm:$0xff]
      %v964 = vld [vmem:[%s960 + $0x18] sm:$0xff]
      %v965 = vld [vmem:[%s960 + $0x20] sm:$0xff]
      %v966 = vld [vmem:[%s960 + $0x28] sm:$0xff]
      %v967 = vld [vmem:[%s960 + $0x30] sm:$0xff]
      %v968 = vld [vmem:[%s960 + $0x38] sm:$0xff]
      %v969 = vld [vmem:[%s960 + $0x40] sm:$0xff]
      %v970 = vld [vmem:[%s960 + $0x48] sm:$0xff]
      %v971 = vld [vmem:[%s960 + $0x50] sm:$0xff]
      %v972 = vld [vmem:[%s960 + $0x58] sm:$0xff]
      %v973 = vld [vmem:[%s960 + $0x60] sm:$0xff]
      %v974 = vld [vmem:[%s960 + $0x68] sm:$0xff]
      %v975 = vld [vmem:[%s960 + $0x70] sm:$0xff]
      %v976 = vld [vmem:[%s960 + $0x78] sm:$0xff]
      %v977 = vld [vmem:[%s960 + $0x80] sm:$0xff]
      %v978 = vld [vmem:[%s960 + $0x88] sm:$0xff]
      %v979 = vld [vmem:[%s960 + $0x90] sm:$0xff]
      %v980 = vld [vmem:[%s960 + $0x98] sm:$0xff]
      %v981 = vld [vmem:[%s960 + $0xa0] sm:$0xff]
      %v982 = vld [vmem:[%s960 + $0xa8] sm:$0xff]
      %v983 = vld [vmem:[%s960 + $0xb0] sm:$0xff]
      %v984 = vld [vmem:[%s960 + $0xb8] sm:$0xff]
      %v985 = vld [vmem:[%s960 + $0xc0] sm:$0xff]
      %v986 = vld [vmem:[%s960 + $0xc8] sm:$0xff]
      %v987 = vld [vmem:[%s960 + $0xd0] sm:$0xff]
      %v988 = vld [vmem:[%s960 + $0xd8] sm:$0xff]
      %v989 = vld [vmem:[%s960 + $0xe0] sm:$0xff]
      %v990 = vld [vmem:[%s960 + $0xe8] sm:$0xff]
      %v991 = vld [vmem:[%s960 + $0xf0] sm:$0xff]
      %v992 = vld [vmem:[%s960 + $0xf8] sm:$0xff]
      %v993 = vld [vmem:[%s960 + $0x100] sm:$0xff]
      %v994 = vld [vmem:[%s960 + $0x108] sm:$0xff]
      %v995 = vld [vmem:[%s960 + $0x110] sm:$0xff]
      %v996 = vld [vmem:[%s960 + $0x118] sm:$0xff]
      %v997 = vld [vmem:[%s960 + $0x120] sm:$0xff]
      %v998 = vld [vmem:[%s960 + $0x128] sm:$0xff]
      %v999 = vld [vmem:[%s960 + $0x130] sm:$0xff]
      %v1000 = vld [vmem:[%s960 + $0x138] sm:$0xff]
      %v1001 = vld [vmem:[%s960 + $0x140] sm:$0xff]
      %v1002 = vld [vmem:[%s960 + $0x148] sm:$0xff]
      %v1003 = vld [vmem:[%s960 + $0x150] sm:$0xff]
      %v1004 = vld [vmem:[%s960 + $0x158] sm:$0xff]
      %v1005 = vld [vmem:[%s960 + $0x160] sm:$0xff]
      %v1006 = vld [vmem:[%s960 + $0x168] sm:$0xff]
      %v1007 = vld [vmem:[%s960 + $0x170] sm:$0xff]
      %v1008 = vld [vmem:[%s960 + $0x178] sm:$0xff]
      %1009 = vmatpush.msra.mxu0 %v976
      %1010 = vmatpush.msra.mxu0 %v975
      %1011 = vmatpush.msra.mxu0 %v974
      %1012 = vmatpush.msra.mxu0 %v973
      %1013 = vmatpush.msra.mxu0 %v972
      %1014 = vmatpush.msra.mxu0 %v971
      %1015 = vmatpush.msra.mxu0 %v970
      %1016 = vmatpush.msra.mxu0 %v969
      %1017 = vmatpush.msra.mxu0 %v968
      %1018 = vmatpush.msra.mxu0 %v967
      %1019 = vmatpush.msra.mxu0 %v966
      %1020 = vmatpush.msra.mxu0 %v965
      %1021 = vmatpush.msra.mxu0 %v964
      %1022 = vmatpush.msra.mxu0 %v963
      %1023 = vmatpush.msra.mxu0 %v962
      %1024 = vmatpush.msra.mxu0 %v961
      %1025 = vmatmul.f32.gmra.mxu0 %v570
      %v1026 = vpop.f32.mrf.mxu0
      %v1027 = vadd.f32 0.0, %v1026
      %1028 = vmatmul.f32.gmra.mxu0 %v571
      %v1029 = vpop.f32.mrf.mxu0
      %v1030 = vadd.f32 0.0, %v1029
      %1031 = vmatmul.f32.gmra.mxu0 %v573
      %v1032 = vpop.f32.mrf.mxu0
      %v1033 = vadd.f32 0.0, %v1032
      %1034 = vmatmul.f32.gmra.mxu0 %v574
      %v1035 = vpop.f32.mrf.mxu0
      %v1036 = vadd.f32 0.0, %v1035
      %1037 = vmatmul.f32.gmra.mxu0 %v576
      %v1038 = vpop.f32.mrf.mxu0
      %v1039 = vadd.f32 0.0, %v1038
      %1040 = vmatmul.f32.gmra.mxu0 %v577
      %v1041 = vpop.f32.mrf.mxu0
      %v1042 = vadd.f32 0.0, %v1041
      %1043 = vmatmul.f32.gmra.mxu0 %v579
      %v1044 = vpop.f32.mrf.mxu0
      %v1045 = vadd.f32 0.0, %v1044
      %1046 = vmatmul.f32.gmra.mxu0 %v580
      %v1047 = vpop.f32.mrf.mxu0
      %v1048 = vadd.f32 0.0, %v1047
      %1049 = vmatmul.f32.gmra.mxu0 %v582
      %v1050 = vpop.f32.mrf.mxu0
      %v1051 = vadd.f32 0.0, %v1050
      %1052 = vmatmul.f32.gmra.mxu0 %v583
      %v1053 = vpop.f32.mrf.mxu0
      %v1054 = vadd.f32 0.0, %v1053
      %1055 = vmatmul.f32.gmra.mxu0 %v585
      %v1056 = vpop.f32.mrf.mxu0
      %v1057 = vadd.f32 0.0, %v1056
      %1058 = vmatmul.f32.gmra.mxu0 %v586
      %v1059 = vpop.f32.mrf.mxu0
      %v1060 = vadd.f32 0.0, %v1059
      %1061 = vmatmul.f32.gmra.mxu0 %v588
      %v1062 = vpop.f32.mrf.mxu0
      %v1063 = vadd.f32 0.0, %v1062
      %1064 = vmatmul.f32.gmra.mxu0 %v589
      %v1065 = vpop.f32.mrf.mxu0
      %v1066 = vadd.f32 0.0, %v1065
      %1067 = vmatmul.f32.gmra.mxu0 %v591
      %v1068 = vpop.f32.mrf.mxu0
      %v1069 = vadd.f32 0.0, %v1068
      %1070 = vmatmul.f32.gmra.mxu0 %v592
      %v1071 = vpop.f32.mrf.mxu0
      %v1072 = vadd.f32 0.0, %v1071
      %1073 = vmatmul.f32.gmra.mxu0 %v594
      %v1074 = vpop.f32.mrf.mxu0
      %v1075 = vadd.f32 0.0, %v1074
      %1076 = vmatmul.f32.gmra.mxu0 %v595
      %v1077 = vpop.f32.mrf.mxu0
      %v1078 = vadd.f32 0.0, %v1077
      %1079 = vmatmul.f32.gmra.mxu0 %v597
      %v1080 = vpop.f32.mrf.mxu0
      %v1081 = vadd.f32 0.0, %v1080
      %1082 = vmatmul.f32.gmra.mxu0 %v598
      %v1083 = vpop.f32.mrf.mxu0
      %v1084 = vadd.f32 0.0, %v1083
      %1085 = vmatmul.f32.gmra.mxu0 %v600
      %v1086 = vpop.f32.mrf.mxu0
      %v1087 = vadd.f32 0.0, %v1086
      %1088 = vmatmul.f32.gmra.mxu0 %v601
      %v1089 = vpop.f32.mrf.mxu0
      %v1090 = vadd.f32 0.0, %v1089
      %1091 = vmatmul.f32.gmra.mxu0 %v603
      %v1092 = vpop.f32.mrf.mxu0
      %v1093 = vadd.f32 0.0, %v1092
      %1094 = vmatmul.f32.gmra.mxu0 %v604
      %v1095 = vpop.f32.mrf.mxu0
      %v1096 = vadd.f32 0.0, %v1095
      %1097 = vmatmul.f32.gmra.mxu0 %v606
      %v1098 = vpop.f32.mrf.mxu0
      %v1099 = vadd.f32 0.0, %v1098
      %1100 = vmatmul.f32.gmra.mxu0 %v607
      %v1101 = vpop.f32.mrf.mxu0
      %v1102 = vadd.f32 0.0, %v1101
      %1103 = vmatmul.f32.gmra.mxu0 %v609
      %v1104 = vpop.f32.mrf.mxu0
      %v1105 = vadd.f32 0.0, %v1104
      %1106 = vmatmul.f32.gmra.mxu0 %v610
      %v1107 = vpop.f32.mrf.mxu0
      %v1108 = vadd.f32 0.0, %v1107
      %1109 = vmatmul.f32.gmra.mxu0 %v612
      %v1110 = vpop.f32.mrf.mxu0
      %v1111 = vadd.f32 0.0, %v1110
      %1112 = vmatmul.f32.gmra.mxu0 %v613
      %v1113 = vpop.f32.mrf.mxu0
      %v1114 = vadd.f32 0.0, %v1113
      %1115 = vmatmul.f32.gmra.mxu0 %v615
      %v1116 = vpop.f32.mrf.mxu0
      %v1117 = vadd.f32 0.0, %v1116
      %1118 = vmatmul.f32.gmra.mxu0 %v616
      %v1119 = vpop.f32.mrf.mxu0
      %v1120 = vadd.f32 0.0, %v1119
      %1121 = vdwg.mxu0
      %1122 = vmatpush.msra.mxu0 %v992
      %1123 = vmatpush.msra.mxu0 %v991
      %1124 = vmatpush.msra.mxu0 %v990
      %1125 = vmatpush.msra.mxu0 %v989
      %1126 = vmatpush.msra.mxu0 %v988
      %1127 = vmatpush.msra.mxu0 %v987
      %1128 = vmatpush.msra.mxu0 %v986
      %1129 = vmatpush.msra.mxu0 %v985
      %1130 = vmatpush.msra.mxu0 %v984
      %1131 = vmatpush.msra.mxu0 %v983
      %1132 = vmatpush.msra.mxu0 %v982
      %1133 = vmatpush.msra.mxu0 %v981
      %1134 = vmatpush.msra.mxu0 %v980
      %1135 = vmatpush.msra.mxu0 %v979
      %1136 = vmatpush.msra.mxu0 %v978
      %1137 = vmatpush.msra.mxu0 %v977
      %1138 = vmatmul.f32.gmra.mxu0 %v677
      %v1139 = vpop.f32.mrf.mxu0
      %v1140 = vadd.f32 %v1027, %v1139
      %1141 = vmatmul.f32.gmra.mxu0 %v679
      %v1142 = vpop.f32.mrf.mxu0
      %v1143 = vadd.f32 %v1030, %v1142
      %1144 = vmatmul.f32.gmra.mxu0 %v682
      %v1145 = vpop.f32.mrf.mxu0
      %v1146 = vadd.f32 %v1033, %v1145
      %1147 = vmatmul.f32.gmra.mxu0 %v684
      %v1148 = vpop.f32.mrf.mxu0
      %v1149 = vadd.f32 %v1036, %v1148
      %1150 = vmatmul.f32.gmra.mxu0 %v687
      %v1151 = vpop.f32.mrf.mxu0
      %v1152 = vadd.f32 %v1039, %v1151
      %1153 = vmatmul.f32.gmra.mxu0 %v689
      %v1154 = vpop.f32.mrf.mxu0
      %v1155 = vadd.f32 %v1042, %v1154
      %1156 = vmatmul.f32.gmra.mxu0 %v692
      %v1157 = vpop.f32.mrf.mxu0
      %v1158 = vadd.f32 %v1045, %v1157
      %1159 = vmatmul.f32.gmra.mxu0 %v694
      %v1160 = vpop.f32.mrf.mxu0
      %v1161 = vadd.f32 %v1048, %v1160
      %1162 = vmatmul.f32.gmra.mxu0 %v697
      %v1163 = vpop.f32.mrf.mxu0
      %v1164 = vadd.f32 %v1051, %v1163
      %1165 = vmatmul.f32.gmra.mxu0 %v699
      %v1166 = vpop.f32.mrf.mxu0
      %v1167 = vadd.f32 %v1054, %v1166
      %1168 = vmatmul.f32.gmra.mxu0 %v702
      %v1169 = vpop.f32.mrf.mxu0
      %v1170 = vadd.f32 %v1057, %v1169
      %1171 = vmatmul.f32.gmra.mxu0 %v704
      %v1172 = vpop.f32.mrf.mxu0
      %v1173 = vadd.f32 %v1060, %v1172
      %1174 = vmatmul.f32.gmra.mxu0 %v707
      %v1175 = vpop.f32.mrf.mxu0
      %v1176 = vadd.f32 %v1063, %v1175
      %1177 = vmatmul.f32.gmra.mxu0 %v709
      %v1178 = vpop.f32.mrf.mxu0
      %v1179 = vadd.f32 %v1066, %v1178
      %1180 = vmatmul.f32.gmra.mxu0 %v712
      %v1181 = vpop.f32.mrf.mxu0
      %v1182 = vadd.f32 %v1069, %v1181
      %1183 = vmatmul.f32.gmra.mxu0 %v714
      %v1184 = vpop.f32.mrf.mxu0
      %v1185 = vadd.f32 %v1072, %v1184
      %1186 = vmatmul.f32.gmra.mxu0 %v717
      %v1187 = vpop.f32.mrf.mxu0
      %v1188 = vadd.f32 %v1075, %v1187
      %1189 = vmatmul.f32.gmra.mxu0 %v719
      %v1190 = vpop.f32.mrf.mxu0
      %v1191 = vadd.f32 %v1078, %v1190
      %1192 = vmatmul.f32.gmra.mxu0 %v722
      %v1193 = vpop.f32.mrf.mxu0
      %v1194 = vadd.f32 %v1081, %v1193
      %1195 = vmatmul.f32.gmra.mxu0 %v724
      %v1196 = vpop.f32.mrf.mxu0
      %v1197 = vadd.f32 %v1084, %v1196
      %1198 = vmatmul.f32.gmra.mxu0 %v727
      %v1199 = vpop.f32.mrf.mxu0
      %v1200 = vadd.f32 %v1087, %v1199
      %1201 = vmatmul.f32.gmra.mxu0 %v729
      %v1202 = vpop.f32.mrf.mxu0
      %v1203 = vadd.f32 %v1090, %v1202
      %1204 = vmatmul.f32.gmra.mxu0 %v732
      %v1205 = vpop.f32.mrf.mxu0
      %v1206 = vadd.f32 %v1093, %v1205
      %1207 = vmatmul.f32.gmra.mxu0 %v734
      %v1208 = vpop.f32.mrf.mxu0
      %v1209 = vadd.f32 %v1096, %v1208
      %1210 = vmatmul.f32.gmra.mxu0 %v737
      %v1211 = vpop.f32.mrf.mxu0
      %v1212 = vadd.f32 %v1099, %v1211
      %1213 = vmatmul.f32.gmra.mxu0 %v739
      %v1214 = vpop.f32.mrf.mxu0
      %v1215 = vadd.f32 %v1102, %v1214
      %1216 = vmatmul.f32.gmra.mxu0 %v742
      %v1217 = vpop.f32.mrf.mxu0
      %v1218 = vadd.f32 %v1105, %v1217
      %1219 = vmatmul.f32.gmra.mxu0 %v744
      %v1220 = vpop.f32.mrf.mxu0
      %v1221 = vadd.f32 %v1108, %v1220
      %1222 = vmatmul.f32.gmra.mxu0 %v747
      %v1223 = vpop.f32.mrf.mxu0
      %v1224 = vadd.f32 %v1111, %v1223
      %1225 = vmatmul.f32.gmra.mxu0 %v749
      %v1226 = vpop.f32.mrf.mxu0
      %v1227 = vadd.f32 %v1114, %v1226
      %1228 = vmatmul.f32.gmra.mxu0 %v948
      %v1229 = vpop.f32.mrf.mxu0
      %v1230 = vadd.f32 %v1117, %v1229
      %1231 = vmatmul.f32.gmra.mxu0 %v950
      %v1232 = vpop.f32.mrf.mxu0
      %v1233 = vadd.f32 %v1120, %v1232
      %1234 = vdwg.mxu0
      %1235 = vmatpush.msra.mxu0 %v1008
      %1236 = vmatpush.msra.mxu0 %v1007
      %1237 = vmatpush.msra.mxu0 %v1006
      %1238 = vmatpush.msra.mxu0 %v1005
      %1239 = vmatpush.msra.mxu0 %v1004
      %1240 = vmatpush.msra.mxu0 %v1003
      %1241 = vmatpush.msra.mxu0 %v1002
      %1242 = vmatpush.msra.mxu0 %v1001
      %1243 = vmatpush.msra.mxu0 %v1000
      %1244 = vmatpush.msra.mxu0 %v999
      %1245 = vmatpush.msra.mxu0 %v998
      %1246 = vmatpush.msra.mxu0 %v997
      %1247 = vmatpush.msra.mxu0 %v996
      %1248 = vmatpush.msra.mxu0 %v995
      %1249 = vmatpush.msra.mxu0 %v994
      %1250 = vmatpush.msra.mxu0 %v993
      %1251 = vmatmul.f32.gmra.mxu0 %v790
      %v1252 = vpop.f32.mrf.mxu0
      %v1253 = vadd.f32 %v1140, %v1252
      %1254 = vmatmul.f32.gmra.mxu0 %v792
      %v1255 = vpop.f32.mrf.mxu0
      %v1256 = vadd.f32 %v1143, %v1255
      %1257 = vmatmul.f32.gmra.mxu0 %v795
      %v1258 = vpop.f32.mrf.mxu0
      %v1259 = vadd.f32 %v1146, %v1258
      %1260 = vmatmul.f32.gmra.mxu0 %v797
      %v1261 = vpop.f32.mrf.mxu0
      %v1262 = vadd.f32 %v1149, %v1261
      %1263 = vmatmul.f32.gmra.mxu0 %v800
      %v1264 = vpop.f32.mrf.mxu0
      %v1265 = vadd.f32 %v1152, %v1264
      %1266 = vmatmul.f32.gmra.mxu0 %v802
      %v1267 = vpop.f32.mrf.mxu0
      %v1268 = vadd.f32 %v1155, %v1267
      %1269 = vmatmul.f32.gmra.mxu0 %v805
      %v1270 = vpop.f32.mrf.mxu0
      %v1271 = vadd.f32 %v1158, %v1270
      %1272 = vmatmul.f32.gmra.mxu0 %v807
      %v1273 = vpop.f32.mrf.mxu0
      %v1274 = vadd.f32 %v1161, %v1273
      %1275 = vmatmul.f32.gmra.mxu0 %v810
      %v1276 = vpop.f32.mrf.mxu0
      %v1277 = vadd.f32 %v1164, %v1276
      %1278 = vmatmul.f32.gmra.mxu0 %v812
      %v1279 = vpop.f32.mrf.mxu0
      %v1280 = vadd.f32 %v1167, %v1279
      %1281 = vmatmul.f32.gmra.mxu0 %v815
      %v1282 = vpop.f32.mrf.mxu0
      %v1283 = vadd.f32 %v1170, %v1282
      %1284 = vmatmul.f32.gmra.mxu0 %v817
      %v1285 = vpop.f32.mrf.mxu0
      %v1286 = vadd.f32 %v1173, %v1285
      %1287 = vmatmul.f32.gmra.mxu0 %v820
      %v1288 = vpop.f32.mrf.mxu0
      %v1289 = vadd.f32 %v1176, %v1288
      %1290 = vmatmul.f32.gmra.mxu0 %v822
      %v1291 = vpop.f32.mrf.mxu0
      %v1292 = vadd.f32 %v1179, %v1291
      %1293 = vmatmul.f32.gmra.mxu0 %v825
      %v1294 = vpop.f32.mrf.mxu0
      %v1295 = vadd.f32 %v1182, %v1294
      %1296 = vmatmul.f32.gmra.mxu0 %v827
      %v1297 = vpop.f32.mrf.mxu0
      %v1298 = vadd.f32 %v1185, %v1297
      %1299 = vmatmul.f32.gmra.mxu0 %v830
      %v1300 = vpop.f32.mrf.mxu0
      %v1301 = vadd.f32 %v1188, %v1300
      %1302 = vmatmul.f32.gmra.mxu0 %v832
      %v1303 = vpop.f32.mrf.mxu0
      %v1304 = vadd.f32 %v1191, %v1303
      %1305 = vmatmul.f32.gmra.mxu0 %v835
      %v1306 = vpop.f32.mrf.mxu0
      %v1307 = vadd.f32 %v1194, %v1306
      %1308 = vmatmul.f32.gmra.mxu0 %v837
      %v1309 = vpop.f32.mrf.mxu0
      %v1310 = vadd.f32 %v1197, %v1309
      %1311 = vmatmul.f32.gmra.mxu0 %v840
      %v1312 = vpop.f32.mrf.mxu0
      %v1313 = vadd.f32 %v1200, %v1312
      %1314 = vmatmul.f32.gmra.mxu0 %v842
      %v1315 = vpop.f32.mrf.mxu0
      %v1316 = vadd.f32 %v1203, %v1315
      %1317 = vmatmul.f32.gmra.mxu0 %v845
      %v1318 = vpop.f32.mrf.mxu0
      %v1319 = vadd.f32 %v1206, %v1318
      %1320 = vmatmul.f32.gmra.mxu0 %v847
      %v1321 = vpop.f32.mrf.mxu0
      %v1322 = vadd.f32 %v1209, %v1321
      %1323 = vmatmul.f32.gmra.mxu0 %v850
      %v1324 = vpop.f32.mrf.mxu0
      %v1325 = vadd.f32 %v1212, %v1324
      %1326 = vmatmul.f32.gmra.mxu0 %v852
      %v1327 = vpop.f32.mrf.mxu0
      %v1328 = vadd.f32 %v1215, %v1327
      %1329 = vmatmul.f32.gmra.mxu0 %v855
      %v1330 = vpop.f32.mrf.mxu0
      %v1331 = vadd.f32 %v1218, %v1330
      %1332 = vmatmul.f32.gmra.mxu0 %v857
      %v1333 = vpop.f32.mrf.mxu0
      %v1334 = vadd.f32 %v1221, %v1333
      %1335 = vmatmul.f32.gmra.mxu0 %v860
      %v1336 = vpop.f32.mrf.mxu0
      %v1337 = vadd.f32 %v1224, %v1336
      %1338 = vmatmul.f32.gmra.mxu0 %v862
      %v1339 = vpop.f32.mrf.mxu0
      %v1340 = vadd.f32 %v1227, %v1339
      %1341 = vmatmul.f32.gmra.mxu0 %v955
      %v1342 = vpop.f32.mrf.mxu0
      %v1343 = vadd.f32 %v1230, %v1342
      %1344 = vmatmul.f32.gmra.mxu0 %v957
      %v1345 = vpop.f32.mrf.mxu0
      %v1346 = vadd.f32 %v1233, %v1345
      %1347 = vdwg.mxu0
      %1348 = vmatpush.msra.mxu0 %v910
      %1349 = vmatpush.msra.mxu0 %v909
      %1350 = vmatpush.msra.mxu0 %v908
      %1351 = vmatpush.msra.mxu0 %v907
      %1352 = vmatpush.msra.mxu0 %v906
      %1353 = vmatpush.msra.mxu0 %v905
      %1354 = vmatpush.msra.mxu0 %v904
      %1355 = vmatpush.msra.mxu0 %v903
      %1356 = vmatpush.msra.mxu0 %v902
      %1357 = vmatpush.msra.mxu0 %v901
      %1358 = vmatpush.msra.mxu0 %v900
      %1359 = vmatpush.msra.mxu0 %v899
      %1360 = vmatpush.msra.mxu0 %v898
      %1361 = vmatpush.msra.mxu0 %v897
      %1362 = vmatpush.msra.mxu0 %v896
      %1363 = vmatpush.msra.mxu0 %v895
      %1364 = vmatmul.f32.gmra.mxu0 %v567
      %v1365 = vpop.f32.mrf.mxu0
      %v1366 = vadd.f32 %v1253, %v1365
      %1367 = vmatmul.f32.gmra.mxu0 %v568
      %v1368 = vpop.f32.mrf.mxu0
      %v1369 = vadd.f32 %v1256, %v1368
      %1370 = vmatmul.f32.gmra.mxu0 %v570
      %v1371 = vpop.f32.mrf.mxu0
      %v1372 = vadd.f32 %v1259, %v1371
      %1373 = vmatmul.f32.gmra.mxu0 %v571
      %v1374 = vpop.f32.mrf.mxu0
      %v1375 = vadd.f32 %v1262, %v1374
      %1376 = vmatmul.f32.gmra.mxu0 %v573
      %v1377 = vpop.f32.mrf.mxu0
      %v1378 = vadd.f32 %v1265, %v1377
      %1379 = vmatmul.f32.gmra.mxu0 %v574
      %v1380 = vpop.f32.mrf.mxu0
      %v1381 = vadd.f32 %v1268, %v1380
      %1382 = vmatmul.f32.gmra.mxu0 %v576
      %v1383 = vpop.f32.mrf.mxu0
      %v1384 = vadd.f32 %v1271, %v1383
      %1385 = vmatmul.f32.gmra.mxu0 %v577
      %v1386 = vpop.f32.mrf.mxu0
      %v1387 = vadd.f32 %v1274, %v1386
      %1388 = vmatmul.f32.gmra.mxu0 %v579
      %v1389 = vpop.f32.mrf.mxu0
      %v1390 = vadd.f32 %v1277, %v1389
      %1391 = vmatmul.f32.gmra.mxu0 %v580
      %v1392 = vpop.f32.mrf.mxu0
      %v1393 = vadd.f32 %v1280, %v1392
      %1394 = vmatmul.f32.gmra.mxu0 %v582
      %v1395 = vpop.f32.mrf.mxu0
      %v1396 = vadd.f32 %v1283, %v1395
      %1397 = vmatmul.f32.gmra.mxu0 %v583
      %v1398 = vpop.f32.mrf.mxu0
      %v1399 = vadd.f32 %v1286, %v1398
      %1400 = vmatmul.f32.gmra.mxu0 %v585
      %v1401 = vpop.f32.mrf.mxu0
      %v1402 = vadd.f32 %v1289, %v1401
      %1403 = vmatmul.f32.gmra.mxu0 %v586
      %v1404 = vpop.f32.mrf.mxu0
      %v1405 = vadd.f32 %v1292, %v1404
      %1406 = vmatmul.f32.gmra.mxu0 %v588
      %v1407 = vpop.f32.mrf.mxu0
      %v1408 = vadd.f32 %v1295, %v1407
      %1409 = vmatmul.f32.gmra.mxu0 %v589
      %v1410 = vpop.f32.mrf.mxu0
      %v1411 = vadd.f32 %v1298, %v1410
      %1412 = vmatmul.f32.gmra.mxu0 %v591
      %v1413 = vpop.f32.mrf.mxu0
      %v1414 = vadd.f32 %v1301, %v1413
      %1415 = vmatmul.f32.gmra.mxu0 %v592
      %v1416 = vpop.f32.mrf.mxu0
      %v1417 = vadd.f32 %v1304, %v1416
      %1418 = vmatmul.f32.gmra.mxu0 %v594
      %v1419 = vpop.f32.mrf.mxu0
      %v1420 = vadd.f32 %v1307, %v1419
      %1421 = vmatmul.f32.gmra.mxu0 %v595
      %v1422 = vpop.f32.mrf.mxu0
      %v1423 = vadd.f32 %v1310, %v1422
      %1424 = vmatmul.f32.gmra.mxu0 %v597
      %v1425 = vpop.f32.mrf.mxu0
      %v1426 = vadd.f32 %v1313, %v1425
      %1427 = vmatmul.f32.gmra.mxu0 %v598
      %v1428 = vpop.f32.mrf.mxu0
      %v1429 = vadd.f32 %v1316, %v1428
      %1430 = vmatmul.f32.gmra.mxu0 %v600
      %v1431 = vpop.f32.mrf.mxu0
      %v1432 = vadd.f32 %v1319, %v1431
      %1433 = vmatmul.f32.gmra.mxu0 %v601
      %v1434 = vpop.f32.mrf.mxu0
      %v1435 = vadd.f32 %v1322, %v1434
      %1436 = vmatmul.f32.gmra.mxu0 %v603
      %v1437 = vpop.f32.mrf.mxu0
      %v1438 = vadd.f32 %v1325, %v1437
      %1439 = vmatmul.f32.gmra.mxu0 %v604
      %v1440 = vpop.f32.mrf.mxu0
      %v1441 = vadd.f32 %v1328, %v1440
      %1442 = vmatmul.f32.gmra.mxu0 %v606
      %v1443 = vpop.f32.mrf.mxu0
      %v1444 = vadd.f32 %v1331, %v1443
      %1445 = vmatmul.f32.gmra.mxu0 %v607
      %v1446 = vpop.f32.mrf.mxu0
      %v1447 = vadd.f32 %v1334, %v1446
      %1448 = vmatmul.f32.gmra.mxu0 %v609
      %v1449 = vpop.f32.mrf.mxu0
      %v1450 = vadd.f32 %v1337, %v1449
      %1451 = vmatmul.f32.gmra.mxu0 %v610
      %v1452 = vpop.f32.mrf.mxu0
      %v1453 = vadd.f32 %v1340, %v1452
      %1454 = vmatmul.f32.gmra.mxu0 %v612
      %v1455 = vpop.f32.mrf.mxu0
      %v1456 = vadd.f32 %v1343, %v1455
      %1457 = vmatmul.f32.gmra.mxu0 %v613
      %v1458 = vpop.f32.mrf.mxu0
      %v1459 = vadd.f32 %v1346, %v1458
      %1460 = vdwg.mxu0
      %1461 = vmatpush.msra.mxu0 %v926
      %1462 = vmatpush.msra.mxu0 %v925
      %1463 = vmatpush.msra.mxu0 %v924
      %1464 = vmatpush.msra.mxu0 %v923
      %1465 = vmatpush.msra.mxu0 %v922
      %1466 = vmatpush.msra.mxu0 %v921
      %1467 = vmatpush.msra.mxu0 %v920
      %1468 = vmatpush.msra.mxu0 %v919
      %1469 = vmatpush.msra.mxu0 %v918
      %1470 = vmatpush.msra.mxu0 %v917
      %1471 = vmatpush.msra.mxu0 %v916
      %1472 = vmatpush.msra.mxu0 %v915
      %1473 = vmatpush.msra.mxu0 %v914
      %1474 = vmatpush.msra.mxu0 %v913
      %1475 = vmatpush.msra.mxu0 %v912
      %1476 = vmatpush.msra.mxu0 %v911
      %1477 = vmatmul.f32.gmra.mxu0 %v672
      %v1478 = vpop.f32.mrf.mxu0
      %v1479 = vadd.f32 %v1366, %v1478
      %1480 = vmatmul.f32.gmra.mxu0 %v674
      %v1481 = vpop.f32.mrf.mxu0
      %v1482 = vadd.f32 %v1369, %v1481
      %1483 = vmatmul.f32.gmra.mxu0 %v677
      %v1484 = vpop.f32.mrf.mxu0
      %v1485 = vadd.f32 %v1372, %v1484
      %1486 = vmatmul.f32.gmra.mxu0 %v679
      %v1487 = vpop.f32.mrf.mxu0
      %v1488 = vadd.f32 %v1375, %v1487
      %1489 = vmatmul.f32.gmra.mxu0 %v682
      %v1490 = vpop.f32.mrf.mxu0
      %v1491 = vadd.f32 %v1378, %v1490
      %1492 = vmatmul.f32.gmra.mxu0 %v684
      %v1493 = vpop.f32.mrf.mxu0
      %v1494 = vadd.f32 %v1381, %v1493
      %1495 = vmatmul.f32.gmra.mxu0 %v687
      %v1496 = vpop.f32.mrf.mxu0
      %v1497 = vadd.f32 %v1384, %v1496
      %1498 = vmatmul.f32.gmra.mxu0 %v689
      %v1499 = vpop.f32.mrf.mxu0
      %v1500 = vadd.f32 %v1387, %v1499
      %1501 = vmatmul.f32.gmra.mxu0 %v692
      %v1502 = vpop.f32.mrf.mxu0
      %v1503 = vadd.f32 %v1390, %v1502
      %1504 = vmatmul.f32.gmra.mxu0 %v694
      %v1505 = vpop.f32.mrf.mxu0
      %v1506 = vadd.f32 %v1393, %v1505
      %1507 = vmatmul.f32.gmra.mxu0 %v697
      %v1508 = vpop.f32.mrf.mxu0
      %v1509 = vadd.f32 %v1396, %v1508
      %1510 = vmatmul.f32.gmra.mxu0 %v699
      %v1511 = vpop.f32.mrf.mxu0
      %v1512 = vadd.f32 %v1399, %v1511
      %1513 = vmatmul.f32.gmra.mxu0 %v702
      %v1514 = vpop.f32.mrf.mxu0
      %v1515 = vadd.f32 %v1402, %v1514
      %1516 = vmatmul.f32.gmra.mxu0 %v704
      %v1517 = vpop.f32.mrf.mxu0
      %v1518 = vadd.f32 %v1405, %v1517
      %1519 = vmatmul.f32.gmra.mxu0 %v707
      %v1520 = vpop.f32.mrf.mxu0
      %v1521 = vadd.f32 %v1408, %v1520
      %1522 = vmatmul.f32.gmra.mxu0 %v709
      %v1523 = vpop.f32.mrf.mxu0
      %v1524 = vadd.f32 %v1411, %v1523
      %1525 = vmatmul.f32.gmra.mxu0 %v712
      %v1526 = vpop.f32.mrf.mxu0
      %v1527 = vadd.f32 %v1414, %v1526
      %1528 = vmatmul.f32.gmra.mxu0 %v714
      %v1529 = vpop.f32.mrf.mxu0
      %v1530 = vadd.f32 %v1417, %v1529
      %1531 = vmatmul.f32.gmra.mxu0 %v717
      %v1532 = vpop.f32.mrf.mxu0
      %v1533 = vadd.f32 %v1420, %v1532
      %1534 = vmatmul.f32.gmra.mxu0 %v719
      %v1535 = vpop.f32.mrf.mxu0
      %v1536 = vadd.f32 %v1423, %v1535
      %1537 = vmatmul.f32.gmra.mxu0 %v722
      %v1538 = vpop.f32.mrf.mxu0
      %v1539 = vadd.f32 %v1426, %v1538
      %1540 = vmatmul.f32.gmra.mxu0 %v724
      %v1541 = vpop.f32.mrf.mxu0
      %v1542 = vadd.f32 %v1429, %v1541
      %1543 = vmatmul.f32.gmra.mxu0 %v727
      %v1544 = vpop.f32.mrf.mxu0
      %v1545 = vadd.f32 %v1432, %v1544
      %1546 = vmatmul.f32.gmra.mxu0 %v729
      %v1547 = vpop.f32.mrf.mxu0
      %v1548 = vadd.f32 %v1435, %v1547
      %1549 = vmatmul.f32.gmra.mxu0 %v732
      %v1550 = vpop.f32.mrf.mxu0
      %v1551 = vadd.f32 %v1438, %v1550
      %1552 = vmatmul.f32.gmra.mxu0 %v734
      %v1553 = vpop.f32.mrf.mxu0
      %v1554 = vadd.f32 %v1441, %v1553
      %1555 = vmatmul.f32.gmra.mxu0 %v737
      %v1556 = vpop.f32.mrf.mxu0
      %v1557 = vadd.f32 %v1444, %v1556
      %1558 = vmatmul.f32.gmra.mxu0 %v739
      %v1559 = vpop.f32.mrf.mxu0
      %v1560 = vadd.f32 %v1447, %v1559
      %1561 = vmatmul.f32.gmra.mxu0 %v742
      %v1562 = vpop.f32.mrf.mxu0
      %v1563 = vadd.f32 %v1450, %v1562
      %1564 = vmatmul.f32.gmra.mxu0 %v744
      %v1565 = vpop.f32.mrf.mxu0
      %v1566 = vadd.f32 %v1453, %v1565
      %1567 = vmatmul.f32.gmra.mxu0 %v747
      %v1568 = vpop.f32.mrf.mxu0
      %v1569 = vadd.f32 %v1456, %v1568
      %1570 = vmatmul.f32.gmra.mxu0 %v749
      %v1571 = vpop.f32.mrf.mxu0
      %v1572 = vadd.f32 %v1459, %v1571
      %1573 = vdwg.mxu0
      %1574 = vmatpush.msra.mxu0 %v942
      %1575 = vmatpush.msra.mxu0 %v941
      %1576 = vmatpush.msra.mxu0 %v940
      %1577 = vmatpush.msra.mxu0 %v939
      %1578 = vmatpush.msra.mxu0 %v938
      %1579 = vmatpush.msra.mxu0 %v937
      %1580 = vmatpush.msra.mxu0 %v936
      %1581 = vmatpush.msra.mxu0 %v935
      %1582 = vmatpush.msra.mxu0 %v934
      %1583 = vmatpush.msra.mxu0 %v933
      %1584 = vmatpush.msra.mxu0 %v932
      %1585 = vmatpush.msra.mxu0 %v931
      %1586 = vmatpush.msra.mxu0 %v930
      %1587 = vmatpush.msra.mxu0 %v929
      %1588 = vmatpush.msra.mxu0 %v928
      %1589 = vmatpush.msra.mxu0 %v927
      %1590 = vmatmul.f32.gmra.mxu0 %v785
      %v1591 = vpop.f32.mrf.mxu0
      %v1592 = vadd.f32 %v1479, %v1591
      %1593 = vmatmul.f32.gmra.mxu0 %v787
      %v1594 = vpop.f32.mrf.mxu0
      %v1595 = vadd.f32 %v1482, %v1594
      %1596 = vmatmul.f32.gmra.mxu0 %v790
      %v1597 = vpop.f32.mrf.mxu0
      %v1598 = vadd.f32 %v1485, %v1597
      %1599 = vmatmul.f32.gmra.mxu0 %v792
      %v1600 = vpop.f32.mrf.mxu0
      %v1601 = vadd.f32 %v1488, %v1600
      %1602 = vmatmul.f32.gmra.mxu0 %v795
      %v1603 = vpop.f32.mrf.mxu0
      %v1604 = vadd.f32 %v1491, %v1603
      %1605 = vmatmul.f32.gmra.mxu0 %v797
      %v1606 = vpop.f32.mrf.mxu0
      %v1607 = vadd.f32 %v1494, %v1606
      %1608 = vmatmul.f32.gmra.mxu0 %v800
      %v1609 = vpop.f32.mrf.mxu0
      %v1610 = vadd.f32 %v1497, %v1609
      %1611 = vmatmul.f32.gmra.mxu0 %v802
      %v1612 = vpop.f32.mrf.mxu0
      %v1613 = vadd.f32 %v1500, %v1612
      %1614 = vmatmul.f32.gmra.mxu0 %v805
      %v1615 = vpop.f32.mrf.mxu0
      %v1616 = vadd.f32 %v1503, %v1615
      %1617 = vmatmul.f32.gmra.mxu0 %v807
      %v1618 = vpop.f32.mrf.mxu0
      %v1619 = vadd.f32 %v1506, %v1618
      %1620 = vmatmul.f32.gmra.mxu0 %v810
      %v1621 = vpop.f32.mrf.mxu0
      %v1622 = vadd.f32 %v1509, %v1621
      %1623 = vmatmul.f32.gmra.mxu0 %v812
      %v1624 = vpop.f32.mrf.mxu0
      %v1625 = vadd.f32 %v1512, %v1624
      %1626 = vmatmul.f32.gmra.mxu0 %v815
      %v1627 = vpop.f32.mrf.mxu0
      %v1628 = vadd.f32 %v1515, %v1627
      %1629 = vmatmul.f32.gmra.mxu0 %v817
      %v1630 = vpop.f32.mrf.mxu0
      %v1631 = vadd.f32 %v1518, %v1630
      %1632 = vmatmul.f32.gmra.mxu0 %v820
      %v1633 = vpop.f32.mrf.mxu0
      %v1634 = vadd.f32 %v1521, %v1633
      %1635 = vmatmul.f32.gmra.mxu0 %v822
      %v1636 = vpop.f32.mrf.mxu0
      %v1637 = vadd.f32 %v1524, %v1636
      %1638 = vmatmul.f32.gmra.mxu0 %v825
      %v1639 = vpop.f32.mrf.mxu0
      %v1640 = vadd.f32 %v1527, %v1639
      %1641 = vmatmul.f32.gmra.mxu0 %v827
      %v1642 = vpop.f32.mrf.mxu0
      %v1643 = vadd.f32 %v1530, %v1642
      %1644 = vmatmul.f32.gmra.mxu0 %v830
      %v1645 = vpop.f32.mrf.mxu0
      %v1646 = vadd.f32 %v1533, %v1645
      %1647 = vmatmul.f32.gmra.mxu0 %v832
      %v1648 = vpop.f32.mrf.mxu0
      %v1649 = vadd.f32 %v1536, %v1648
      %1650 = vmatmul.f32.gmra.mxu0 %v835
      %v1651 = vpop.f32.mrf.mxu0
      %v1652 = vadd.f32 %v1539, %v1651
      %1653 = vmatmul.f32.gmra.mxu0 %v837
      %v1654 = vpop.f32.mrf.mxu0
      %v1655 = vadd.f32 %v1542, %v1654
      %1656 = vmatmul.f32.gmra.mxu0 %v840
      %v1657 = vpop.f32.mrf.mxu0
      %v1658 = vadd.f32 %v1545, %v1657
      %1659 = vmatmul.f32.gmra.mxu0 %v842
      %v1660 = vpop.f32.mrf.mxu0
      %v1661 = vadd.f32 %v1548, %v1660
      %1662 = vmatmul.f32.gmra.mxu0 %v845
      %v1663 = vpop.f32.mrf.mxu0
      %v1664 = vadd.f32 %v1551, %v1663
      %1665 = vmatmul.f32.gmra.mxu0 %v847
      %v1666 = vpop.f32.mrf.mxu0
      %v1667 = vadd.f32 %v1554, %v1666
      %1668 = vmatmul.f32.gmra.mxu0 %v850
      %v1669 = vpop.f32.mrf.mxu0
      %v1670 = vadd.f32 %v1557, %v1669
      %1671 = vmatmul.f32.gmra.mxu0 %v852
      %v1672 = vpop.f32.mrf.mxu0
      %v1673 = vadd.f32 %v1560, %v1672
      %1674 = vmatmul.f32.gmra.mxu0 %v855
      %v1675 = vpop.f32.mrf.mxu0
      %v1676 = vadd.f32 %v1563, %v1675
      %1677 = vmatmul.f32.gmra.mxu0 %v857
      %v1678 = vpop.f32.mrf.mxu0
      %v1679 = vadd.f32 %v1566, %v1678
      %1680 = vmatmul.f32.gmra.mxu0 %v860
      %v1681 = vpop.f32.mrf.mxu0
      %v1682 = vadd.f32 %v1569, %v1681
      %1683 = vmatmul.f32.gmra.mxu0 %v862
      %v1684 = vpop.f32.mrf.mxu0
      %v1685 = vadd.f32 %v1572, %v1684
      %1686 = vdwg.mxu0
      %v1690 = vrot.slane %v618, 1
      %v1691 = vrot.slane %v619, 1
      %v1692 = vsel %vm669, %v1690, %v1691
      %v1693 = vrot.slane %v620, 1
      %v1694 = vsel %vm669, %v1691, %v1693
      %v1697 = vrot.slane %v618, 2
      %v1698 = vrot.slane %v619, 2
      %v1699 = vsel %vm782, %v1697, %v1698
      %v1700 = vrot.slane %v620, 2
      %v1701 = vsel %vm782, %v1698, %v1700
      %s1704 = scalar_lea.vmem %s4, 768
      %v1705 = vld [vmem:[%s1704] sm:$0xff]
      %v1706 = vld [vmem:[%s1704 + $0x8] sm:$0xff]
      %v1707 = vld [vmem:[%s1704 + $0x10] sm:$0xff]
      %v1708 = vld [vmem:[%s1704 + $0x18] sm:$0xff]
      %v1709 = vld [vmem:[%s1704 + $0x20] sm:$0xff]
      %v1710 = vld [vmem:[%s1704 + $0x28] sm:$0xff]
      %v1711 = vld [vmem:[%s1704 + $0x30] sm:$0xff]
      %v1712 = vld [vmem:[%s1704 + $0x38] sm:$0xff]
      %v1713 = vld [vmem:[%s1704 + $0x40] sm:$0xff]
      %v1714 = vld [vmem:[%s1704 + $0x48] sm:$0xff]
      %v1715 = vld [vmem:[%s1704 + $0x50] sm:$0xff]
      %v1716 = vld [vmem:[%s1704 + $0x58] sm:$0xff]
      %v1717 = vld [vmem:[%s1704 + $0x60] sm:$0xff]
      %v1718 = vld [vmem:[%s1704 + $0x68] sm:$0xff]
      %v1719 = vld [vmem:[%s1704 + $0x70] sm:$0xff]
      %v1720 = vld [vmem:[%s1704 + $0x78] sm:$0xff]
      %v1721 = vld [vmem:[%s1704 + $0x80] sm:$0xff]
      %v1722 = vld [vmem:[%s1704 + $0x88] sm:$0xff]
      %v1723 = vld [vmem:[%s1704 + $0x90] sm:$0xff]
      %v1724 = vld [vmem:[%s1704 + $0x98] sm:$0xff]
      %v1725 = vld [vmem:[%s1704 + $0xa0] sm:$0xff]
      %v1726 = vld [vmem:[%s1704 + $0xa8] sm:$0xff]
      %v1727 = vld [vmem:[%s1704 + $0xb0] sm:$0xff]
      %v1728 = vld [vmem:[%s1704 + $0xb8] sm:$0xff]
      %v1729 = vld [vmem:[%s1704 + $0xc0] sm:$0xff]
      %v1730 = vld [vmem:[%s1704 + $0xc8] sm:$0xff]
      %v1731 = vld [vmem:[%s1704 + $0xd0] sm:$0xff]
      %v1732 = vld [vmem:[%s1704 + $0xd8] sm:$0xff]
      %v1733 = vld [vmem:[%s1704 + $0xe0] sm:$0xff]
      %v1734 = vld [vmem:[%s1704 + $0xe8] sm:$0xff]
      %v1735 = vld [vmem:[%s1704 + $0xf0] sm:$0xff]
      %v1736 = vld [vmem:[%s1704 + $0xf8] sm:$0xff]
      %v1737 = vld [vmem:[%s1704 + $0x100] sm:$0xff]
      %v1738 = vld [vmem:[%s1704 + $0x108] sm:$0xff]
      %v1739 = vld [vmem:[%s1704 + $0x110] sm:$0xff]
      %v1740 = vld [vmem:[%s1704 + $0x118] sm:$0xff]
      %v1741 = vld [vmem:[%s1704 + $0x120] sm:$0xff]
      %v1742 = vld [vmem:[%s1704 + $0x128] sm:$0xff]
      %v1743 = vld [vmem:[%s1704 + $0x130] sm:$0xff]
      %v1744 = vld [vmem:[%s1704 + $0x138] sm:$0xff]
      %v1745 = vld [vmem:[%s1704 + $0x140] sm:$0xff]
      %v1746 = vld [vmem:[%s1704 + $0x148] sm:$0xff]
      %v1747 = vld [vmem:[%s1704 + $0x150] sm:$0xff]
      %v1748 = vld [vmem:[%s1704 + $0x158] sm:$0xff]
      %v1749 = vld [vmem:[%s1704 + $0x160] sm:$0xff]
      %v1750 = vld [vmem:[%s1704 + $0x168] sm:$0xff]
      %v1751 = vld [vmem:[%s1704 + $0x170] sm:$0xff]
      %v1752 = vld [vmem:[%s1704 + $0x178] sm:$0xff]
      %1753 = vmatpush.msra.mxu0 %v1720
      %1754 = vmatpush.msra.mxu0 %v1719
      %1755 = vmatpush.msra.mxu0 %v1718
      %1756 = vmatpush.msra.mxu0 %v1717
      %1757 = vmatpush.msra.mxu0 %v1716
      %1758 = vmatpush.msra.mxu0 %v1715
      %1759 = vmatpush.msra.mxu0 %v1714
      %1760 = vmatpush.msra.mxu0 %v1713
      %1761 = vmatpush.msra.mxu0 %v1712
      %1762 = vmatpush.msra.mxu0 %v1711
      %1763 = vmatpush.msra.mxu0 %v1710
      %1764 = vmatpush.msra.mxu0 %v1709
      %1765 = vmatpush.msra.mxu0 %v1708
      %1766 = vmatpush.msra.mxu0 %v1707
      %1767 = vmatpush.msra.mxu0 %v1706
      %1768 = vmatpush.msra.mxu0 %v1705
      %1769 = vmatmul.f32.gmra.mxu0 %v573
      %v1770 = vpop.f32.mrf.mxu0
      %v1771 = vadd.f32 0.0, %v1770
      %1772 = vmatmul.f32.gmra.mxu0 %v574
      %v1773 = vpop.f32.mrf.mxu0
      %v1774 = vadd.f32 0.0, %v1773
      %1775 = vmatmul.f32.gmra.mxu0 %v576
      %v1776 = vpop.f32.mrf.mxu0
      %v1777 = vadd.f32 0.0, %v1776
      %1778 = vmatmul.f32.gmra.mxu0 %v577
      %v1779 = vpop.f32.mrf.mxu0
      %v1780 = vadd.f32 0.0, %v1779
      %1781 = vmatmul.f32.gmra.mxu0 %v579
      %v1782 = vpop.f32.mrf.mxu0
      %v1783 = vadd.f32 0.0, %v1782
      %1784 = vmatmul.f32.gmra.mxu0 %v580
      %v1785 = vpop.f32.mrf.mxu0
      %v1786 = vadd.f32 0.0, %v1785
      %1787 = vmatmul.f32.gmra.mxu0 %v582
      %v1788 = vpop.f32.mrf.mxu0
      %v1789 = vadd.f32 0.0, %v1788
      %1790 = vmatmul.f32.gmra.mxu0 %v583
      %v1791 = vpop.f32.mrf.mxu0
      %v1792 = vadd.f32 0.0, %v1791
      %1793 = vmatmul.f32.gmra.mxu0 %v585
      %v1794 = vpop.f32.mrf.mxu0
      %v1795 = vadd.f32 0.0, %v1794
      %1796 = vmatmul.f32.gmra.mxu0 %v586
      %v1797 = vpop.f32.mrf.mxu0
      %v1798 = vadd.f32 0.0, %v1797
      %1799 = vmatmul.f32.gmra.mxu0 %v588
      %v1800 = vpop.f32.mrf.mxu0
      %v1801 = vadd.f32 0.0, %v1800
      %1802 = vmatmul.f32.gmra.mxu0 %v589
      %v1803 = vpop.f32.mrf.mxu0
      %v1804 = vadd.f32 0.0, %v1803
      %1805 = vmatmul.f32.gmra.mxu0 %v591
      %v1806 = vpop.f32.mrf.mxu0
      %v1807 = vadd.f32 0.0, %v1806
      %1808 = vmatmul.f32.gmra.mxu0 %v592
      %v1809 = vpop.f32.mrf.mxu0
      %v1810 = vadd.f32 0.0, %v1809
      %1811 = vmatmul.f32.gmra.mxu0 %v594
      %v1812 = vpop.f32.mrf.mxu0
      %v1813 = vadd.f32 0.0, %v1812
      %1814 = vmatmul.f32.gmra.mxu0 %v595
      %v1815 = vpop.f32.mrf.mxu0
      %v1816 = vadd.f32 0.0, %v1815
      %1817 = vmatmul.f32.gmra.mxu0 %v597
      %v1818 = vpop.f32.mrf.mxu0
      %v1819 = vadd.f32 0.0, %v1818
      %1820 = vmatmul.f32.gmra.mxu0 %v598
      %v1821 = vpop.f32.mrf.mxu0
      %v1822 = vadd.f32 0.0, %v1821
      %1823 = vmatmul.f32.gmra.mxu0 %v600
      %v1824 = vpop.f32.mrf.mxu0
      %v1825 = vadd.f32 0.0, %v1824
      %1826 = vmatmul.f32.gmra.mxu0 %v601
      %v1827 = vpop.f32.mrf.mxu0
      %v1828 = vadd.f32 0.0, %v1827
      %1829 = vmatmul.f32.gmra.mxu0 %v603
      %v1830 = vpop.f32.mrf.mxu0
      %v1831 = vadd.f32 0.0, %v1830
      %1832 = vmatmul.f32.gmra.mxu0 %v604
      %v1833 = vpop.f32.mrf.mxu0
      %v1834 = vadd.f32 0.0, %v1833
      %1835 = vmatmul.f32.gmra.mxu0 %v606
      %v1836 = vpop.f32.mrf.mxu0
      %v1837 = vadd.f32 0.0, %v1836
      %1838 = vmatmul.f32.gmra.mxu0 %v607
      %v1839 = vpop.f32.mrf.mxu0
      %v1840 = vadd.f32 0.0, %v1839
      %1841 = vmatmul.f32.gmra.mxu0 %v609
      %v1842 = vpop.f32.mrf.mxu0
      %v1843 = vadd.f32 0.0, %v1842
      %1844 = vmatmul.f32.gmra.mxu0 %v610
      %v1845 = vpop.f32.mrf.mxu0
      %v1846 = vadd.f32 0.0, %v1845
      %1847 = vmatmul.f32.gmra.mxu0 %v612
      %v1848 = vpop.f32.mrf.mxu0
      %v1849 = vadd.f32 0.0, %v1848
      %1850 = vmatmul.f32.gmra.mxu0 %v613
      %v1851 = vpop.f32.mrf.mxu0
      %v1852 = vadd.f32 0.0, %v1851
      %1853 = vmatmul.f32.gmra.mxu0 %v615
      %v1854 = vpop.f32.mrf.mxu0
      %v1855 = vadd.f32 0.0, %v1854
      %1856 = vmatmul.f32.gmra.mxu0 %v616
      %v1857 = vpop.f32.mrf.mxu0
      %v1858 = vadd.f32 0.0, %v1857
      %1859 = vmatmul.f32.gmra.mxu0 %v618
      %v1860 = vpop.f32.mrf.mxu0
      %v1861 = vadd.f32 0.0, %v1860
      %1862 = vmatmul.f32.gmra.mxu0 %v619
      %v1863 = vpop.f32.mrf.mxu0
      %v1864 = vadd.f32 0.0, %v1863
      %1865 = vdwg.mxu0
      %1866 = vmatpush.msra.mxu0 %v1736
      %1867 = vmatpush.msra.mxu0 %v1735
      %1868 = vmatpush.msra.mxu0 %v1734
      %1869 = vmatpush.msra.mxu0 %v1733
      %1870 = vmatpush.msra.mxu0 %v1732
      %1871 = vmatpush.msra.mxu0 %v1731
      %1872 = vmatpush.msra.mxu0 %v1730
      %1873 = vmatpush.msra.mxu0 %v1729
      %1874 = vmatpush.msra.mxu0 %v1728
      %1875 = vmatpush.msra.mxu0 %v1727
      %1876 = vmatpush.msra.mxu0 %v1726
      %1877 = vmatpush.msra.mxu0 %v1725
      %1878 = vmatpush.msra.mxu0 %v1724
      %1879 = vmatpush.msra.mxu0 %v1723
      %1880 = vmatpush.msra.mxu0 %v1722
      %1881 = vmatpush.msra.mxu0 %v1721
      %1882 = vmatmul.f32.gmra.mxu0 %v682
      %v1883 = vpop.f32.mrf.mxu0
      %v1884 = vadd.f32 %v1771, %v1883
      %1885 = vmatmul.f32.gmra.mxu0 %v684
      %v1886 = vpop.f32.mrf.mxu0
      %v1887 = vadd.f32 %v1774, %v1886
      %1888 = vmatmul.f32.gmra.mxu0 %v687
      %v1889 = vpop.f32.mrf.mxu0
      %v1890 = vadd.f32 %v1777, %v1889
      %1891 = vmatmul.f32.gmra.mxu0 %v689
      %v1892 = vpop.f32.mrf.mxu0
      %v1893 = vadd.f32 %v1780, %v1892
      %1894 = vmatmul.f32.gmra.mxu0 %v692
      %v1895 = vpop.f32.mrf.mxu0
      %v1896 = vadd.f32 %v1783, %v1895
      %1897 = vmatmul.f32.gmra.mxu0 %v694
      %v1898 = vpop.f32.mrf.mxu0
      %v1899 = vadd.f32 %v1786, %v1898
      %1900 = vmatmul.f32.gmra.mxu0 %v697
      %v1901 = vpop.f32.mrf.mxu0
      %v1902 = vadd.f32 %v1789, %v1901
      %1903 = vmatmul.f32.gmra.mxu0 %v699
      %v1904 = vpop.f32.mrf.mxu0
      %v1905 = vadd.f32 %v1792, %v1904
      %1906 = vmatmul.f32.gmra.mxu0 %v702
      %v1907 = vpop.f32.mrf.mxu0
      %v1908 = vadd.f32 %v1795, %v1907
      %1909 = vmatmul.f32.gmra.mxu0 %v704
      %v1910 = vpop.f32.mrf.mxu0
      %v1911 = vadd.f32 %v1798, %v1910
      %1912 = vmatmul.f32.gmra.mxu0 %v707
      %v1913 = vpop.f32.mrf.mxu0
      %v1914 = vadd.f32 %v1801, %v1913
      %1915 = vmatmul.f32.gmra.mxu0 %v709
      %v1916 = vpop.f32.mrf.mxu0
      %v1917 = vadd.f32 %v1804, %v1916
      %1918 = vmatmul.f32.gmra.mxu0 %v712
      %v1919 = vpop.f32.mrf.mxu0
      %v1920 = vadd.f32 %v1807, %v1919
      %1921 = vmatmul.f32.gmra.mxu0 %v714
      %v1922 = vpop.f32.mrf.mxu0
      %v1923 = vadd.f32 %v1810, %v1922
      %1924 = vmatmul.f32.gmra.mxu0 %v717
      %v1925 = vpop.f32.mrf.mxu0
      %v1926 = vadd.f32 %v1813, %v1925
      %1927 = vmatmul.f32.gmra.mxu0 %v719
      %v1928 = vpop.f32.mrf.mxu0
      %v1929 = vadd.f32 %v1816, %v1928
      %1930 = vmatmul.f32.gmra.mxu0 %v722
      %v1931 = vpop.f32.mrf.mxu0
      %v1932 = vadd.f32 %v1819, %v1931
      %1933 = vmatmul.f32.gmra.mxu0 %v724
      %v1934 = vpop.f32.mrf.mxu0
      %v1935 = vadd.f32 %v1822, %v1934
      %1936 = vmatmul.f32.gmra.mxu0 %v727
      %v1937 = vpop.f32.mrf.mxu0
      %v1938 = vadd.f32 %v1825, %v1937
      %1939 = vmatmul.f32.gmra.mxu0 %v729
      %v1940 = vpop.f32.mrf.mxu0
      %v1941 = vadd.f32 %v1828, %v1940
      %1942 = vmatmul.f32.gmra.mxu0 %v732
      %v1943 = vpop.f32.mrf.mxu0
      %v1944 = vadd.f32 %v1831, %v1943
      %1945 = vmatmul.f32.gmra.mxu0 %v734
      %v1946 = vpop.f32.mrf.mxu0
      %v1947 = vadd.f32 %v1834, %v1946
      %1948 = vmatmul.f32.gmra.mxu0 %v737
      %v1949 = vpop.f32.mrf.mxu0
      %v1950 = vadd.f32 %v1837, %v1949
      %1951 = vmatmul.f32.gmra.mxu0 %v739
      %v1952 = vpop.f32.mrf.mxu0
      %v1953 = vadd.f32 %v1840, %v1952
      %1954 = vmatmul.f32.gmra.mxu0 %v742
      %v1955 = vpop.f32.mrf.mxu0
      %v1956 = vadd.f32 %v1843, %v1955
      %1957 = vmatmul.f32.gmra.mxu0 %v744
      %v1958 = vpop.f32.mrf.mxu0
      %v1959 = vadd.f32 %v1846, %v1958
      %1960 = vmatmul.f32.gmra.mxu0 %v747
      %v1961 = vpop.f32.mrf.mxu0
      %v1962 = vadd.f32 %v1849, %v1961
      %1963 = vmatmul.f32.gmra.mxu0 %v749
      %v1964 = vpop.f32.mrf.mxu0
      %v1965 = vadd.f32 %v1852, %v1964
      %1966 = vmatmul.f32.gmra.mxu0 %v948
      %v1967 = vpop.f32.mrf.mxu0
      %v1968 = vadd.f32 %v1855, %v1967
      %1969 = vmatmul.f32.gmra.mxu0 %v950
      %v1970 = vpop.f32.mrf.mxu0
      %v1971 = vadd.f32 %v1858, %v1970
      %1972 = vmatmul.f32.gmra.mxu0 %v1692
      %v1973 = vpop.f32.mrf.mxu0
      %v1974 = vadd.f32 %v1861, %v1973
      %1975 = vmatmul.f32.gmra.mxu0 %v1694
      %v1976 = vpop.f32.mrf.mxu0
      %v1977 = vadd.f32 %v1864, %v1976
      %1978 = vdwg.mxu0
      %1979 = vmatpush.msra.mxu0 %v1752
      %1980 = vmatpush.msra.mxu0 %v1751
      %1981 = vmatpush.msra.mxu0 %v1750
      %1982 = vmatpush.msra.mxu0 %v1749
      %1983 = vmatpush.msra.mxu0 %v1748
      %1984 = vmatpush.msra.mxu0 %v1747
      %1985 = vmatpush.msra.mxu0 %v1746
      %1986 = vmatpush.msra.mxu0 %v1745
      %1987 = vmatpush.msra.mxu0 %v1744
      %1988 = vmatpush.msra.mxu0 %v1743
      %1989 = vmatpush.msra.mxu0 %v1742
      %1990 = vmatpush.msra.mxu0 %v1741
      %1991 = vmatpush.msra.mxu0 %v1740
      %1992 = vmatpush.msra.mxu0 %v1739
      %1993 = vmatpush.msra.mxu0 %v1738
      %1994 = vmatpush.msra.mxu0 %v1737
      %1995 = vmatmul.f32.gmra.mxu0 %v795
      %v1996 = vpop.f32.mrf.mxu0
      %v1997 = vadd.f32 %v1884, %v1996
      %1998 = vmatmul.f32.gmra.mxu0 %v797
      %v1999 = vpop.f32.mrf.mxu0
      %v2000 = vadd.f32 %v1887, %v1999
      %2001 = vmatmul.f32.gmra.mxu0 %v800
      %v2002 = vpop.f32.mrf.mxu0
      %v2003 = vadd.f32 %v1890, %v2002
      %2004 = vmatmul.f32.gmra.mxu0 %v802
      %v2005 = vpop.f32.mrf.mxu0
      %v2006 = vadd.f32 %v1893, %v2005
      %2007 = vmatmul.f32.gmra.mxu0 %v805
      %v2008 = vpop.f32.mrf.mxu0
      %v2009 = vadd.f32 %v1896, %v2008
      %2010 = vmatmul.f32.gmra.mxu0 %v807
      %v2011 = vpop.f32.mrf.mxu0
      %v2012 = vadd.f32 %v1899, %v2011
      %2013 = vmatmul.f32.gmra.mxu0 %v810
      %v2014 = vpop.f32.mrf.mxu0
      %v2015 = vadd.f32 %v1902, %v2014
      %2016 = vmatmul.f32.gmra.mxu0 %v812
      %v2017 = vpop.f32.mrf.mxu0
      %v2018 = vadd.f32 %v1905, %v2017
      %2019 = vmatmul.f32.gmra.mxu0 %v815
      %v2020 = vpop.f32.mrf.mxu0
      %v2021 = vadd.f32 %v1908, %v2020
      %2022 = vmatmul.f32.gmra.mxu0 %v817
      %v2023 = vpop.f32.mrf.mxu0
      %v2024 = vadd.f32 %v1911, %v2023
      %2025 = vmatmul.f32.gmra.mxu0 %v820
      %v2026 = vpop.f32.mrf.mxu0
      %v2027 = vadd.f32 %v1914, %v2026
      %2028 = vmatmul.f32.gmra.mxu0 %v822
      %v2029 = vpop.f32.mrf.mxu0
      %v2030 = vadd.f32 %v1917, %v2029
      %2031 = vmatmul.f32.gmra.mxu0 %v825
      %v2032 = vpop.f32.mrf.mxu0
      %v2033 = vadd.f32 %v1920, %v2032
      %2034 = vmatmul.f32.gmra.mxu0 %v827
      %v2035 = vpop.f32.mrf.mxu0
      %v2036 = vadd.f32 %v1923, %v2035
      %2037 = vmatmul.f32.gmra.mxu0 %v830
      %v2038 = vpop.f32.mrf.mxu0
      %v2039 = vadd.f32 %v1926, %v2038
      %2040 = vmatmul.f32.gmra.mxu0 %v832
      %v2041 = vpop.f32.mrf.mxu0
      %v2042 = vadd.f32 %v1929, %v2041
      %2043 = vmatmul.f32.gmra.mxu0 %v835
      %v2044 = vpop.f32.mrf.mxu0
      %v2045 = vadd.f32 %v1932, %v2044
      %2046 = vmatmul.f32.gmra.mxu0 %v837
      %v2047 = vpop.f32.mrf.mxu0
      %v2048 = vadd.f32 %v1935, %v2047
      %2049 = vmatmul.f32.gmra.mxu0 %v840
      %v2050 = vpop.f32.mrf.mxu0
      %v2051 = vadd.f32 %v1938, %v2050
      %2052 = vmatmul.f32.gmra.mxu0 %v842
      %v2053 = vpop.f32.mrf.mxu0
      %v2054 = vadd.f32 %v1941, %v2053
      %2055 = vmatmul.f32.gmra.mxu0 %v845
      %v2056 = vpop.f32.mrf.mxu0
      %v2057 = vadd.f32 %v1944, %v2056
      %2058 = vmatmul.f32.gmra.mxu0 %v847
      %v2059 = vpop.f32.mrf.mxu0
      %v2060 = vadd.f32 %v1947, %v2059
      %2061 = vmatmul.f32.gmra.mxu0 %v850
      %v2062 = vpop.f32.mrf.mxu0
      %v2063 = vadd.f32 %v1950, %v2062
      %2064 = vmatmul.f32.gmra.mxu0 %v852
      %v2065 = vpop.f32.mrf.mxu0
      %v2066 = vadd.f32 %v1953, %v2065
      %2067 = vmatmul.f32.gmra.mxu0 %v855
      %v2068 = vpop.f32.mrf.mxu0
      %v2069 = vadd.f32 %v1956, %v2068
      %2070 = vmatmul.f32.gmra.mxu0 %v857
      %v2071 = vpop.f32.mrf.mxu0
      %v2072 = vadd.f32 %v1959, %v2071
      %2073 = vmatmul.f32.gmra.mxu0 %v860
      %v2074 = vpop.f32.mrf.mxu0
      %v2075 = vadd.f32 %v1962, %v2074
      %2076 = vmatmul.f32.gmra.mxu0 %v862
      %v2077 = vpop.f32.mrf.mxu0
      %v2078 = vadd.f32 %v1965, %v2077
      %2079 = vmatmul.f32.gmra.mxu0 %v955
      %v2080 = vpop.f32.mrf.mxu0
      %v2081 = vadd.f32 %v1968, %v2080
      %2082 = vmatmul.f32.gmra.mxu0 %v957
      %v2083 = vpop.f32.mrf.mxu0
      %v2084 = vadd.f32 %v1971, %v2083
      %2085 = vmatmul.f32.gmra.mxu0 %v1699
      %v2086 = vpop.f32.mrf.mxu0
      %v2087 = vadd.f32 %v1974, %v2086
      %2088 = vmatmul.f32.gmra.mxu0 %v1701
      %v2089 = vpop.f32.mrf.mxu0
      %v2090 = vadd.f32 %v1977, %v2089
      %2091 = vdwg.mxu0
      %v2092 = vadd.f32 %v1592, %v1997
      %v2093 = vadd.f32 %v1595, %v2000
      %v2094 = vadd.f32 %v1598, %v2003
      %v2095 = vadd.f32 %v1601, %v2006
      %v2096 = vadd.f32 %v1604, %v2009
      %v2097 = vadd.f32 %v1607, %v2012
      %v2098 = vadd.f32 %v1610, %v2015
      %v2099 = vadd.f32 %v1613, %v2018
      %v2100 = vadd.f32 %v1616, %v2021
      %v2101 = vadd.f32 %v1619, %v2024
      %v2102 = vadd.f32 %v1622, %v2027
      %v2103 = vadd.f32 %v1625, %v2030
      %v2104 = vadd.f32 %v1628, %v2033
      %v2105 = vadd.f32 %v1631, %v2036
      %v2106 = vadd.f32 %v1634, %v2039
      %v2107 = vadd.f32 %v1637, %v2042
      %v2108 = vadd.f32 %v1640, %v2045
      %v2109 = vadd.f32 %v1643, %v2048
      %v2110 = vadd.f32 %v1646, %v2051
      %v2111 = vadd.f32 %v1649, %v2054
      %v2112 = vadd.f32 %v1652, %v2057
      %v2113 = vadd.f32 %v1655, %v2060
      %v2114 = vadd.f32 %v1658, %v2063
      %v2115 = vadd.f32 %v1661, %v2066
      %v2116 = vadd.f32 %v1664, %v2069
      %v2117 = vadd.f32 %v1667, %v2072
      %v2118 = vadd.f32 %v1670, %v2075
      %v2119 = vadd.f32 %v1673, %v2078
      %v2120 = vadd.f32 %v1676, %v2081
      %v2121 = vadd.f32 %v1679, %v2084
      %v2122 = vadd.f32 %v1682, %v2087
      %v2123 = vadd.f32 %v1685, %v2090
      %2124 = vst [vmem:[%s323] sm:$0xff] %v2092
      %2125 = vst [vmem:[%s323 + $0x8] sm:$0xff] %v2093
      %2126 = vst [vmem:[%s323 + $0x10] sm:$0xff] %v2094
      %2127 = vst [vmem:[%s323 + $0x18] sm:$0xff] %v2095
      %2128 = vst [vmem:[%s323 + $0x20] sm:$0xff] %v2096
      %2129 = vst [vmem:[%s323 + $0x28] sm:$0xff] %v2097
      %2130 = vst [vmem:[%s323 + $0x30] sm:$0xff] %v2098
      %2131 = vst [vmem:[%s323 + $0x38] sm:$0xff] %v2099
      %2132 = vst [vmem:[%s323 + $0x40] sm:$0xff] %v2100
      %2133 = vst [vmem:[%s323 + $0x48] sm:$0xff] %v2101
      %2134 = vst [vmem:[%s323 + $0x50] sm:$0xff] %v2102
      %2135 = vst [vmem:[%s323 + $0x58] sm:$0xff] %v2103
      %2136 = vst [vmem:[%s323 + $0x60] sm:$0xff] %v2104
      %2137 = vst [vmem:[%s323 + $0x68] sm:$0xff] %v2105
      %2138 = vst [vmem:[%s323 + $0x70] sm:$0xff] %v2106
      %2139 = vst [vmem:[%s323 + $0x78] sm:$0xff] %v2107
      %2140 = vst [vmem:[%s323 + $0x80] sm:$0xff] %v2108
      %2141 = vst [vmem:[%s323 + $0x88] sm:$0xff] %v2109
      %2142 = vst [vmem:[%s323 + $0x90] sm:$0xff] %v2110
      %2143 = vst [vmem:[%s323 + $0x98] sm:$0xff] %v2111
      %2144 = vst [vmem:[%s323 + $0xa0] sm:$0xff] %v2112
      %2145 = vst [vmem:[%s323 + $0xa8] sm:$0xff] %v2113
      %2146 = vst [vmem:[%s323 + $0xb0] sm:$0xff] %v2114
      %2147 = vst [vmem:[%s323 + $0xb8] sm:$0xff] %v2115
      %2148 = vst [vmem:[%s323 + $0xc0] sm:$0xff] %v2116
      %2149 = vst [vmem:[%s323 + $0xc8] sm:$0xff] %v2117
      %2150 = vst [vmem:[%s323 + $0xd0] sm:$0xff] %v2118
      %2151 = vst [vmem:[%s323 + $0xd8] sm:$0xff] %v2119
      %2152 = vst [vmem:[%s323 + $0xe0] sm:$0xff] %v2120
      %2153 = vst [vmem:[%s323 + $0xe8] sm:$0xff] %v2121
      %2154 = vst [vmem:[%s323 + $0xf0] sm:$0xff] %v2122
      %2155 = vst [vmem:[%s323 + $0xf8] sm:$0xff] %v2123
      %v2156 = vadd.f32 %v2092, %v2093
      %v2157 = vadd.f32 %v2156, %v2094
      %v2158 = vadd.f32 %v2157, %v2095
      %v2159 = vadd.f32 %v2158, %v2096
      %v2160 = vadd.f32 %v2159, %v2097
      %v2161 = vadd.f32 %v2160, %v2098
      %v2162 = vadd.f32 %v2161, %v2099
      %v2163 = vadd.f32 %v2162, %v2100
      %v2164 = vadd.f32 %v2163, %v2101
      %v2165 = vadd.f32 %v2164, %v2102
      %v2166 = vadd.f32 %v2165, %v2103
      %v2167 = vadd.f32 %v2166, %v2104
      %v2168 = vadd.f32 %v2167, %v2105
      %v2169 = vadd.f32 %v2168, %v2106
      %v2170 = vadd.f32 %v2169, %v2107
      %v2171 = vadd.f32 %v2170, %v2108
      %v2172 = vadd.f32 %v2171, %v2109
      %v2173 = vadd.f32 %v2172, %v2110
      %v2174 = vadd.f32 %v2173, %v2111
      %v2175 = vadd.f32 %v2174, %v2112
      %v2176 = vadd.f32 %v2175, %v2113
      %v2177 = vadd.f32 %v2176, %v2114
      %v2178 = vadd.f32 %v2177, %v2115
      %v2179 = vadd.f32 %v2178, %v2116
      %v2180 = vadd.f32 %v2179, %v2117
      %v2181 = vadd.f32 %v2180, %v2118
      %v2182 = vadd.f32 %v2181, %v2119
      %v2183 = vadd.f32 %v2182, %v2120
      %v2184 = vadd.f32 %v2183, %v2121
      %v2185 = vadd.f32 %v2184, %v2122
      %v2186 = vadd.f32 %v2185, %v2123
      %v2187 = vrot.slane %v2186, 4
      %v2188 = vadd.f32 %v2186, %v2187
      %v2189 = vrot.slane %v2188, 2
      %v2190 = vadd.f32 %v2188, %v2189
      %v2191 = vrot.slane %v2190, 1
      %v2192 = vadd.f32 %v2190, %v2191
      %2193 = vst [vmem:[%s330] sm:$0x1] %v2192
      %v2194 = vmul.f32 %v2092, %v2092
      %v2195 = vmul.f32 %v2093, %v2093
      %v2196 = vmul.f32 %v2094, %v2094
      %v2197 = vmul.f32 %v2095, %v2095
      %v2198 = vmul.f32 %v2096, %v2096
      %v2199 = vmul.f32 %v2097, %v2097
      %v2200 = vmul.f32 %v2098, %v2098
      %v2201 = vmul.f32 %v2099, %v2099
      %v2202 = vmul.f32 %v2100, %v2100
      %v2203 = vmul.f32 %v2101, %v2101
      %v2204 = vmul.f32 %v2102, %v2102
      %v2205 = vmul.f32 %v2103, %v2103
      %v2206 = vmul.f32 %v2104, %v2104
      %v2207 = vmul.f32 %v2105, %v2105
      %v2208 = vmul.f32 %v2106, %v2106
      %v2209 = vmul.f32 %v2107, %v2107
      %v2210 = vmul.f32 %v2108, %v2108
      %v2211 = vmul.f32 %v2109, %v2109
      %v2212 = vmul.f32 %v2110, %v2110
      %v2213 = vmul.f32 %v2111, %v2111
      %v2214 = vmul.f32 %v2112, %v2112
      %v2215 = vmul.f32 %v2113, %v2113
      %v2216 = vmul.f32 %v2114, %v2114
      %v2217 = vmul.f32 %v2115, %v2115
      %v2218 = vmul.f32 %v2116, %v2116
      %v2219 = vmul.f32 %v2117, %v2117
      %v2220 = vmul.f32 %v2118, %v2118
      %v2221 = vmul.f32 %v2119, %v2119
      %v2222 = vmul.f32 %v2120, %v2120
      %v2223 = vmul.f32 %v2121, %v2121
      %v2224 = vmul.f32 %v2122, %v2122
      %v2225 = vmul.f32 %v2123, %v2123
      %v2226 = vadd.f32 %v2194, %v2195
      %v2227 = vadd.f32 %v2226, %v2196
      %v2228 = vadd.f32 %v2227, %v2197
      %v2229 = vadd.f32 %v2228, %v2198
      %v2230 = vadd.f32 %v2229, %v2199
      %v2231 = vadd.f32 %v2230, %v2200
      %v2232 = vadd.f32 %v2231, %v2201
      %v2233 = vadd.f32 %v2232, %v2202
      %v2234 = vadd.f32 %v2233, %v2203
      %v2235 = vadd.f32 %v2234, %v2204
      %v2236 = vadd.f32 %v2235, %v2205
      %v2237 = vadd.f32 %v2236, %v2206
      %v2238 = vadd.f32 %v2237, %v2207
      %v2239 = vadd.f32 %v2238, %v2208
      %v2240 = vadd.f32 %v2239, %v2209
      %v2241 = vadd.f32 %v2240, %v2210
      %v2242 = vadd.f32 %v2241, %v2211
      %v2243 = vadd.f32 %v2242, %v2212
      %v2244 = vadd.f32 %v2243, %v2213
      %v2245 = vadd.f32 %v2244, %v2214
      %v2246 = vadd.f32 %v2245, %v2215
      %v2247 = vadd.f32 %v2246, %v2216
      %v2248 = vadd.f32 %v2247, %v2217
      %v2249 = vadd.f32 %v2248, %v2218
      %v2250 = vadd.f32 %v2249, %v2219
      %v2251 = vadd.f32 %v2250, %v2220
      %v2252 = vadd.f32 %v2251, %v2221
      %v2253 = vadd.f32 %v2252, %v2222
      %v2254 = vadd.f32 %v2253, %v2223
      %v2255 = vadd.f32 %v2254, %v2224
      %v2256 = vadd.f32 %v2255, %v2225
      %v2257 = vrot.slane %v2256, 4
      %v2258 = vadd.f32 %v2256, %v2257
      %v2259 = vrot.slane %v2258, 2
      %v2260 = vadd.f32 %v2258, %v2259
      %v2261 = vrot.slane %v2260, 1
      %v2262 = vadd.f32 %v2260, %v2261
      %2263 = vst [vmem:[%s330 + $0x1] sm:$0x1] %v2262
      %s2264 = sadd.s32 %s22, %s23
      %s2265 = smul.u32 32, %s2264
      %p2266 = scmp.lt.s32.totalorder %s2265, 63
      %s2267 = scalar_select %p2266, %s2265, 63
      %s2268 = smul.addr %s2267, 8
      %s2269 = scalar_lea.vmem %s5, %s2268
      %s2270 = sadd.s32 %s22, %s23
      %p2271 = scmp.lt.s32.totalorder %s2270, 1
      %s2272 = scalar_select %p2271, %s2270, 1
      %s2273 = smul.addr %s2272, 2
      %s2274 = scalar_lea.vmem %s6, %s2273
      // Predicated region
      $region41: #{bottleneck_pallas.5} parent=39 // pred_check
        %p2275 = pneg %p169
      $region42: #{bottleneck_pallas.5} parent=39 // pred_check_branch
        %2277 = sbr.rel (%p2275) target = $region44
      $region43: #{bottleneck_pallas.5} parent=39 // pred_region
        %s2278 = sadd.s32 %s22, %s23
        %s2279 = smul.u32 32, %s2278
      $region44: #{bottleneck_pallas.5} parent=39 // pred_fallthru
        _
      // Predicated region
      $region45: #{bottleneck_pallas.5} parent=39 // pred_check
        %p2280 = pneg %p197
      $region46: #{bottleneck_pallas.5} parent=39 // pred_check_branch
        %2282 = sbr.rel (%p2280) target = $region48
      $region47: #{bottleneck_pallas.5} parent=39 // pred_region
        %s2283 = sadd.s32 %s22, %s23
      $region48: #{bottleneck_pallas.5} parent=39 // pred_fallthru
        _
    $region40: #{bottleneck_pallas.5} parent=5 // pred_fallthru
      _
    %p2284 = scmp.le.s32.totalorder 2, %s13
    // Predicated region
    $region49: #{bottleneck_pallas.5} parent=5 // pred_check
      %p2285 = pneg %p2284
    $region50: #{bottleneck_pallas.5} parent=5 // pred_check_branch
      %2287 = sbr.rel (%p2285) target = $region52
    $region51: #{bottleneck_pallas.5} parent=5 // pred_region
      %s2288 = ssub.s32 %s13, 2
      // Predicated region
      $region53: #{bottleneck_pallas.5} parent=51 // pred_check
        %p2289 = pneg %p175
      $region54: #{bottleneck_pallas.5} parent=51 // pred_check_branch
        %2291 = sbr.rel (%p2289) target = $region56
      $region55: #{bottleneck_pallas.5} parent=51 // pred_region
        %s2292 = sadd.s32 %s24, %s25
        %s2293 = smul.u32 32, %s2292
        %p2294 = scmp.lt.s32.totalorder %s2293, 63
        %s2295 = scalar_select %p2294, %s2293, 63
        %s2296 = smul.addr %s2295, 8
        %s2297 = scalar_lea.vmem %s5, %s2296
      $region56: #{bottleneck_pallas.5} parent=51 // pred_fallthru
        _
      // Predicated region
      $region57: #{bottleneck_pallas.5} parent=51 // pred_check
        %p2298 = pneg %p203
      $region58: #{bottleneck_pallas.5} parent=51 // pred_check_branch
        %2300 = sbr.rel (%p2298) target = $region60
      $region59: #{bottleneck_pallas.5} parent=51 // pred_region
        %s2301 = sadd.s32 %s24, %s25
        %p2302 = scmp.lt.s32.totalorder %s2301, 1
        %s2303 = scalar_select %p2302, %s2301, 1
        %s2304 = smul.addr %s2303, 2
        %s2305 = scalar_lea.vmem %s6, %s2304
      $region60: #{bottleneck_pallas.5} parent=51 // pred_fallthru
        _
    $region52: #{bottleneck_pallas.5} parent=5 // pred_fallthru
      _
  $region6: #{bottleneck_pallas.5} parent=0 // loop_footer
    %s17 = sadd.s32 1, %s13
  $region7: #{bottleneck_pallas.5} parent=0 // loop_footer_branch
    %12 = sbr.rel target = $region3
  $region8: #{bottleneck_pallas.5} parent=0 // loop_exit
    _

</llo_original>
